<compile_context>
chip_gen: v6e
topology: v6e:2x2x1
jax: 0.10.0
libtpu: 0.0.40
codegen_flags: <defaults>
</compile_context>

<pallas_src>
import math
from functools import partial

import jax
import jax.numpy as jnp
from jax.experimental import pallas as pl
from jax.experimental.pallas import tpu as pltpu


def mha_kernel(q_ref, k_ref, wq_ref, wkv_ref, o_ref, *, num_heads: int, key_dim: int):
    B, T_q, Dq = q_ref.shape
    _, T_k, Dk = k_ref.shape
    U = wq_ref.shape[1]
    split = U // num_heads
    scale = 1.0 / math.sqrt(float(key_dim))  # PyTorch module scales by key_dim**0.5

    # Flatten the batch block so the projection LHS has B*T rows (fills the
    # MXU far better than an 8-row matrix). Lane (minor) dim is unchanged by
    # these reshapes, so they are layout-cheap.
    q2 = q_ref[...].reshape(B * T_q, Dq)
    k2 = k_ref[...].reshape(B * T_k, Dk)

    # Q projection; fold the softmax scale in once here.
    querys = jnp.dot(q2, wq_ref[...], preferred_element_type=jnp.float32) * scale
    # Fused K|V projection: one wide MXU matmul instead of two small ones.
    kv = jnp.dot(k2, wkv_ref[...], preferred_element_type=jnp.float32)

    querys = querys.reshape(B, T_q, U)        # [B, T_q, U]   (f32)
    kv = kv.reshape(B, T_k, 2 * U)            # [B, T_k, 2U]  (f32)

    # Static loop over heads: each head is one batched-over-B MXU contraction
    # on the last dim (no transpose of K), softmax in f32.
    head_outs = []
    for h in range(num_heads):
        lo, hi = h * split, (h + 1) * split
        qh = querys[:, :, lo:hi]              # [B, T_q, split]
        kh = kv[:, :, lo:hi]                  # [B, T_k, split]
        vh = kv[:, :, U + lo:U + hi]          # [B, T_k, split]

        # Contraction over the last dims directly -> no kh.T / XLU transpose.
        scores = jnp.einsum('bqd,bkd->bqk', qh, kh,
                            preferred_element_type=jnp.float32)   # [B, T_q, T_k]
        scores = scores - jnp.max(scores, axis=-1, keepdims=True)
        p = jnp.exp(scores)
        denom = jnp.sum(p, axis=-1, keepdims=True)
        p = p * pl.reciprocal(denom, approx=True)                 # EUP vrcp

        head_outs.append(
            jnp.einsum('bqk,bkd->bqd', p, vh,
                       preferred_element_type=jnp.float32))       # [B, T_q, split]

    # Single lane-dense store of all heads (no masked width-`split` stores).
    out = jnp.concatenate(head_outs, axis=-1)                     # [B, T_q, U]
    o_ref[...] = out.astype(o_ref.dtype)


def multi_head_attention(query, key, wq, wk, wv, *, num_heads: int, key_dim: int,
                         batch_block: int = 8):
    """query: [N, T_q, Dq]; key: [N, T_k, Dk]; wq: [Dq, U]; wk, wv: [Dk, U]."""
    N, T_q, Dq = query.shape
    N2, T_k, Dk = key.shape
    U = wq.shape[1]
    assert N == N2 and U % num_heads == 0

    # Largest divisor of N that is <= batch_block: more rows per grid step
    # amortizes per-step overhead and fattens the MXU LHS.
    b_blk = max(1, min(N, batch_block))
    while N % b_blk:
        b_blk -= 1

    # Fuse the K and V projection weights -> one [Dk, 2U] matmul in-kernel.
    wkv = jnp.concatenate([wk, wv], axis=1)

    kernel = partial(mha_kernel, num_heads=num_heads, key_dim=key_dim)

    return pl.pallas_call(
        kernel,
        out_shape=jax.ShapeDtypeStruct((N, T_q, U), query.dtype),
        grid_spec=pltpu.PrefetchScalarGridSpec(
            num_scalar_prefetch=0,
            grid=(N // b_blk,),
            in_specs=[
                pl.BlockSpec((b_blk, T_q, Dq), lambda n: (n, 0, 0)),
                pl.BlockSpec((b_blk, T_k, Dk), lambda n: (n, 0, 0)),
                pl.BlockSpec((Dq, U), lambda n: (0, 0)),
                pl.BlockSpec((Dk, 2 * U), lambda n: (0, 0)),
            ],
            out_specs=pl.BlockSpec((b_blk, T_q, U), lambda n: (n, 0, 0)),
        ),
        compiler_params=pltpu.CompilerParams(
            # Batch-block steps are independent -> shardable across the two
            # TensorCores on v7x; plain serial pipeline on v5e/v6e.
            dimension_semantics=("parallel",)),
    )(query, key, wq, wkv)


def reference_mha(query, key, wq, wk, wv, *, num_heads: int, key_dim: int):
    # Pure-JAX reference mirroring the PyTorch forward exactly.
    querys = query @ wq            # [N, T_q, U]
    keys = key @ wk                # [N, T_k, U]
    values = key @ wv              # [N, T_k, U]
    def split_heads(x):            # [N, T, U] -> [h, N, T, split]
        return jnp.stack(jnp.split(x, num_heads, axis=2), axis=0)
    q, k, v = split_heads(querys), split_heads(keys), split_heads(values)
    scores = jnp.einsum('hnqd,hnkd->hnqk', q, k) / (key_dim ** 0.5)
    scores = jax.nn.softmax(scores, axis=3)
    out = jnp.einsum('hnqk,hnkd->hnqd', scores, v)       # [h, N, T_q, split]
    return jnp.concatenate(jnp.split(out, num_heads, axis=0), axis=3)[0]


if __name__ == "__main__":
    # Small shapes consistent with the module's forward.
    N, T_q, T_k = 8, 8, 8
    query_dim, key_dim = 16, 16
    num_units, num_heads = 32, 4

    k0, k1, k2, k3, k4 = jax.random.split(jax.random.PRNGKey(0), 5)
    query = jax.random.normal(k0, (N, T_q, query_dim), dtype=jnp.float32)
    key = jax.random.normal(k1, (N, T_k, key_dim), dtype=jnp.float32)

    # Deterministic "Linear(bias=False)" weights, stored pre-transposed [in, out].
    bound_q = 1.0 / math.sqrt(query_dim)
    bound_k = 1.0 / math.sqrt(key_dim)
    wq = jax.random.uniform(k2, (query_dim, num_units), jnp.float32, -bound_q, bound_q)
    wk = jax.random.uniform(k3, (key_dim, num_units), jnp.float32, -bound_k, bound_k)
    wv = jax.random.uniform(k4, (key_dim, num_units), jnp.float32, -bound_k, bound_k)

    # batch_block=4 -> grid=(2,), exercising the batch-block tiling and the
    # parallel grid axis.
    out = multi_head_attention(query, key, wq, wk, wv,
                               num_heads=num_heads, key_dim=key_dim,
                               batch_block=4)
    out = jax.block_until_ready(out)

    ref = reference_mha(query, key, wq, wk, wv,
                        num_heads=num_heads, key_dim=key_dim)
    assert out.shape == (N, T_q, num_units)
    # Tolerance relaxed from 1e-5 because the softmax denominator uses the
    # approximate EUP reciprocal (per perf review); error stays well below 1e-2.
    err = float(jnp.max(jnp.abs(out - ref)))
    assert err < 1e-2, f"max abs error vs reference: {err}"

    print("KERNEL_OK")
</pallas_src>

<mosaic_0001>
module attributes {stable_mosaic.version = 11 : i64} {
  func.func @mha_kernel(%arg0: i32, %arg1: memref<4x8x16xf32, #tpu.memory_space<vmem>>, %arg2: memref<4x8x16xf32, #tpu.memory_space<vmem>>, %arg3: memref<16x32xf32, #tpu.memory_space<vmem>>, %arg4: memref<16x64xf32, #tpu.memory_space<vmem>>, %arg5: memref<4x8x32xf32, #tpu.memory_space<vmem>>) attributes {dimension_semantics = [#tpu.dimension_semantics<parallel>], iteration_bounds = array<i64: 2>, scalar_prefetch = 0 : i64, scratch_operands = 0 : i64, tpu.core_type = #tpu.core_type<tc>, window_params = [{transform_indices = @transform_0, window_bounds = array<i64: 4, 8, 16>}, {transform_indices = @transform_1, window_bounds = array<i64: 4, 8, 16>}, {pipeline_mode = #tpu.pipeline_mode<synchronous>, transform_indices = @transform_2, window_bounds = array<i64: 16, 32>}, {pipeline_mode = #tpu.pipeline_mode<synchronous>, transform_indices = @transform_3, window_bounds = array<i64: 16, 64>}, {transform_indices = @transform_4, window_bounds = array<i64: 4, 8, 32>}]} {
    %c0 = arith.constant 0 : index
    %c0_0 = arith.constant 0 : index
    %c0_1 = arith.constant 0 : index
    %0 = vector.load %arg1[%c0, %c0_0, %c0_1] : memref<4x8x16xf32, #tpu.memory_space<vmem>>, vector<4x8x16xf32>
    %1 = vector.shape_cast %0 : vector<4x8x16xf32> to vector<32x16xf32>
    %c0_2 = arith.constant 0 : index
    %c0_3 = arith.constant 0 : index
    %c0_4 = arith.constant 0 : index
    %2 = vector.load %arg2[%c0_2, %c0_3, %c0_4] : memref<4x8x16xf32, #tpu.memory_space<vmem>>, vector<4x8x16xf32>
    %3 = vector.shape_cast %2 : vector<4x8x16xf32> to vector<32x16xf32>
    %c0_5 = arith.constant 0 : index
    %c0_6 = arith.constant 0 : index
    %4 = vector.load %arg3[%c0_5, %c0_6] : memref<16x32xf32, #tpu.memory_space<vmem>>, vector<16x32xf32>
    %cst = arith.constant dense<0.000000e+00> : vector<32x32xf32>
    %5 = tpu.matmul %1, %4, %cst {dimension_numbers = #tpu.dot_dimension_numbers<[1], [0], [0], [1], [0, 0, 1, 1], [], []>} : vector<32x16xf32>, vector<16x32xf32>, vector<32x32xf32> -> vector<32x32xf32>
    %cst_7 = arith.constant 2.500000e-01 : f32
    %6 = vector.broadcast %cst_7 : f32 to vector<32x32xf32>
    %7 = arith.mulf %5, %6 : vector<32x32xf32>
    %c0_8 = arith.constant 0 : index
    %c0_9 = arith.constant 0 : index
    %8 = vector.load %arg4[%c0_8, %c0_9] : memref<16x64xf32, #tpu.memory_space<vmem>>, vector<16x64xf32>
    %cst_10 = arith.constant dense<0.000000e+00> : vector<32x64xf32>
    %9 = tpu.matmul %3, %8, %cst_10 {dimension_numbers = #tpu.dot_dimension_numbers<[1], [0], [0], [1], [0, 0, 1, 1], [], []>} : vector<32x16xf32>, vector<16x64xf32>, vector<32x64xf32> -> vector<32x64xf32>
    %10 = vector.shape_cast %7 : vector<32x32xf32> to vector<4x8x32xf32>
    %11 = vector.shape_cast %9 : vector<32x64xf32> to vector<4x8x64xf32>
    %12 = vector.extract_strided_slice %10 {offsets = [0, 0, 0], sizes = [4, 8, 8], strides = [1, 1, 1]} : vector<4x8x32xf32> to vector<4x8x8xf32>
    %13 = vector.extract_strided_slice %11 {offsets = [0, 0, 0], sizes = [4, 8, 8], strides = [1, 1, 1]} : vector<4x8x64xf32> to vector<4x8x8xf32>
    %14 = vector.extract_strided_slice %11 {offsets = [0, 0, 32], sizes = [4, 8, 8], strides = [1, 1, 1]} : vector<4x8x64xf32> to vector<4x8x8xf32>
    "tpu.trace_start"() <{level = 10 : i32, message = "bqd,bkd->bqk"}> : () -> ()
    %cst_11 = arith.constant dense<0.000000e+00> : vector<4x8x8xf32>
    %15 = tpu.matmul %12, %13, %cst_11 {dimension_numbers = #tpu.dot_dimension_numbers<[2], [2], [1], [1], [0, 0, 0, 1, 1, 1], [0], [0]>} : vector<4x8x8xf32>, vector<4x8x8xf32>, vector<4x8x8xf32> -> vector<4x8x8xf32>
    "tpu.trace_stop"() : () -> ()
    %cst_12 = arith.constant dense<0xFF800000> : vector<4x8xf32>
    %16 = vector.multi_reduction <maximumf>, %15, %cst_12 [2] : vector<4x8x8xf32> to vector<4x8xf32>
    %17 = vector.shape_cast %16 : vector<4x8xf32> to vector<4x8x1xf32>
    %18 = vector.broadcast %17 : vector<4x8x1xf32> to vector<4x8x8xf32>
    %19 = arith.subf %15, %18 : vector<4x8x8xf32>
    %20 = math.exp %19 : vector<4x8x8xf32>
    %cst_13 = arith.constant dense<0.000000e+00> : vector<4x8xf32>
    %21 = vector.multi_reduction <add>, %20, %cst_13 [2] : vector<4x8x8xf32> to vector<4x8xf32>
    %22 = vector.shape_cast %21 : vector<4x8xf32> to vector<4x8x1xf32>
    %23 = tpu.reciprocal %22 {approx = true} : vector<4x8x1xf32> -> vector<4x8x1xf32>
    %24 = vector.broadcast %23 : vector<4x8x1xf32> to vector<4x8x8xf32>
    %25 = arith.mulf %20, %24 : vector<4x8x8xf32>
    "tpu.trace_start"() <{level = 10 : i32, message = "bqk,bkd->bqd"}> : () -> ()
    %cst_14 = arith.constant dense<0.000000e+00> : vector<4x8x8xf32>
    %26 = tpu.matmul %25, %14, %cst_14 {dimension_numbers = #tpu.dot_dimension_numbers<[2], [1], [1], [2], [0, 0, 0, 1, 1, 2], [0], [0]>} : vector<4x8x8xf32>, vector<4x8x8xf32>, vector<4x8x8xf32> -> vector<4x8x8xf32>
    "tpu.trace_stop"() : () -> ()
    %27 = vector.extract_strided_slice %10 {offsets = [0, 0, 8], sizes = [4, 8, 8], strides = [1, 1, 1]} : vector<4x8x32xf32> to vector<4x8x8xf32>
    %28 = vector.extract_strided_slice %11 {offsets = [0, 0, 8], sizes = [4, 8, 8], strides = [1, 1, 1]} : vector<4x8x64xf32> to vector<4x8x8xf32>
    %29 = vector.extract_strided_slice %11 {offsets = [0, 0, 40], sizes = [4, 8, 8], strides = [1, 1, 1]} : vector<4x8x64xf32> to vector<4x8x8xf32>
    "tpu.trace_start"() <{level = 10 : i32, message = "bqd,bkd->bqk"}> : () -> ()
    %cst_15 = arith.constant dense<0.000000e+00> : vector<4x8x8xf32>
    %30 = tpu.matmul %27, %28, %cst_15 {dimension_numbers = #tpu.dot_dimension_numbers<[2], [2], [1], [1], [0, 0, 0, 1, 1, 1], [0], [0]>} : vector<4x8x8xf32>, vector<4x8x8xf32>, vector<4x8x8xf32> -> vector<4x8x8xf32>
    "tpu.trace_stop"() : () -> ()
    %cst_16 = arith.constant dense<0xFF800000> : vector<4x8xf32>
    %31 = vector.multi_reduction <maximumf>, %30, %cst_16 [2] : vector<4x8x8xf32> to vector<4x8xf32>
    %32 = vector.shape_cast %31 : vector<4x8xf32> to vector<4x8x1xf32>
    %33 = vector.broadcast %32 : vector<4x8x1xf32> to vector<4x8x8xf32>
    %34 = arith.subf %30, %33 : vector<4x8x8xf32>
    %35 = math.exp %34 : vector<4x8x8xf32>
    %cst_17 = arith.constant dense<0.000000e+00> : vector<4x8xf32>
    %36 = vector.multi_reduction <add>, %35, %cst_17 [2] : vector<4x8x8xf32> to vector<4x8xf32>
    %37 = vector.shape_cast %36 : vector<4x8xf32> to vector<4x8x1xf32>
    %38 = tpu.reciprocal %37 {approx = true} : vector<4x8x1xf32> -> vector<4x8x1xf32>
    %39 = vector.broadcast %38 : vector<4x8x1xf32> to vector<4x8x8xf32>
    %40 = arith.mulf %35, %39 : vector<4x8x8xf32>
    "tpu.trace_start"() <{level = 10 : i32, message = "bqk,bkd->bqd"}> : () -> ()
    %cst_18 = arith.constant dense<0.000000e+00> : vector<4x8x8xf32>
    %41 = tpu.matmul %40, %29, %cst_18 {dimension_numbers = #tpu.dot_dimension_numbers<[2], [1], [1], [2], [0, 0, 0, 1, 1, 2], [0], [0]>} : vector<4x8x8xf32>, vector<4x8x8xf32>, vector<4x8x8xf32> -> vector<4x8x8xf32>
    "tpu.trace_stop"() : () -> ()
    %42 = vector.extract_strided_slice %10 {offsets = [0, 0, 16], sizes = [4, 8, 8], strides = [1, 1, 1]} : vector<4x8x32xf32> to vector<4x8x8xf32>
    %43 = vector.extract_strided_slice %11 {offsets = [0, 0, 16], sizes = [4, 8, 8], strides = [1, 1, 1]} : vector<4x8x64xf32> to vector<4x8x8xf32>
    %44 = vector.extract_strided_slice %11 {offsets = [0, 0, 48], sizes = [4, 8, 8], strides = [1, 1, 1]} : vector<4x8x64xf32> to vector<4x8x8xf32>
    "tpu.trace_start"() <{level = 10 : i32, message = "bqd,bkd->bqk"}> : () -> ()
    %cst_19 = arith.constant dense<0.000000e+00> : vector<4x8x8xf32>
    %45 = tpu.matmul %42, %43, %cst_19 {dimension_numbers = #tpu.dot_dimension_numbers<[2], [2], [1], [1], [0, 0, 0, 1, 1, 1], [0], [0]>} : vector<4x8x8xf32>, vector<4x8x8xf32>, vector<4x8x8xf32> -> vector<4x8x8xf32>
    "tpu.trace_stop"() : () -> ()
    %cst_20 = arith.constant dense<0xFF800000> : vector<4x8xf32>
    %46 = vector.multi_reduction <maximumf>, %45, %cst_20 [2] : vector<4x8x8xf32> to vector<4x8xf32>
    %47 = vector.shape_cast %46 : vector<4x8xf32> to vector<4x8x1xf32>
    %48 = vector.broadcast %47 : vector<4x8x1xf32> to vector<4x8x8xf32>
    %49 = arith.subf %45, %48 : vector<4x8x8xf32>
    %50 = math.exp %49 : vector<4x8x8xf32>
    %cst_21 = arith.constant dense<0.000000e+00> : vector<4x8xf32>
    %51 = vector.multi_reduction <add>, %50, %cst_21 [2] : vector<4x8x8xf32> to vector<4x8xf32>
    %52 = vector.shape_cast %51 : vector<4x8xf32> to vector<4x8x1xf32>
    %53 = tpu.reciprocal %52 {approx = true} : vector<4x8x1xf32> -> vector<4x8x1xf32>
    %54 = vector.broadcast %53 : vector<4x8x1xf32> to vector<4x8x8xf32>
    %55 = arith.mulf %50, %54 : vector<4x8x8xf32>
    "tpu.trace_start"() <{level = 10 : i32, message = "bqk,bkd->bqd"}> : () -> ()
    %cst_22 = arith.constant dense<0.000000e+00> : vector<4x8x8xf32>
    %56 = tpu.matmul %55, %44, %cst_22 {dimension_numbers = #tpu.dot_dimension_numbers<[2], [1], [1], [2], [0, 0, 0, 1, 1, 2], [0], [0]>} : vector<4x8x8xf32>, vector<4x8x8xf32>, vector<4x8x8xf32> -> vector<4x8x8xf32>
    "tpu.trace_stop"() : () -> ()
    %57 = vector.extract_strided_slice %10 {offsets = [0, 0, 24], sizes = [4, 8, 8], strides = [1, 1, 1]} : vector<4x8x32xf32> to vector<4x8x8xf32>
    %58 = vector.extract_strided_slice %11 {offsets = [0, 0, 24], sizes = [4, 8, 8], strides = [1, 1, 1]} : vector<4x8x64xf32> to vector<4x8x8xf32>
    %59 = vector.extract_strided_slice %11 {offsets = [0, 0, 56], sizes = [4, 8, 8], strides = [1, 1, 1]} : vector<4x8x64xf32> to vector<4x8x8xf32>
    "tpu.trace_start"() <{level = 10 : i32, message = "bqd,bkd->bqk"}> : () -> ()
    %cst_23 = arith.constant dense<0.000000e+00> : vector<4x8x8xf32>
    %60 = tpu.matmul %57, %58, %cst_23 {dimension_numbers = #tpu.dot_dimension_numbers<[2], [2], [1], [1], [0, 0, 0, 1, 1, 1], [0], [0]>} : vector<4x8x8xf32>, vector<4x8x8xf32>, vector<4x8x8xf32> -> vector<4x8x8xf32>
    "tpu.trace_stop"() : () -> ()
    %cst_24 = arith.constant dense<0xFF800000> : vector<4x8xf32>
    %61 = vector.multi_reduction <maximumf>, %60, %cst_24 [2] : vector<4x8x8xf32> to vector<4x8xf32>
    %62 = vector.shape_cast %61 : vector<4x8xf32> to vector<4x8x1xf32>
    %63 = vector.broadcast %62 : vector<4x8x1xf32> to vector<4x8x8xf32>
    %64 = arith.subf %60, %63 : vector<4x8x8xf32>
    %65 = math.exp %64 : vector<4x8x8xf32>
    %cst_25 = arith.constant dense<0.000000e+00> : vector<4x8xf32>
    %66 = vector.multi_reduction <add>, %65, %cst_25 [2] : vector<4x8x8xf32> to vector<4x8xf32>
    %67 = vector.shape_cast %66 : vector<4x8xf32> to vector<4x8x1xf32>
    %68 = tpu.reciprocal %67 {approx = true} : vector<4x8x1xf32> -> vector<4x8x1xf32>
    %69 = vector.broadcast %68 : vector<4x8x1xf32> to vector<4x8x8xf32>
    %70 = arith.mulf %65, %69 : vector<4x8x8xf32>
    "tpu.trace_start"() <{level = 10 : i32, message = "bqk,bkd->bqd"}> : () -> ()
    %cst_26 = arith.constant dense<0.000000e+00> : vector<4x8x8xf32>
    %71 = tpu.matmul %70, %59, %cst_26 {dimension_numbers = #tpu.dot_dimension_numbers<[2], [1], [1], [2], [0, 0, 0, 1, 1, 2], [0], [0]>} : vector<4x8x8xf32>, vector<4x8x8xf32>, vector<4x8x8xf32> -> vector<4x8x8xf32>
    "tpu.trace_stop"() : () -> ()
    %72 = tpu.concatenate %26, %41, %56, %71 in 2 : vector<4x8x8xf32>, vector<4x8x8xf32>, vector<4x8x8xf32>, vector<4x8x8xf32> -> vector<4x8x32xf32>
    %c0_27 = arith.constant 0 : index
    %c0_28 = arith.constant 0 : index
    %c0_29 = arith.constant 0 : index
    %73 = vector.load %arg5[%c0_27, %c0_28, %c0_29] : memref<4x8x32xf32, #tpu.memory_space<vmem>>, vector<4x8x32xf32>
    tpu.vector_store %arg5[%c0_27, %c0_28, %c0_29], %72 {strides = array<i32>} : memref<4x8x32xf32, #tpu.memory_space<vmem>>, vector<4x8x32xf32>,
    return
  }
  func.func @transform_0(%arg0: i32) -> (i32, i32, i32) {
    %c0_i32 = arith.constant 0 : i32
    %c0_i32_0 = arith.constant 0 : i32
    %c0_i32_1 = arith.constant 0 : i32
    return %arg0, %c0_i32, %c0_i32_0 : i32, i32, i32
  }
  func.func @transform_1(%arg0: i32) -> (i32, i32, i32) {
    %c0_i32 = arith.constant 0 : i32
    %c0_i32_0 = arith.constant 0 : i32
    %c0_i32_1 = arith.constant 0 : i32
    return %arg0, %c0_i32, %c0_i32_0 : i32, i32, i32
  }
  func.func @transform_2(%arg0: i32) -> (i32, i32) {
    %c0_i32 = arith.constant 0 : i32
    %c0_i32_0 = arith.constant 0 : i32
    %c0_i32_1 = arith.constant 0 : i32
    return %c0_i32, %c0_i32_0 : i32, i32
  }
  func.func @transform_3(%arg0: i32) -> (i32, i32) {
    %c0_i32 = arith.constant 0 : i32
    %c0_i32_0 = arith.constant 0 : i32
    %c0_i32_1 = arith.constant 0 : i32
    return %c0_i32, %c0_i32_0 : i32, i32
  }
  func.func @transform_4(%arg0: i32) -> (i32, i32, i32) {
    %c0_i32 = arith.constant 0 : i32
    %c0_i32_0 = arith.constant 0 : i32
    %c0_i32_1 = arith.constant 0 : i32
    return %arg0, %c0_i32, %c0_i32_0 : i32, i32, i32
  }
}

</mosaic_0001>

<llo_original>
// kernel: tpu_custom_call.1
$region0: #{tpu_custom_call.1}
  #allocation0 [shape = 'u32[]', space=smem, size = 0x4, offset = 0x4, fixed_abs, tag = 'smem constant byte address 0x4 - core index']
  #allocation1 [shape = 'u32[144,128]{1,0:T(1,128)}', space=vmem, size = 0x12000, scoped, tag = 'internal scratch']
  %s0 = inlined_call_operand.hbm [shape: f32[8,8,16], index: 0, kind: input, shape index: {}]
  %s1 = inlined_call_operand.hbm [shape: f32[8,8,16], index: 1, kind: input, shape index: {}]
  %s2 = inlined_call_operand.hbm [shape: f32[16,32], index: 2, kind: input, shape index: {}]
  %s3 = inlined_call_operand.hbm [shape: f32[16,64], index: 3, kind: input, shape index: {}]
  %s4 = inlined_call_operand.hbm [shape: f32[8,8,32], index: 4, kind: output, shape index: {}]
  %s5 = sld [smem:[#allocation0]]
  $region65: #{tpu_custom_call.1} parent=0
    _
  %s7 = ssub.s32 1, %s5
  %s8 = scalar_select 0, %s7, %s5
  $region1: #{tpu_custom_call.1} parent=0
    #allocation2 [shape = 'u8[32768]{0}', space=vmem, size = 0x8000, scoped, tag = 'input window, operand 0']
    #allocation3 [shape = 's32[2]{0}', space=sflag, size = 0x8, scoped, tag = 'scoped memory for tpu_custom_call.1']
    #allocation4 [shape = 's32[2]{0}', space=sflag, size = 0x8, scoped, tag = 'scoped memory for tpu_custom_call.1']
    #allocation5 [shape = 'u8[32768]{0}', space=vmem, size = 0x8000, scoped, tag = 'input window, operand 1']
    #allocation6 [shape = 's32[2]{0}', space=sflag, size = 0x8, scoped, tag = 'scoped memory for tpu_custom_call.1']
    #allocation7 [shape = 'u8[8192]{0}', space=vmem, size = 0x2000, scoped, tag = 'input window, operand 2, single buffered']
    #allocation8 [shape = 'u8[8192]{0}', space=vmem, size = 0x2000, scoped, tag = 'input window, operand 3, single buffered']
    #allocation9 [shape = 's32[1]{0}', space=sflag, size = 0x4, scoped, tag = 'scoped memory for tpu_custom_call.1']
    #allocation10 [shape = 'u8[32768]{0}', space=vmem, size = 0x8000, scoped, tag = 'output window, operand 0']
    %9 = vsyncpa [#allocation3], 0
    %s10 = scalar_lea.sflag [#allocation3], 1
    %11 = vsyncpa %s10, 0
    %12 = vsyncpa [#allocation6], 0
    %s13 = scalar_lea.sflag [#allocation6], 1
    %14 = vsyncpa %s13, 0
    %15 = vsyncpa [#allocation9], 0
    %16 = vsyncpa [#allocation4], 0
    %s17 = scalar_lea.sflag [#allocation4], 1
    %18 = vsyncpa %s17, 0
    loop: start=0, step=1, limit=4
    $region2: #{tpu_custom_call.1} parent=1 // loop_pre_header
      _
    $region3: #{tpu_custom_call.1} parent=1 // loop_header
      %s20 = sphi 0, %s24
      %p21 = scmp.ge.s32.totalorder %s20, 4
      %s30 = sphi 0, %s32
      %s33 = sphi 0, %s30
      %s34 = sphi 0, %s33
      %s50 = sphi 0, %s34
      %s56 = sphi 0, %s58
      %s59 = sphi 0, %s56
      %s60 = sphi 0, %s59
      %s76 = sphi 0, %s60
      %s80 = sphi 0, %s80
      %s82 = sphi 0, %s80
      %s83 = sphi 0, %s82
      %s97 = sphi 0, %s83
      %s101 = sphi 0, %s101
      %s103 = sphi 0, %s101
      %s104 = sphi 0, %s103
      %s118 = sphi 0, %s104
      %s124 = sphi 0, %s126
      %s127 = sphi 0, %s124
      %s128 = sphi 0, %s127
      %s144 = sphi 0, %s128
    $region4: #{tpu_custom_call.1} parent=1 // loop_header_branch
      %23 = sbr.rel (%p21) target = $region8
    $region5: #{tpu_custom_call.1} parent=1 // loop_body
      %s25 = ssub.s32 %s20, 1
      %s26 = ssub.s32 %s20, 2
      %s27 = sadd.s32 %s20, 1
      %s28 = ssub.s32 %s20, %s27
      %p29 = scmp.eq.s32.totalorder %s28, 0
      %s31 = sadd.s32 %s30, 1
      %s32 = scalar_select %p29, %s30, %s31
      %p35 = pneg %p29
      %p36 = scmp.eq.s32.totalorder %s20, 1
      %p37 = por %p35, %p36
      %p38 = scmp.ne.s32.totalorder %s30, %s33
      %p39 = scmp.eq.s32.totalorder %s20, 0
      %p40 = por %p38, %p39
      %p41 = scmp.ne.s32.totalorder %s30, %s33
      %p42 = scmp.eq.s32.totalorder %s25, 1
      %p43 = por %p41, %p42
      %p44 = scmp.ne.s32.totalorder %s33, %s34
      %p45 = scmp.eq.s32.totalorder %s25, 0
      %p46 = por %p44, %p45
      %p47 = scmp.ne.s32.totalorder %s33, %s34
      %p48 = scmp.eq.s32.totalorder %s26, 1
      %p49 = por %p47, %p48
      %p51 = scmp.ne.s32.totalorder %s34, %s50
      %p52 = scmp.eq.s32.totalorder %s26, 0
      %p53 = por %p51, %p52
      %s54 = ssub.s32 %s20, %s27
      %p55 = scmp.eq.s32.totalorder %s54, 0
      %s57 = sadd.s32 %s56, 1
      %s58 = scalar_select %p55, %s56, %s57
      %p61 = pneg %p55
      %p62 = scmp.eq.s32.totalorder %s20, 1
      %p63 = por %p61, %p62
      %p64 = scmp.ne.s32.totalorder %s56, %s59
      %p65 = scmp.eq.s32.totalorder %s20, 0
      %p66 = por %p64, %p65
      %p67 = scmp.ne.s32.totalorder %s56, %s59
      %p68 = scmp.eq.s32.totalorder %s25, 1
      %p69 = por %p67, %p68
      %p70 = scmp.ne.s32.totalorder %s59, %s60
      %p71 = scmp.eq.s32.totalorder %s25, 0
      %p72 = por %p70, %p71
      %p73 = scmp.ne.s32.totalorder %s59, %s60
      %p74 = scmp.eq.s32.totalorder %s26, 1
      %p75 = por %p73, %p74
      %p77 = scmp.ne.s32.totalorder %s60, %s76
      %p78 = scmp.eq.s32.totalorder %s26, 0
      %p79 = por %p77, %p78
      %s81 = sadd.s32 %s80, 1
      %p84 = scmp.eq.s32.totalorder %s20, 1
      %p85 = scmp.ne.s32.totalorder %s80, %s82
      %p86 = scmp.eq.s32.totalorder %s20, 0
      %p87 = por %p85, %p86
      %p88 = scmp.ne.s32.totalorder %s80, %s82
      %p89 = scmp.eq.s32.totalorder %s25, 1
      %p90 = por %p88, %p89
      %p91 = scmp.ne.s32.totalorder %s82, %s83
      %p92 = scmp.eq.s32.totalorder %s25, 0
      %p93 = por %p91, %p92
      %p94 = scmp.ne.s32.totalorder %s82, %s83
      %p95 = scmp.eq.s32.totalorder %s26, 1
      %p96 = por %p94, %p95
      %p98 = scmp.ne.s32.totalorder %s83, %s97
      %p99 = scmp.eq.s32.totalorder %s26, 0
      %p100 = por %p98, %p99
      %s102 = sadd.s32 %s101, 1
      %p105 = scmp.eq.s32.totalorder %s20, 1
      %p106 = scmp.ne.s32.totalorder %s101, %s103
      %p107 = scmp.eq.s32.totalorder %s20, 0
      %p108 = por %p106, %p107
      %p109 = scmp.ne.s32.totalorder %s101, %s103
      %p110 = scmp.eq.s32.totalorder %s25, 1
      %p111 = por %p109, %p110
      %p112 = scmp.ne.s32.totalorder %s103, %s104
      %p113 = scmp.eq.s32.totalorder %s25, 0
      %p114 = por %p112, %p113
      %p115 = scmp.ne.s32.totalorder %s103, %s104
      %p116 = scmp.eq.s32.totalorder %s26, 1
      %p117 = por %p115, %p116
      %p119 = scmp.ne.s32.totalorder %s104, %s118
      %p120 = scmp.eq.s32.totalorder %s26, 0
      %p121 = por %p119, %p120
      %s122 = ssub.s32 %s20, %s27
      %p123 = scmp.eq.s32.totalorder %s122, 0
      %s125 = sadd.s32 %s124, 1
      %s126 = scalar_select %p123, %s124, %s125
      %p129 = pneg %p123
      %p130 = scmp.eq.s32.totalorder %s20, 1
      %p131 = por %p129, %p130
      %p132 = scmp.ne.s32.totalorder %s124, %s127
      %p133 = scmp.eq.s32.totalorder %s20, 0
      %p134 = por %p132, %p133
      %p135 = scmp.ne.s32.totalorder %s124, %s127
      %p136 = scmp.eq.s32.totalorder %s25, 1
      %p137 = por %p135, %p136
      %p138 = scmp.ne.s32.totalorder %s127, %s128
      %p139 = scmp.eq.s32.totalorder %s25, 0
      %p140 = por %p138, %p139
      %p141 = scmp.ne.s32.totalorder %s127, %s128
      %p142 = scmp.eq.s32.totalorder %s26, 1
      %p143 = por %p141, %p142
      %p145 = scmp.ne.s32.totalorder %s128, %s144
      %p146 = scmp.eq.s32.totalorder %s26, 0
      %p147 = por %p145, %p146
      %p148 = scmp.le.s32.totalorder 1, %s20
      %p149 = scmp.lt.s32.totalorder %s20, 3
      %p150 = pnand %p148, %p149
      %p151 = pneg %p150
      // Predicated region
      $region9: #{tpu_custom_call.1} parent=5 // pred_check
        _
      $region10: #{tpu_custom_call.1} parent=5 // pred_check_branch
        %153 = sbr.rel (%p150) target = $region12
      $region11: #{tpu_custom_call.1} parent=5 // pred_region
        %s154 = ssub.s32 %s20, 1
        // Predicated region
        $region13: #{tpu_custom_call.1} parent=11 // pred_check
          %p155 = pneg %p93
        $region14: #{tpu_custom_call.1} parent=11 // pred_check_branch
          %157 = sbr.rel (%p155) target = $region16
        $region15: #{tpu_custom_call.1} parent=11 // pred_region
          %s159 = ssub.s32 256, 256
          %160 = vsyncadd [#allocation6], %s159
          %s161 = sshll.u32 [#allocation7], 4
          %s162 = int_to_ptr.vmem [resolvable:$true] %s161
          %167 = dma.hbm_to_vmem [thread:$0]  %s2, 256, %s162, [#allocation6], 128, 128, 8
        $region16: #{tpu_custom_call.1} parent=11 // pred_fallthru
          _
        // Predicated region
        $region17: #{tpu_custom_call.1} parent=11 // pred_check
          %p168 = pneg %p114
        $region18: #{tpu_custom_call.1} parent=11 // pred_check_branch
          %170 = sbr.rel (%p168) target = $region20
        $region19: #{tpu_custom_call.1} parent=11 // pred_region
          %s172 = ssub.s32 256, 256
          %173 = vsyncadd [#allocation9], %s172
          %s174 = sshll.u32 [#allocation8], 4
          %s175 = int_to_ptr.vmem [resolvable:$true] %s174
          %180 = dma.hbm_to_vmem [thread:$0]  %s3, 256, %s175, [#allocation9], 128, 128, 8
        $region20: #{tpu_custom_call.1} parent=11 // pred_fallthru
          _
      $region12: #{tpu_custom_call.1} parent=5 // pred_fallthru
        _
      %p181 = scmp.lt.s32.totalorder %s20, 2
      // Predicated region
      $region21: #{tpu_custom_call.1} parent=5 // pred_check
        %p182 = pneg %p181
      $region22: #{tpu_custom_call.1} parent=5 // pred_check_branch
        %184 = sbr.rel (%p182) target = $region24
      $region23: #{tpu_custom_call.1} parent=5 // pred_region
        // Predicated region
        $region25: #{tpu_custom_call.1} parent=23 // pred_check
          %p185 = pneg %p40
        $region26: #{tpu_custom_call.1} parent=23 // pred_check_branch
          %187 = sbr.rel (%p185) target = $region28
        $region27: #{tpu_custom_call.1} parent=23 // pred_region
          %s188 = sand.u32 %s30, 1
          %s189 = scalar_lea.sflag [#allocation3], %s188
          %s190 = sand.u32 %s30, 1
          %s191 = smul.addr %s190, 32
          %s192 = scalar_lea.vmem [#allocation2], %s191
          %s193 = smul.u32 4, %s20
          %s195 = ssub.s32 512, 512
          %196 = vsyncadd %s189, %s195
          %s197 = smul.addr %s193, 128
          %s198 = scalar_lea.hbm %s0, %s197
          %s199 = sshll.u32 %s192, 4
          %s200 = int_to_ptr.vmem [resolvable:$true] %s199
          %205 = dma.hbm_to_vmem [thread:$0]  %s198, 512, %s200, %s189, 128, 128, 8
        $region28: #{tpu_custom_call.1} parent=23 // pred_fallthru
          _
        // Predicated region
        $region29: #{tpu_custom_call.1} parent=23 // pred_check
          %p206 = pneg %p66
        $region30: #{tpu_custom_call.1} parent=23 // pred_check_branch
          %208 = sbr.rel (%p206) target = $region32
        $region31: #{tpu_custom_call.1} parent=23 // pred_region
          %s209 = sand.u32 %s20, 1
          %s210 = scalar_lea.sflag [#allocation6], %s209
          %s211 = sand.u32 %s56, 1
          %s212 = smul.addr %s211, 32
          %s213 = scalar_lea.vmem [#allocation5], %s212
          %s214 = smul.u32 4, %s20
          %s216 = ssub.s32 512, 512
          %217 = vsyncadd %s210, %s216
          %s218 = smul.addr %s214, 128
          %s219 = scalar_lea.hbm %s1, %s218
          %s220 = sshll.u32 %s213, 4
          %s221 = int_to_ptr.vmem [resolvable:$true] %s220
          %226 = dma.hbm_to_vmem [thread:$0]  %s219, 512, %s221, %s210, 128, 128, 8
        $region32: #{tpu_custom_call.1} parent=23 // pred_fallthru
          _
      $region24: #{tpu_custom_call.1} parent=5 // pred_fallthru
        _
      %p227 = scmp.le.s32.totalorder 1, %s20
      %p228 = scmp.lt.s32.totalorder %s20, 3
      %p229 = pnand %p227, %p228
      %p230 = pneg %p229
      // Predicated region
      $region33: #{tpu_custom_call.1} parent=5 // pred_check
        _
      $region34: #{tpu_custom_call.1} parent=5 // pred_check_branch
        %232 = sbr.rel (%p229) target = $region36
      $region35: #{tpu_custom_call.1} parent=5 // pred_region
        %s233 = ssub.s32 %s20, 1
        %s234 = sand.u32 %s33, 1
        %s235 = scalar_lea.sflag [#allocation3], %s234
        %s236 = sand.u32 %s33, 1
        %s237 = smul.addr %s236, 32
        %s238 = scalar_lea.vmem [#allocation2], %s237
        // Predicated region
        $region37: #{tpu_custom_call.1} parent=35 // pred_check
          %p239 = pneg %p46
        $region38: #{tpu_custom_call.1} parent=35 // pred_check_branch
          %241 = sbr.rel (%p239) target = $region40
        $region39: #{tpu_custom_call.1} parent=35 // pred_region
          %242 = dma.done %s235, 512
        $region40: #{tpu_custom_call.1} parent=35 // pred_fallthru
          _
        %s243 = sand.u32 %s25, 1
        %s244 = scalar_lea.sflag [#allocation6], %s243
        %s245 = sand.u32 %s59, 1
        %s246 = smul.addr %s245, 32
        %s247 = scalar_lea.vmem [#allocation5], %s246
        // Predicated region
        $region41: #{tpu_custom_call.1} parent=35 // pred_check
          %p248 = pneg %p72
        $region42: #{tpu_custom_call.1} parent=35 // pred_check_branch
          %250 = sbr.rel (%p248) target = $region44
        $region43: #{tpu_custom_call.1} parent=35 // pred_region
          %251 = dma.done %s244, 512
        $region44: #{tpu_custom_call.1} parent=35 // pred_fallthru
          _
        // Predicated region
        $region45: #{tpu_custom_call.1} parent=35 // pred_check
          %p252 = pneg %p93
        $region46: #{tpu_custom_call.1} parent=35 // pred_check_branch
          %254 = sbr.rel (%p252) target = $region48
        $region47: #{tpu_custom_call.1} parent=35 // pred_region
          %255 = dma.done [#allocation6], 256
        $region48: #{tpu_custom_call.1} parent=35 // pred_fallthru
          _
        // Predicated region
        $region49: #{tpu_custom_call.1} parent=35 // pred_check
          %p256 = pneg %p114
        $region50: #{tpu_custom_call.1} parent=35 // pred_check_branch
          %258 = sbr.rel (%p256) target = $region52
        $region51: #{tpu_custom_call.1} parent=35 // pred_region
          %259 = dma.done [#allocation9], 256
        $region52: #{tpu_custom_call.1} parent=35 // pred_fallthru
          _
        %s260 = sand.u32 %s33, 1
        %s261 = scalar_lea.sflag [#allocation3], %s260
        %s262 = sand.u32 %s33, 1
        %s263 = smul.addr %s262, 32
        %s264 = scalar_lea.vmem [#allocation2], %s263
        %p265 = pneg %p46
        %p266 = pneg %p43
        %s267 = sand.u32 %s25, 1
        %s268 = scalar_lea.sflag [#allocation6], %s267
        %s269 = sand.u32 %s59, 1
        %s270 = smul.addr %s269, 32
        %s271 = scalar_lea.vmem [#allocation5], %s270
        %p272 = pneg %p72
        %p273 = pneg %p69
        %p274 = pneg %p93
        %p275 = pneg %p90
        %p276 = pneg %p114
        %p277 = pneg %p111
        %p278 = pneg %p140
        %p279 = pneg %p137
        %s280 = sand.u32 %s127, 1
        %s281 = scalar_lea.sflag [#allocation4], %s280
        %s282 = sand.u32 %s127, 1
        %s283 = smul.addr %s282, 32
        %s284 = scalar_lea.vmem [#allocation10], %s283
        %s285 = smul.u32 4, %s25
        %s286 = smul.u32 4, %s25
        %s287 = smul.u32 4, %s25
        %v288 = vld [vmem:[%s238] sm:$0xff]
        %v289 = vld [vmem:[%s238 + $0x8] sm:$0xff]
        %v290 = vld [vmem:[%s238 + $0x10] sm:$0xff]
        %v291 = vld [vmem:[%s238 + $0x18] sm:$0xff]
        %v292 = vld [vmem:[%s247] sm:$0xff]
        %v293 = vld [vmem:[%s247 + $0x8] sm:$0xff]
        %v294 = vld [vmem:[%s247 + $0x10] sm:$0xff]
        %v295 = vld [vmem:[%s247 + $0x18] sm:$0xff]
        %v296 = vld [vmem:[#allocation7] sm:$0xff]
        %v297 = vld [vmem:[#allocation7 + $0x8] sm:$0xff]
        %vm298 = vcmask 130048
        %v300 = vsel %vm298, %v288, 0
        %v303 = vsel %vm298, %v289, 0
        %v306 = vsel %vm298, %v290, 0
        %v309 = vsel %vm298, %v291, 0
        %311 = vmatprep.subr.mxu0 0.0
        %312 = vmatpush1.msra.mxu0 0.0
        %313 = vmatprep.subr.mxu0 0.0
        %314 = vmatpush1.msra.mxu0 0.0
        %315 = vmatprep.subr.mxu0 0.0
        %316 = vmatpush1.msra.mxu0 0.0
        %317 = vmatprep.subr.mxu0 0.0
        %318 = vmatpush1.msra.mxu0 0.0
        %319 = vmatprep.subr.mxu0 0.0
        %320 = vmatpush1.msra.mxu0 0.0
        %321 = vmatprep.subr.mxu0 0.0
        %322 = vmatpush1.msra.mxu0 0.0
        %323 = vmatprep.subr.mxu0 0.0
        %324 = vmatpush1.msra.mxu0 0.0
        %325 = vmatprep.subr.mxu0 0.0
        %326 = vmatpush1.msra.mxu0 0.0
        %327 = vmatprep.subr.mxu0 0.0
        %328 = vmatpush1.msra.mxu0 0.0
        %329 = vmatprep.subr.mxu0 0.0
        %330 = vmatpush1.msra.mxu0 0.0
        %331 = vmatprep.subr.mxu0 0.0
        %332 = vmatpush1.msra.mxu0 0.0
        %333 = vmatprep.subr.mxu0 0.0
        %334 = vmatpush1.msra.mxu0 0.0
        %335 = vmatprep.subr.mxu0 0.0
        %336 = vmatpush1.msra.mxu0 0.0
        %337 = vmatprep.subr.mxu0 0.0
        %338 = vmatpush1.msra.mxu0 0.0
        %339 = vmatprep.subr.mxu0 0.0
        %340 = vmatpush1.msra.mxu0 %v297
        %341 = vmatprep.subr.mxu0 0.0
        %342 = vmatpush1.msra.mxu0 %v296
        %343 = vmatprep.subr.mxu0 0.0
        %344 = vmatpush2.msra.mxu0 0.0
        %345 = vmatprep.subr.mxu0 0.0
        %346 = vmatpush2.msra.mxu0 0.0
        %347 = vmatprep.subr.mxu0 0.0
        %348 = vmatpush2.msra.mxu0 0.0
        %349 = vmatprep.subr.mxu0 0.0
        %350 = vmatpush2.msra.mxu0 0.0
        %351 = vmatprep.subr.mxu0 0.0
        %352 = vmatpush2.msra.mxu0 0.0
        %353 = vmatprep.subr.mxu0 0.0
        %354 = vmatpush2.msra.mxu0 0.0
        %355 = vmatprep.subr.mxu0 0.0
        %356 = vmatpush2.msra.mxu0 0.0
        %357 = vmatprep.subr.mxu0 0.0
        %358 = vmatpush2.msra.mxu0 0.0
        %359 = vmatprep.subr.mxu0 0.0
        %360 = vmatpush2.msra.mxu0 0.0
        %361 = vmatprep.subr.mxu0 0.0
        %362 = vmatpush2.msra.mxu0 0.0
        %363 = vmatprep.subr.mxu0 0.0
        %364 = vmatpush2.msra.mxu0 0.0
        %365 = vmatprep.subr.mxu0 0.0
        %366 = vmatpush2.msra.mxu0 0.0
        %367 = vmatprep.subr.mxu0 0.0
        %368 = vmatpush2.msra.mxu0 0.0
        %369 = vmatprep.subr.mxu0 0.0
        %370 = vmatpush2.msra.mxu0 0.0
        %371 = vmatprep.subr.mxu0 0.0
        %372 = vmatpush2.msra.mxu0 0.0
        %373 = vmatprep.subr.mxu0 0.0
        %374 = vmatpush2.msra.mxu0 0.0
        %375 = vmatprep.mubr.f32.mxu0 0.0
        %376 = vmatmul.mubr.f32.gmra.mxu0 %v300
        %v377 = vpop.f32.mrf.mxu0
        %v378 = vadd.f32 0.0, %v377
        %v379 = vpop.f32.mrf.mxu0
        %380 = vmatprep.mubr.f32.mxu0 0.0
        %381 = vmatmul.mubr.f32.gmra.mxu0 %v303
        %v382 = vpop.f32.mrf.mxu0
        %v383 = vadd.f32 0.0, %v382
        %v384 = vpop.f32.mrf.mxu0
        %385 = vmatprep.mubr.f32.mxu0 0.0
        %386 = vmatmul.mubr.f32.gmra.mxu0 %v306
        %v387 = vpop.f32.mrf.mxu0
        %v388 = vadd.f32 0.0, %v387
        %v389 = vpop.f32.mrf.mxu0
        %390 = vmatprep.mubr.f32.mxu0 0.0
        %391 = vmatmul.mubr.f32.gmra.mxu0 %v309
        %v392 = vpop.f32.mrf.mxu0
        %v393 = vadd.f32 0.0, %v392
        %v394 = vpop.f32.mrf.mxu0
        %395 = vdwg.mxu0
        %v396 = vmul.f32 %v378, 0.25
        %v397 = vmul.f32 %v383, 0.25
        %v398 = vmul.f32 %v388, 0.25
        %v399 = vmul.f32 %v393, 0.25
        %v400 = vld [vmem:[#allocation8] sm:$0xff]
        %v401 = vld [vmem:[#allocation8 + $0x8] sm:$0xff]
        %v403 = vsel %vm298, %v292, 0
        %v406 = vsel %vm298, %v293, 0
        %v409 = vsel %vm298, %v294, 0
        %v412 = vsel %vm298, %v295, 0
        %414 = vmatprep.subr.mxu0 0.0
        %415 = vmatpush1.msra.mxu0 0.0
        %416 = vmatprep.subr.mxu0 0.0
        %417 = vmatpush1.msra.mxu0 0.0
        %418 = vmatprep.subr.mxu0 0.0
        %419 = vmatpush1.msra.mxu0 0.0
        %420 = vmatprep.subr.mxu0 0.0
        %421 = vmatpush1.msra.mxu0 0.0
        %422 = vmatprep.subr.mxu0 0.0
        %423 = vmatpush1.msra.mxu0 0.0
        %424 = vmatprep.subr.mxu0 0.0
        %425 = vmatpush1.msra.mxu0 0.0
        %426 = vmatprep.subr.mxu0 0.0
        %427 = vmatpush1.msra.mxu0 0.0
        %428 = vmatprep.subr.mxu0 0.0
        %429 = vmatpush1.msra.mxu0 0.0
        %430 = vmatprep.subr.mxu0 0.0
        %431 = vmatpush1.msra.mxu0 0.0
        %432 = vmatprep.subr.mxu0 0.0
        %433 = vmatpush1.msra.mxu0 0.0
        %434 = vmatprep.subr.mxu0 0.0
        %435 = vmatpush1.msra.mxu0 0.0
        %436 = vmatprep.subr.mxu0 0.0
        %437 = vmatpush1.msra.mxu0 0.0
        %438 = vmatprep.subr.mxu0 0.0
        %439 = vmatpush1.msra.mxu0 0.0
        %440 = vmatprep.subr.mxu0 0.0
        %441 = vmatpush1.msra.mxu0 0.0
        %442 = vmatprep.subr.mxu0 0.0
        %443 = vmatpush1.msra.mxu0 %v401
        %444 = vmatprep.subr.mxu0 0.0
        %445 = vmatpush1.msra.mxu0 %v400
        %446 = vmatprep.subr.mxu0 0.0
        %447 = vmatpush2.msra.mxu0 0.0
        %448 = vmatprep.subr.mxu0 0.0
        %449 = vmatpush2.msra.mxu0 0.0
        %450 = vmatprep.subr.mxu0 0.0
        %451 = vmatpush2.msra.mxu0 0.0
        %452 = vmatprep.subr.mxu0 0.0
        %453 = vmatpush2.msra.mxu0 0.0
        %454 = vmatprep.subr.mxu0 0.0
        %455 = vmatpush2.msra.mxu0 0.0
        %456 = vmatprep.subr.mxu0 0.0
        %457 = vmatpush2.msra.mxu0 0.0
        %458 = vmatprep.subr.mxu0 0.0
        %459 = vmatpush2.msra.mxu0 0.0
        %460 = vmatprep.subr.mxu0 0.0
        %461 = vmatpush2.msra.mxu0 0.0
        %462 = vmatprep.subr.mxu0 0.0
        %463 = vmatpush2.msra.mxu0 0.0
        %464 = vmatprep.subr.mxu0 0.0
        %465 = vmatpush2.msra.mxu0 0.0
        %466 = vmatprep.subr.mxu0 0.0
        %467 = vmatpush2.msra.mxu0 0.0
        %468 = vmatprep.subr.mxu0 0.0
        %469 = vmatpush2.msra.mxu0 0.0
        %470 = vmatprep.subr.mxu0 0.0
        %471 = vmatpush2.msra.mxu0 0.0
        %472 = vmatprep.subr.mxu0 0.0
        %473 = vmatpush2.msra.mxu0 0.0
        %474 = vmatprep.subr.mxu0 0.0
        %475 = vmatpush2.msra.mxu0 0.0
        %476 = vmatprep.subr.mxu0 0.0
        %477 = vmatpush2.msra.mxu0 0.0
        %478 = vmatprep.mubr.f32.mxu0 0.0
        %479 = vmatmul.mubr.f32.gmra.mxu0 %v403
        %v480 = vpop.f32.mrf.mxu0
        %v481 = vadd.f32 0.0, %v480
        %v482 = vpop.f32.mrf.mxu0
        %483 = vmatprep.mubr.f32.mxu0 0.0
        %484 = vmatmul.mubr.f32.gmra.mxu0 %v406
        %v485 = vpop.f32.mrf.mxu0
        %v486 = vadd.f32 0.0, %v485
        %v487 = vpop.f32.mrf.mxu0
        %488 = vmatprep.mubr.f32.mxu0 0.0
        %489 = vmatmul.mubr.f32.gmra.mxu0 %v409
        %v490 = vpop.f32.mrf.mxu0
        %v491 = vadd.f32 0.0, %v490
        %v492 = vpop.f32.mrf.mxu0
        %493 = vmatprep.mubr.f32.mxu0 0.0
        %494 = vmatmul.mubr.f32.gmra.mxu0 %v412
        %v495 = vpop.f32.mrf.mxu0
        %v496 = vadd.f32 0.0, %v495
        %v497 = vpop.f32.mrf.mxu0
        %498 = vdwg.mxu0
        %vm499 = vcmask 64512
        %v501 = vsel %vm499, %v396, 0
        %v504 = vsel %vm499, %v481, 0
        %506 = vmatprep.subr.mxu0 0.0
        %507 = vmatpush1.xpose.msra.mxu0 0.0
        %508 = vmatprep.subr.mxu0 0.0
        %509 = vmatpush1.xpose.msra.mxu0 0.0
        %510 = vmatprep.subr.mxu0 0.0
        %511 = vmatpush1.xpose.msra.mxu0 0.0
        %512 = vmatprep.subr.mxu0 0.0
        %513 = vmatpush1.xpose.msra.mxu0 0.0
        %514 = vmatprep.subr.mxu0 0.0
        %515 = vmatpush1.xpose.msra.mxu0 0.0
        %516 = vmatprep.subr.mxu0 0.0
        %517 = vmatpush1.xpose.msra.mxu0 0.0
        %518 = vmatprep.subr.mxu0 0.0
        %519 = vmatpush1.xpose.msra.mxu0 0.0
        %520 = vmatprep.subr.mxu0 0.0
        %521 = vmatpush1.xpose.msra.mxu0 0.0
        %522 = vmatprep.subr.mxu0 0.0
        %523 = vmatpush1.xpose.msra.mxu0 0.0
        %524 = vmatprep.subr.mxu0 0.0
        %525 = vmatpush1.xpose.msra.mxu0 0.0
        %526 = vmatprep.subr.mxu0 0.0
        %527 = vmatpush1.xpose.msra.mxu0 0.0
        %528 = vmatprep.subr.mxu0 0.0
        %529 = vmatpush1.xpose.msra.mxu0 0.0
        %530 = vmatprep.subr.mxu0 0.0
        %531 = vmatpush1.xpose.msra.mxu0 0.0
        %532 = vmatprep.subr.mxu0 0.0
        %533 = vmatpush1.xpose.msra.mxu0 0.0
        %534 = vmatprep.subr.mxu0 0.0
        %535 = vmatpush1.xpose.msra.mxu0 0.0
        %536 = vmatprep.subr.mxu0 0.0
        %537 = vmatpush1.xpose.msra.mxu0 %v504
        %538 = vmatprep.subr.mxu0 0.0
        %539 = vmatpush2.xpose.msra.mxu0 0.0
        %540 = vmatprep.subr.mxu0 0.0
        %541 = vmatpush2.xpose.msra.mxu0 0.0
        %542 = vmatprep.subr.mxu0 0.0
        %543 = vmatpush2.xpose.msra.mxu0 0.0
        %544 = vmatprep.subr.mxu0 0.0
        %545 = vmatpush2.xpose.msra.mxu0 0.0
        %546 = vmatprep.subr.mxu0 0.0
        %547 = vmatpush2.xpose.msra.mxu0 0.0
        %548 = vmatprep.subr.mxu0 0.0
        %549 = vmatpush2.xpose.msra.mxu0 0.0
        %550 = vmatprep.subr.mxu0 0.0
        %551 = vmatpush2.xpose.msra.mxu0 0.0
        %552 = vmatprep.subr.mxu0 0.0
        %553 = vmatpush2.xpose.msra.mxu0 0.0
        %554 = vmatprep.subr.mxu0 0.0
        %555 = vmatpush2.xpose.msra.mxu0 0.0
        %556 = vmatprep.subr.mxu0 0.0
        %557 = vmatpush2.xpose.msra.mxu0 0.0
        %558 = vmatprep.subr.mxu0 0.0
        %559 = vmatpush2.xpose.msra.mxu0 0.0
        %560 = vmatprep.subr.mxu0 0.0
        %561 = vmatpush2.xpose.msra.mxu0 0.0
        %562 = vmatprep.subr.mxu0 0.0
        %563 = vmatpush2.xpose.msra.mxu0 0.0
        %564 = vmatprep.subr.mxu0 0.0
        %565 = vmatpush2.xpose.msra.mxu0 0.0
        %566 = vmatprep.subr.mxu0 0.0
        %567 = vmatpush2.xpose.msra.mxu0 0.0
        %568 = vmatprep.subr.mxu0 0.0
        %569 = vmatpush2.xpose.msra.mxu0 0.0
        %570 = vmatprep.mubr.f32.mxu0 0.0
        %571 = vmatmul.mubr.f32.gmra.mxu0 %v501
        %v572 = vpop.f32.mrf.mxu0
        %v573 = vadd.f32 0.0, %v572
        %v574 = vpop.f32.mrf.mxu0
        %575 = vdwg.mxu0
        %v577 = vsel %vm499, %v397, 0
        %v580 = vsel %vm499, %v486, 0
        %582 = vmatprep.subr.mxu0 0.0
        %583 = vmatpush1.xpose.msra.mxu0 0.0
        %584 = vmatprep.subr.mxu0 0.0
        %585 = vmatpush1.xpose.msra.mxu0 0.0
        %586 = vmatprep.subr.mxu0 0.0
        %587 = vmatpush1.xpose.msra.mxu0 0.0
        %588 = vmatprep.subr.mxu0 0.0
        %589 = vmatpush1.xpose.msra.mxu0 0.0
        %590 = vmatprep.subr.mxu0 0.0
        %591 = vmatpush1.xpose.msra.mxu0 0.0
        %592 = vmatprep.subr.mxu0 0.0
        %593 = vmatpush1.xpose.msra.mxu0 0.0
        %594 = vmatprep.subr.mxu0 0.0
        %595 = vmatpush1.xpose.msra.mxu0 0.0
        %596 = vmatprep.subr.mxu0 0.0
        %597 = vmatpush1.xpose.msra.mxu0 0.0
        %598 = vmatprep.subr.mxu0 0.0
        %599 = vmatpush1.xpose.msra.mxu0 0.0
        %600 = vmatprep.subr.mxu0 0.0
        %601 = vmatpush1.xpose.msra.mxu0 0.0
        %602 = vmatprep.subr.mxu0 0.0
        %603 = vmatpush1.xpose.msra.mxu0 0.0
        %604 = vmatprep.subr.mxu0 0.0
        %605 = vmatpush1.xpose.msra.mxu0 0.0
        %606 = vmatprep.subr.mxu0 0.0
        %607 = vmatpush1.xpose.msra.mxu0 0.0
        %608 = vmatprep.subr.mxu0 0.0
        %609 = vmatpush1.xpose.msra.mxu0 0.0
        %610 = vmatprep.subr.mxu0 0.0
        %611 = vmatpush1.xpose.msra.mxu0 0.0
        %612 = vmatprep.subr.mxu0 0.0
        %613 = vmatpush1.xpose.msra.mxu0 %v580
        %614 = vmatprep.subr.mxu0 0.0
        %615 = vmatpush2.xpose.msra.mxu0 0.0
        %616 = vmatprep.subr.mxu0 0.0
        %617 = vmatpush2.xpose.msra.mxu0 0.0
        %618 = vmatprep.subr.mxu0 0.0
        %619 = vmatpush2.xpose.msra.mxu0 0.0
        %620 = vmatprep.subr.mxu0 0.0
        %621 = vmatpush2.xpose.msra.mxu0 0.0
        %622 = vmatprep.subr.mxu0 0.0
        %623 = vmatpush2.xpose.msra.mxu0 0.0
        %624 = vmatprep.subr.mxu0 0.0
        %625 = vmatpush2.xpose.msra.mxu0 0.0
        %626 = vmatprep.subr.mxu0 0.0
        %627 = vmatpush2.xpose.msra.mxu0 0.0
        %628 = vmatprep.subr.mxu0 0.0
        %629 = vmatpush2.xpose.msra.mxu0 0.0
        %630 = vmatprep.subr.mxu0 0.0
        %631 = vmatpush2.xpose.msra.mxu0 0.0
        %632 = vmatprep.subr.mxu0 0.0
        %633 = vmatpush2.xpose.msra.mxu0 0.0
        %634 = vmatprep.subr.mxu0 0.0
        %635 = vmatpush2.xpose.msra.mxu0 0.0
        %636 = vmatprep.subr.mxu0 0.0
        %637 = vmatpush2.xpose.msra.mxu0 0.0
        %638 = vmatprep.subr.mxu0 0.0
        %639 = vmatpush2.xpose.msra.mxu0 0.0
        %640 = vmatprep.subr.mxu0 0.0
        %641 = vmatpush2.xpose.msra.mxu0 0.0
        %642 = vmatprep.subr.mxu0 0.0
        %643 = vmatpush2.xpose.msra.mxu0 0.0
        %644 = vmatprep.subr.mxu0 0.0
        %645 = vmatpush2.xpose.msra.mxu0 0.0
        %646 = vmatprep.mubr.f32.mxu0 0.0
        %647 = vmatmul.mubr.f32.gmra.mxu0 %v577
        %v648 = vpop.f32.mrf.mxu0
        %v649 = vadd.f32 0.0, %v648
        %v650 = vpop.f32.mrf.mxu0
        %651 = vdwg.mxu0
        %v653 = vsel %vm499, %v398, 0
        %v656 = vsel %vm499, %v491, 0
        %658 = vmatprep.subr.mxu0 0.0
        %659 = vmatpush1.xpose.msra.mxu0 0.0
        %660 = vmatprep.subr.mxu0 0.0
        %661 = vmatpush1.xpose.msra.mxu0 0.0
        %662 = vmatprep.subr.mxu0 0.0
        %663 = vmatpush1.xpose.msra.mxu0 0.0
        %664 = vmatprep.subr.mxu0 0.0
        %665 = vmatpush1.xpose.msra.mxu0 0.0
        %666 = vmatprep.subr.mxu0 0.0
        %667 = vmatpush1.xpose.msra.mxu0 0.0
        %668 = vmatprep.subr.mxu0 0.0
        %669 = vmatpush1.xpose.msra.mxu0 0.0
        %670 = vmatprep.subr.mxu0 0.0
        %671 = vmatpush1.xpose.msra.mxu0 0.0
        %672 = vmatprep.subr.mxu0 0.0
        %673 = vmatpush1.xpose.msra.mxu0 0.0
        %674 = vmatprep.subr.mxu0 0.0
        %675 = vmatpush1.xpose.msra.mxu0 0.0
        %676 = vmatprep.subr.mxu0 0.0
        %677 = vmatpush1.xpose.msra.mxu0 0.0
        %678 = vmatprep.subr.mxu0 0.0
        %679 = vmatpush1.xpose.msra.mxu0 0.0
        %680 = vmatprep.subr.mxu0 0.0
        %681 = vmatpush1.xpose.msra.mxu0 0.0
        %682 = vmatprep.subr.mxu0 0.0
        %683 = vmatpush1.xpose.msra.mxu0 0.0
        %684 = vmatprep.subr.mxu0 0.0
        %685 = vmatpush1.xpose.msra.mxu0 0.0
        %686 = vmatprep.subr.mxu0 0.0
        %687 = vmatpush1.xpose.msra.mxu0 0.0
        %688 = vmatprep.subr.mxu0 0.0
        %689 = vmatpush1.xpose.msra.mxu0 %v656
        %690 = vmatprep.subr.mxu0 0.0
        %691 = vmatpush2.xpose.msra.mxu0 0.0
        %692 = vmatprep.subr.mxu0 0.0
        %693 = vmatpush2.xpose.msra.mxu0 0.0
        %694 = vmatprep.subr.mxu0 0.0
        %695 = vmatpush2.xpose.msra.mxu0 0.0
        %696 = vmatprep.subr.mxu0 0.0
        %697 = vmatpush2.xpose.msra.mxu0 0.0
        %698 = vmatprep.subr.mxu0 0.0
        %699 = vmatpush2.xpose.msra.mxu0 0.0
        %700 = vmatprep.subr.mxu0 0.0
        %701 = vmatpush2.xpose.msra.mxu0 0.0
        %702 = vmatprep.subr.mxu0 0.0
        %703 = vmatpush2.xpose.msra.mxu0 0.0
        %704 = vmatprep.subr.mxu0 0.0
        %705 = vmatpush2.xpose.msra.mxu0 0.0
        %706 = vmatprep.subr.mxu0 0.0
        %707 = vmatpush2.xpose.msra.mxu0 0.0
        %708 = vmatprep.subr.mxu0 0.0
        %709 = vmatpush2.xpose.msra.mxu0 0.0
        %710 = vmatprep.subr.mxu0 0.0
        %711 = vmatpush2.xpose.msra.mxu0 0.0
        %712 = vmatprep.subr.mxu0 0.0
        %713 = vmatpush2.xpose.msra.mxu0 0.0
        %714 = vmatprep.subr.mxu0 0.0
        %715 = vmatpush2.xpose.msra.mxu0 0.0
        %716 = vmatprep.subr.mxu0 0.0
        %717 = vmatpush2.xpose.msra.mxu0 0.0
        %718 = vmatprep.subr.mxu0 0.0
        %719 = vmatpush2.xpose.msra.mxu0 0.0
        %720 = vmatprep.subr.mxu0 0.0
        %721 = vmatpush2.xpose.msra.mxu0 0.0
        %722 = vmatprep.mubr.f32.mxu0 0.0
        %723 = vmatmul.mubr.f32.gmra.mxu0 %v653
        %v724 = vpop.f32.mrf.mxu0
        %v725 = vadd.f32 0.0, %v724
        %v726 = vpop.f32.mrf.mxu0
        %727 = vdwg.mxu0
        %v729 = vsel %vm499, %v399, 0
        %v732 = vsel %vm499, %v496, 0
        %734 = vmatprep.subr.mxu0 0.0
        %735 = vmatpush1.xpose.msra.mxu0 0.0
        %736 = vmatprep.subr.mxu0 0.0
        %737 = vmatpush1.xpose.msra.mxu0 0.0
        %738 = vmatprep.subr.mxu0 0.0
        %739 = vmatpush1.xpose.msra.mxu0 0.0
        %740 = vmatprep.subr.mxu0 0.0
        %741 = vmatpush1.xpose.msra.mxu0 0.0
        %742 = vmatprep.subr.mxu0 0.0
        %743 = vmatpush1.xpose.msra.mxu0 0.0
        %744 = vmatprep.subr.mxu0 0.0
        %745 = vmatpush1.xpose.msra.mxu0 0.0
        %746 = vmatprep.subr.mxu0 0.0
        %747 = vmatpush1.xpose.msra.mxu0 0.0
        %748 = vmatprep.subr.mxu0 0.0
        %749 = vmatpush1.xpose.msra.mxu0 0.0
        %750 = vmatprep.subr.mxu0 0.0
        %751 = vmatpush1.xpose.msra.mxu0 0.0
        %752 = vmatprep.subr.mxu0 0.0
        %753 = vmatpush1.xpose.msra.mxu0 0.0
        %754 = vmatprep.subr.mxu0 0.0
        %755 = vmatpush1.xpose.msra.mxu0 0.0
        %756 = vmatprep.subr.mxu0 0.0
        %757 = vmatpush1.xpose.msra.mxu0 0.0
        %758 = vmatprep.subr.mxu0 0.0
        %759 = vmatpush1.xpose.msra.mxu0 0.0
        %760 = vmatprep.subr.mxu0 0.0
        %761 = vmatpush1.xpose.msra.mxu0 0.0
        %762 = vmatprep.subr.mxu0 0.0
        %763 = vmatpush1.xpose.msra.mxu0 0.0
        %764 = vmatprep.subr.mxu0 0.0
        %765 = vmatpush1.xpose.msra.mxu0 %v732
        %766 = vmatprep.subr.mxu0 0.0
        %767 = vmatpush2.xpose.msra.mxu0 0.0
        %768 = vmatprep.subr.mxu0 0.0
        %769 = vmatpush2.xpose.msra.mxu0 0.0
        %770 = vmatprep.subr.mxu0 0.0
        %771 = vmatpush2.xpose.msra.mxu0 0.0
        %772 = vmatprep.subr.mxu0 0.0
        %773 = vmatpush2.xpose.msra.mxu0 0.0
        %774 = vmatprep.subr.mxu0 0.0
        %775 = vmatpush2.xpose.msra.mxu0 0.0
        %776 = vmatprep.subr.mxu0 0.0
        %777 = vmatpush2.xpose.msra.mxu0 0.0
        %778 = vmatprep.subr.mxu0 0.0
        %779 = vmatpush2.xpose.msra.mxu0 0.0
        %780 = vmatprep.subr.mxu0 0.0
        %781 = vmatpush2.xpose.msra.mxu0 0.0
        %782 = vmatprep.subr.mxu0 0.0
        %783 = vmatpush2.xpose.msra.mxu0 0.0
        %784 = vmatprep.subr.mxu0 0.0
        %785 = vmatpush2.xpose.msra.mxu0 0.0
        %786 = vmatprep.subr.mxu0 0.0
        %787 = vmatpush2.xpose.msra.mxu0 0.0
        %788 = vmatprep.subr.mxu0 0.0
        %789 = vmatpush2.xpose.msra.mxu0 0.0
        %790 = vmatprep.subr.mxu0 0.0
        %791 = vmatpush2.xpose.msra.mxu0 0.0
        %792 = vmatprep.subr.mxu0 0.0
        %793 = vmatpush2.xpose.msra.mxu0 0.0
        %794 = vmatprep.subr.mxu0 0.0
        %795 = vmatpush2.xpose.msra.mxu0 0.0
        %796 = vmatprep.subr.mxu0 0.0
        %797 = vmatpush2.xpose.msra.mxu0 0.0
        %798 = vmatprep.mubr.f32.mxu0 0.0
        %799 = vmatmul.mubr.f32.gmra.mxu0 %v729
        %v800 = vpop.f32.mrf.mxu0
        %v801 = vadd.f32 0.0, %v800
        %v802 = vpop.f32.mrf.mxu0
        %803 = vdwg.mxu0
        %v804 = vsel %vm499, %v573, -inf
        %805 = vmax.xlane.f32.xlu0 %v804
        %v806 = vpop.xlane.xlu0 %805
        %v807 = vsel %vm499, %v649, -inf
        %808 = vmax.xlane.f32.xlu0 %v807
        %v809 = vpop.xlane.xlu0 %808
        %v810 = vsel %vm499, %v725, -inf
        %811 = vmax.xlane.f32.xlu0 %v810
        %v812 = vpop.xlane.xlu0 %811
        %v813 = vsel %vm499, %v801, -inf
        %814 = vmax.xlane.f32.xlu0 %v813
        %v815 = vpop.xlane.xlu0 %814
        %v816 = vsub.f32 %v573, %v806
        %v817 = vsub.f32 %v649, %v809
        %v818 = vsub.f32 %v725, %v812
        %v819 = vsub.f32 %v801, %v815
        %v820 = vmul.f32 %v816, 1.442695
        %v821 = vpow.pop %v820
        %v822 = vmul.f32 %v817, 1.442695
        %v823 = vpow.pop %v822
        %v824 = vmul.f32 %v818, 1.442695
        %v825 = vpow.pop %v824
        %v826 = vmul.f32 %v819, 1.442695
        %v827 = vpow.pop %v826
        %v828 = vsel %vm499, %v821, 0.0
        %829 = vadd.xlane.f32.xlu0 %v828
        %v830 = vpop.xlane.xlu0 %829
        %v831 = vsel %vm499, %v823, 0.0
        %832 = vadd.xlane.f32.xlu0 %v831
        %v833 = vpop.xlane.xlu0 %832
        %v834 = vsel %vm499, %v825, 0.0
        %835 = vadd.xlane.f32.xlu0 %v834
        %v836 = vpop.xlane.xlu0 %835
        %v837 = vsel %vm499, %v827, 0.0
        %838 = vadd.xlane.f32.xlu0 %v837
        %v839 = vpop.xlane.xlu0 %838
        %v840 = vrcp.pop %v830
        %v841 = vrcp.pop %v833
        %v842 = vrcp.pop %v836
        %v843 = vrcp.pop %v839
        %v844 = vmul.f32 %v821, %v840
        %v845 = vmul.f32 %v823, %v841
        %v846 = vmul.f32 %v825, %v842
        %v847 = vmul.f32 %v827, %v843
        %848 = vrot.lane.b32.xlu0 %v481, 96
        %v849 = vpop.permute.xlu0 %848
        %v852 = vsel %vm499, %v844, 0
        %854 = vmatprep.subr.mxu0 0.0
        %855 = vmatpush1.msra.mxu0 0.0
        %856 = vmatprep.subr.mxu0 0.0
        %857 = vmatpush1.msra.mxu0 0.0
        %858 = vmatprep.subr.mxu0 0.0
        %859 = vmatpush1.msra.mxu0 0.0
        %860 = vmatprep.subr.mxu0 0.0
        %861 = vmatpush1.msra.mxu0 0.0
        %862 = vmatprep.subr.mxu0 0.0
        %863 = vmatpush1.msra.mxu0 0.0
        %864 = vmatprep.subr.mxu0 0.0
        %865 = vmatpush1.msra.mxu0 0.0
        %866 = vmatprep.subr.mxu0 0.0
        %867 = vmatpush1.msra.mxu0 0.0
        %868 = vmatprep.subr.mxu0 0.0
        %869 = vmatpush1.msra.mxu0 0.0
        %870 = vmatprep.subr.mxu0 0.0
        %871 = vmatpush1.msra.mxu0 0.0
        %872 = vmatprep.subr.mxu0 0.0
        %873 = vmatpush1.msra.mxu0 0.0
        %874 = vmatprep.subr.mxu0 0.0
        %875 = vmatpush1.msra.mxu0 0.0
        %876 = vmatprep.subr.mxu0 0.0
        %877 = vmatpush1.msra.mxu0 0.0
        %878 = vmatprep.subr.mxu0 0.0
        %879 = vmatpush1.msra.mxu0 0.0
        %880 = vmatprep.subr.mxu0 0.0
        %881 = vmatpush1.msra.mxu0 0.0
        %882 = vmatprep.subr.mxu0 0.0
        %883 = vmatpush1.msra.mxu0 0.0
        %884 = vmatprep.subr.mxu0 0.0
        %885 = vmatpush1.msra.mxu0 %v849
        %886 = vmatprep.subr.mxu0 0.0
        %887 = vmatpush2.msra.mxu0 0.0
        %888 = vmatprep.subr.mxu0 0.0
        %889 = vmatpush2.msra.mxu0 0.0
        %890 = vmatprep.subr.mxu0 0.0
        %891 = vmatpush2.msra.mxu0 0.0
        %892 = vmatprep.subr.mxu0 0.0
        %893 = vmatpush2.msra.mxu0 0.0
        %894 = vmatprep.subr.mxu0 0.0
        %895 = vmatpush2.msra.mxu0 0.0
        %896 = vmatprep.subr.mxu0 0.0
        %897 = vmatpush2.msra.mxu0 0.0
        %898 = vmatprep.subr.mxu0 0.0
        %899 = vmatpush2.msra.mxu0 0.0
        %900 = vmatprep.subr.mxu0 0.0
        %901 = vmatpush2.msra.mxu0 0.0
        %902 = vmatprep.subr.mxu0 0.0
        %903 = vmatpush2.msra.mxu0 0.0
        %904 = vmatprep.subr.mxu0 0.0
        %905 = vmatpush2.msra.mxu0 0.0
        %906 = vmatprep.subr.mxu0 0.0
        %907 = vmatpush2.msra.mxu0 0.0
        %908 = vmatprep.subr.mxu0 0.0
        %909 = vmatpush2.msra.mxu0 0.0
        %910 = vmatprep.subr.mxu0 0.0
        %911 = vmatpush2.msra.mxu0 0.0
        %912 = vmatprep.subr.mxu0 0.0
        %913 = vmatpush2.msra.mxu0 0.0
        %914 = vmatprep.subr.mxu0 0.0
        %915 = vmatpush2.msra.mxu0 0.0
        %916 = vmatprep.subr.mxu0 0.0
        %917 = vmatpush2.msra.mxu0 0.0
        %918 = vmatprep.mubr.f32.mxu0 0.0
        %919 = vmatmul.mubr.f32.gmra.mxu0 %v852
        %v920 = vpop.f32.mrf.mxu0
        %v921 = vadd.f32 0.0, %v920
        %v922 = vpop.f32.mrf.mxu0
        %923 = vdwg.mxu0
        %924 = vrot.lane.b32.xlu0 %v486, 96
        %v925 = vpop.permute.xlu0 %924
        %v928 = vsel %vm499, %v845, 0
        %930 = vmatprep.subr.mxu0 0.0
        %931 = vmatpush1.msra.mxu0 0.0
        %932 = vmatprep.subr.mxu0 0.0
        %933 = vmatpush1.msra.mxu0 0.0
        %934 = vmatprep.subr.mxu0 0.0
        %935 = vmatpush1.msra.mxu0 0.0
        %936 = vmatprep.subr.mxu0 0.0
        %937 = vmatpush1.msra.mxu0 0.0
        %938 = vmatprep.subr.mxu0 0.0
        %939 = vmatpush1.msra.mxu0 0.0
        %940 = vmatprep.subr.mxu0 0.0
        %941 = vmatpush1.msra.mxu0 0.0
        %942 = vmatprep.subr.mxu0 0.0
        %943 = vmatpush1.msra.mxu0 0.0
        %944 = vmatprep.subr.mxu0 0.0
        %945 = vmatpush1.msra.mxu0 0.0
        %946 = vmatprep.subr.mxu0 0.0
        %947 = vmatpush1.msra.mxu0 0.0
        %948 = vmatprep.subr.mxu0 0.0
        %949 = vmatpush1.msra.mxu0 0.0
        %950 = vmatprep.subr.mxu0 0.0
        %951 = vmatpush1.msra.mxu0 0.0
        %952 = vmatprep.subr.mxu0 0.0
        %953 = vmatpush1.msra.mxu0 0.0
        %954 = vmatprep.subr.mxu0 0.0
        %955 = vmatpush1.msra.mxu0 0.0
        %956 = vmatprep.subr.mxu0 0.0
        %957 = vmatpush1.msra.mxu0 0.0
        %958 = vmatprep.subr.mxu0 0.0
        %959 = vmatpush1.msra.mxu0 0.0
        %960 = vmatprep.subr.mxu0 0.0
        %961 = vmatpush1.msra.mxu0 %v925
        %962 = vmatprep.subr.mxu0 0.0
        %963 = vmatpush2.msra.mxu0 0.0
        %964 = vmatprep.subr.mxu0 0.0
        %965 = vmatpush2.msra.mxu0 0.0
        %966 = vmatprep.subr.mxu0 0.0
        %967 = vmatpush2.msra.mxu0 0.0
        %968 = vmatprep.subr.mxu0 0.0
        %969 = vmatpush2.msra.mxu0 0.0
        %970 = vmatprep.subr.mxu0 0.0
        %971 = vmatpush2.msra.mxu0 0.0
        %972 = vmatprep.subr.mxu0 0.0
        %973 = vmatpush2.msra.mxu0 0.0
        %974 = vmatprep.subr.mxu0 0.0
        %975 = vmatpush2.msra.mxu0 0.0
        %976 = vmatprep.subr.mxu0 0.0
        %977 = vmatpush2.msra.mxu0 0.0
        %978 = vmatprep.subr.mxu0 0.0
        %979 = vmatpush2.msra.mxu0 0.0
        %980 = vmatprep.subr.mxu0 0.0
        %981 = vmatpush2.msra.mxu0 0.0
        %982 = vmatprep.subr.mxu0 0.0
        %983 = vmatpush2.msra.mxu0 0.0
        %984 = vmatprep.subr.mxu0 0.0
        %985 = vmatpush2.msra.mxu0 0.0
        %986 = vmatprep.subr.mxu0 0.0
        %987 = vmatpush2.msra.mxu0 0.0
        %988 = vmatprep.subr.mxu0 0.0
        %989 = vmatpush2.msra.mxu0 0.0
        %990 = vmatprep.subr.mxu0 0.0
        %991 = vmatpush2.msra.mxu0 0.0
        %992 = vmatprep.subr.mxu0 0.0
        %993 = vmatpush2.msra.mxu0 0.0
        %994 = vmatprep.mubr.f32.mxu0 0.0
        %995 = vmatmul.mubr.f32.gmra.mxu0 %v928
        %v996 = vpop.f32.mrf.mxu0
        %v997 = vadd.f32 0.0, %v996
        %v998 = vpop.f32.mrf.mxu0
        %999 = vdwg.mxu0
        %1000 = vrot.lane.b32.xlu0 %v491, 96
        %v1001 = vpop.permute.xlu0 %1000
        %v1004 = vsel %vm499, %v846, 0
        %1006 = vmatprep.subr.mxu0 0.0
        %1007 = vmatpush1.msra.mxu0 0.0
        %1008 = vmatprep.subr.mxu0 0.0
        %1009 = vmatpush1.msra.mxu0 0.0
        %1010 = vmatprep.subr.mxu0 0.0
        %1011 = vmatpush1.msra.mxu0 0.0
        %1012 = vmatprep.subr.mxu0 0.0
        %1013 = vmatpush1.msra.mxu0 0.0
        %1014 = vmatprep.subr.mxu0 0.0
        %1015 = vmatpush1.msra.mxu0 0.0
        %1016 = vmatprep.subr.mxu0 0.0
        %1017 = vmatpush1.msra.mxu0 0.0
        %1018 = vmatprep.subr.mxu0 0.0
        %1019 = vmatpush1.msra.mxu0 0.0
        %1020 = vmatprep.subr.mxu0 0.0
        %1021 = vmatpush1.msra.mxu0 0.0
        %1022 = vmatprep.subr.mxu0 0.0
        %1023 = vmatpush1.msra.mxu0 0.0
        %1024 = vmatprep.subr.mxu0 0.0
        %1025 = vmatpush1.msra.mxu0 0.0
        %1026 = vmatprep.subr.mxu0 0.0
        %1027 = vmatpush1.msra.mxu0 0.0
        %1028 = vmatprep.subr.mxu0 0.0
        %1029 = vmatpush1.msra.mxu0 0.0
        %1030 = vmatprep.subr.mxu0 0.0
        %1031 = vmatpush1.msra.mxu0 0.0
        %1032 = vmatprep.subr.mxu0 0.0
        %1033 = vmatpush1.msra.mxu0 0.0
        %1034 = vmatprep.subr.mxu0 0.0
        %1035 = vmatpush1.msra.mxu0 0.0
        %1036 = vmatprep.subr.mxu0 0.0
        %1037 = vmatpush1.msra.mxu0 %v1001
        %1038 = vmatprep.subr.mxu0 0.0
        %1039 = vmatpush2.msra.mxu0 0.0
        %1040 = vmatprep.subr.mxu0 0.0
        %1041 = vmatpush2.msra.mxu0 0.0
        %1042 = vmatprep.subr.mxu0 0.0
        %1043 = vmatpush2.msra.mxu0 0.0
        %1044 = vmatprep.subr.mxu0 0.0
        %1045 = vmatpush2.msra.mxu0 0.0
        %1046 = vmatprep.subr.mxu0 0.0
        %1047 = vmatpush2.msra.mxu0 0.0
        %1048 = vmatprep.subr.mxu0 0.0
        %1049 = vmatpush2.msra.mxu0 0.0
        %1050 = vmatprep.subr.mxu0 0.0
        %1051 = vmatpush2.msra.mxu0 0.0
        %1052 = vmatprep.subr.mxu0 0.0
        %1053 = vmatpush2.msra.mxu0 0.0
        %1054 = vmatprep.subr.mxu0 0.0
        %1055 = vmatpush2.msra.mxu0 0.0
        %1056 = vmatprep.subr.mxu0 0.0
        %1057 = vmatpush2.msra.mxu0 0.0
        %1058 = vmatprep.subr.mxu0 0.0
        %1059 = vmatpush2.msra.mxu0 0.0
        %1060 = vmatprep.subr.mxu0 0.0
        %1061 = vmatpush2.msra.mxu0 0.0
        %1062 = vmatprep.subr.mxu0 0.0
        %1063 = vmatpush2.msra.mxu0 0.0
        %1064 = vmatprep.subr.mxu0 0.0
        %1065 = vmatpush2.msra.mxu0 0.0
        %1066 = vmatprep.subr.mxu0 0.0
        %1067 = vmatpush2.msra.mxu0 0.0
        %1068 = vmatprep.subr.mxu0 0.0
        %1069 = vmatpush2.msra.mxu0 0.0
        %1070 = vmatprep.mubr.f32.mxu0 0.0
        %1071 = vmatmul.mubr.f32.gmra.mxu0 %v1004
        %v1072 = vpop.f32.mrf.mxu0
        %v1073 = vadd.f32 0.0, %v1072
        %v1074 = vpop.f32.mrf.mxu0
        %1075 = vdwg.mxu0
        %1076 = vrot.lane.b32.xlu0 %v496, 96
        %v1077 = vpop.permute.xlu0 %1076
        %v1080 = vsel %vm499, %v847, 0
        %1082 = vmatprep.subr.mxu0 0.0
        %1083 = vmatpush1.msra.mxu0 0.0
        %1084 = vmatprep.subr.mxu0 0.0
        %1085 = vmatpush1.msra.mxu0 0.0
        %1086 = vmatprep.subr.mxu0 0.0
        %1087 = vmatpush1.msra.mxu0 0.0
        %1088 = vmatprep.subr.mxu0 0.0
        %1089 = vmatpush1.msra.mxu0 0.0
        %1090 = vmatprep.subr.mxu0 0.0
        %1091 = vmatpush1.msra.mxu0 0.0
        %1092 = vmatprep.subr.mxu0 0.0
        %1093 = vmatpush1.msra.mxu0 0.0
        %1094 = vmatprep.subr.mxu0 0.0
        %1095 = vmatpush1.msra.mxu0 0.0
        %1096 = vmatprep.subr.mxu0 0.0
        %1097 = vmatpush1.msra.mxu0 0.0
        %1098 = vmatprep.subr.mxu0 0.0
        %1099 = vmatpush1.msra.mxu0 0.0
        %1100 = vmatprep.subr.mxu0 0.0
        %1101 = vmatpush1.msra.mxu0 0.0
        %1102 = vmatprep.subr.mxu0 0.0
        %1103 = vmatpush1.msra.mxu0 0.0
        %1104 = vmatprep.subr.mxu0 0.0
        %1105 = vmatpush1.msra.mxu0 0.0
        %1106 = vmatprep.subr.mxu0 0.0
        %1107 = vmatpush1.msra.mxu0 0.0
        %1108 = vmatprep.subr.mxu0 0.0
        %1109 = vmatpush1.msra.mxu0 0.0
        %1110 = vmatprep.subr.mxu0 0.0
        %1111 = vmatpush1.msra.mxu0 0.0
        %1112 = vmatprep.subr.mxu0 0.0
        %1113 = vmatpush1.msra.mxu0 %v1077
        %1114 = vmatprep.subr.mxu0 0.0
        %1115 = vmatpush2.msra.mxu0 0.0
        %1116 = vmatprep.subr.mxu0 0.0
        %1117 = vmatpush2.msra.mxu0 0.0
        %1118 = vmatprep.subr.mxu0 0.0
        %1119 = vmatpush2.msra.mxu0 0.0
        %1120 = vmatprep.subr.mxu0 0.0
        %1121 = vmatpush2.msra.mxu0 0.0
        %1122 = vmatprep.subr.mxu0 0.0
        %1123 = vmatpush2.msra.mxu0 0.0
        %1124 = vmatprep.subr.mxu0 0.0
        %1125 = vmatpush2.msra.mxu0 0.0
        %1126 = vmatprep.subr.mxu0 0.0
        %1127 = vmatpush2.msra.mxu0 0.0
        %1128 = vmatprep.subr.mxu0 0.0
        %1129 = vmatpush2.msra.mxu0 0.0
        %1130 = vmatprep.subr.mxu0 0.0
        %1131 = vmatpush2.msra.mxu0 0.0
        %1132 = vmatprep.subr.mxu0 0.0
        %1133 = vmatpush2.msra.mxu0 0.0
        %1134 = vmatprep.subr.mxu0 0.0
        %1135 = vmatpush2.msra.mxu0 0.0
        %1136 = vmatprep.subr.mxu0 0.0
        %1137 = vmatpush2.msra.mxu0 0.0
        %1138 = vmatprep.subr.mxu0 0.0
        %1139 = vmatpush2.msra.mxu0 0.0
        %1140 = vmatprep.subr.mxu0 0.0
        %1141 = vmatpush2.msra.mxu0 0.0
        %1142 = vmatprep.subr.mxu0 0.0
        %1143 = vmatpush2.msra.mxu0 0.0
        %1144 = vmatprep.subr.mxu0 0.0
        %1145 = vmatpush2.msra.mxu0 0.0
        %1146 = vmatprep.mubr.f32.mxu0 0.0
        %1147 = vmatmul.mubr.f32.gmra.mxu0 %v1080
        %v1148 = vpop.f32.mrf.mxu0
        %v1149 = vadd.f32 0.0, %v1148
        %v1150 = vpop.f32.mrf.mxu0
        %1151 = vdwg.mxu0
        %1152 = vrot.lane.b32.xlu0 %v396, 120
        %v1153 = vpop.permute.xlu0 %1152
        %1154 = vrot.lane.b32.xlu0 %v481, 120
        %v1155 = vpop.permute.xlu0 %1154
        %v1156 = vsel %vm499, %v1153, 0
        %v1158 = vsel %vm499, %v1155, 0
        %1160 = vmatprep.subr.mxu0 0.0
        %1161 = vmatpush1.xpose.msra.mxu0 0.0
        %1162 = vmatprep.subr.mxu0 0.0
        %1163 = vmatpush1.xpose.msra.mxu0 0.0
        %1164 = vmatprep.subr.mxu0 0.0
        %1165 = vmatpush1.xpose.msra.mxu0 0.0
        %1166 = vmatprep.subr.mxu0 0.0
        %1167 = vmatpush1.xpose.msra.mxu0 0.0
        %1168 = vmatprep.subr.mxu0 0.0
        %1169 = vmatpush1.xpose.msra.mxu0 0.0
        %1170 = vmatprep.subr.mxu0 0.0
        %1171 = vmatpush1.xpose.msra.mxu0 0.0
        %1172 = vmatprep.subr.mxu0 0.0
        %1173 = vmatpush1.xpose.msra.mxu0 0.0
        %1174 = vmatprep.subr.mxu0 0.0
        %1175 = vmatpush1.xpose.msra.mxu0 0.0
        %1176 = vmatprep.subr.mxu0 0.0
        %1177 = vmatpush1.xpose.msra.mxu0 0.0
        %1178 = vmatprep.subr.mxu0 0.0
        %1179 = vmatpush1.xpose.msra.mxu0 0.0
        %1180 = vmatprep.subr.mxu0 0.0
        %1181 = vmatpush1.xpose.msra.mxu0 0.0
        %1182 = vmatprep.subr.mxu0 0.0
        %1183 = vmatpush1.xpose.msra.mxu0 0.0
        %1184 = vmatprep.subr.mxu0 0.0
        %1185 = vmatpush1.xpose.msra.mxu0 0.0
        %1186 = vmatprep.subr.mxu0 0.0
        %1187 = vmatpush1.xpose.msra.mxu0 0.0
        %1188 = vmatprep.subr.mxu0 0.0
        %1189 = vmatpush1.xpose.msra.mxu0 0.0
        %1190 = vmatprep.subr.mxu0 0.0
        %1191 = vmatpush1.xpose.msra.mxu0 %v1158
        %1192 = vmatprep.subr.mxu0 0.0
        %1193 = vmatpush2.xpose.msra.mxu0 0.0
        %1194 = vmatprep.subr.mxu0 0.0
        %1195 = vmatpush2.xpose.msra.mxu0 0.0
        %1196 = vmatprep.subr.mxu0 0.0
        %1197 = vmatpush2.xpose.msra.mxu0 0.0
        %1198 = vmatprep.subr.mxu0 0.0
        %1199 = vmatpush2.xpose.msra.mxu0 0.0
        %1200 = vmatprep.subr.mxu0 0.0
        %1201 = vmatpush2.xpose.msra.mxu0 0.0
        %1202 = vmatprep.subr.mxu0 0.0
        %1203 = vmatpush2.xpose.msra.mxu0 0.0
        %1204 = vmatprep.subr.mxu0 0.0
        %1205 = vmatpush2.xpose.msra.mxu0 0.0
        %1206 = vmatprep.subr.mxu0 0.0
        %1207 = vmatpush2.xpose.msra.mxu0 0.0
        %1208 = vmatprep.subr.mxu0 0.0
        %1209 = vmatpush2.xpose.msra.mxu0 0.0
        %1210 = vmatprep.subr.mxu0 0.0
        %1211 = vmatpush2.xpose.msra.mxu0 0.0
        %1212 = vmatprep.subr.mxu0 0.0
        %1213 = vmatpush2.xpose.msra.mxu0 0.0
        %1214 = vmatprep.subr.mxu0 0.0
        %1215 = vmatpush2.xpose.msra.mxu0 0.0
        %1216 = vmatprep.subr.mxu0 0.0
        %1217 = vmatpush2.xpose.msra.mxu0 0.0
        %1218 = vmatprep.subr.mxu0 0.0
        %1219 = vmatpush2.xpose.msra.mxu0 0.0
        %1220 = vmatprep.subr.mxu0 0.0
        %1221 = vmatpush2.xpose.msra.mxu0 0.0
        %1222 = vmatprep.subr.mxu0 0.0
        %1223 = vmatpush2.xpose.msra.mxu0 0.0
        %1224 = vmatprep.mubr.f32.mxu0 0.0
        %1225 = vmatmul.mubr.f32.gmra.mxu0 %v1156
        %v1226 = vpop.f32.mrf.mxu0
        %v1227 = vadd.f32 0.0, %v1226
        %v1228 = vpop.f32.mrf.mxu0
        %1229 = vdwg.mxu0
        %1230 = vrot.lane.b32.xlu0 %v397, 120
        %v1231 = vpop.permute.xlu0 %1230
        %1232 = vrot.lane.b32.xlu0 %v486, 120
        %v1233 = vpop.permute.xlu0 %1232
        %v1234 = vsel %vm499, %v1231, 0
        %v1236 = vsel %vm499, %v1233, 0
        %1238 = vmatprep.subr.mxu0 0.0
        %1239 = vmatpush1.xpose.msra.mxu0 0.0
        %1240 = vmatprep.subr.mxu0 0.0
        %1241 = vmatpush1.xpose.msra.mxu0 0.0
        %1242 = vmatprep.subr.mxu0 0.0
        %1243 = vmatpush1.xpose.msra.mxu0 0.0
        %1244 = vmatprep.subr.mxu0 0.0
        %1245 = vmatpush1.xpose.msra.mxu0 0.0
        %1246 = vmatprep.subr.mxu0 0.0
        %1247 = vmatpush1.xpose.msra.mxu0 0.0
        %1248 = vmatprep.subr.mxu0 0.0
        %1249 = vmatpush1.xpose.msra.mxu0 0.0
        %1250 = vmatprep.subr.mxu0 0.0
        %1251 = vmatpush1.xpose.msra.mxu0 0.0
        %1252 = vmatprep.subr.mxu0 0.0
        %1253 = vmatpush1.xpose.msra.mxu0 0.0
        %1254 = vmatprep.subr.mxu0 0.0
        %1255 = vmatpush1.xpose.msra.mxu0 0.0
        %1256 = vmatprep.subr.mxu0 0.0
        %1257 = vmatpush1.xpose.msra.mxu0 0.0
        %1258 = vmatprep.subr.mxu0 0.0
        %1259 = vmatpush1.xpose.msra.mxu0 0.0
        %1260 = vmatprep.subr.mxu0 0.0
        %1261 = vmatpush1.xpose.msra.mxu0 0.0
        %1262 = vmatprep.subr.mxu0 0.0
        %1263 = vmatpush1.xpose.msra.mxu0 0.0
        %1264 = vmatprep.subr.mxu0 0.0
        %1265 = vmatpush1.xpose.msra.mxu0 0.0
        %1266 = vmatprep.subr.mxu0 0.0
        %1267 = vmatpush1.xpose.msra.mxu0 0.0
        %1268 = vmatprep.subr.mxu0 0.0
        %1269 = vmatpush1.xpose.msra.mxu0 %v1236
        %1270 = vmatprep.subr.mxu0 0.0
        %1271 = vmatpush2.xpose.msra.mxu0 0.0
        %1272 = vmatprep.subr.mxu0 0.0
        %1273 = vmatpush2.xpose.msra.mxu0 0.0
        %1274 = vmatprep.subr.mxu0 0.0
        %1275 = vmatpush2.xpose.msra.mxu0 0.0
        %1276 = vmatprep.subr.mxu0 0.0
        %1277 = vmatpush2.xpose.msra.mxu0 0.0
        %1278 = vmatprep.subr.mxu0 0.0
        %1279 = vmatpush2.xpose.msra.mxu0 0.0
        %1280 = vmatprep.subr.mxu0 0.0
        %1281 = vmatpush2.xpose.msra.mxu0 0.0
        %1282 = vmatprep.subr.mxu0 0.0
        %1283 = vmatpush2.xpose.msra.mxu0 0.0
        %1284 = vmatprep.subr.mxu0 0.0
        %1285 = vmatpush2.xpose.msra.mxu0 0.0
        %1286 = vmatprep.subr.mxu0 0.0
        %1287 = vmatpush2.xpose.msra.mxu0 0.0
        %1288 = vmatprep.subr.mxu0 0.0
        %1289 = vmatpush2.xpose.msra.mxu0 0.0
        %1290 = vmatprep.subr.mxu0 0.0
        %1291 = vmatpush2.xpose.msra.mxu0 0.0
        %1292 = vmatprep.subr.mxu0 0.0
        %1293 = vmatpush2.xpose.msra.mxu0 0.0
        %1294 = vmatprep.subr.mxu0 0.0
        %1295 = vmatpush2.xpose.msra.mxu0 0.0
        %1296 = vmatprep.subr.mxu0 0.0
        %1297 = vmatpush2.xpose.msra.mxu0 0.0
        %1298 = vmatprep.subr.mxu0 0.0
        %1299 = vmatpush2.xpose.msra.mxu0 0.0
        %1300 = vmatprep.subr.mxu0 0.0
        %1301 = vmatpush2.xpose.msra.mxu0 0.0
        %1302 = vmatprep.mubr.f32.mxu0 0.0
        %1303 = vmatmul.mubr.f32.gmra.mxu0 %v1234
        %v1304 = vpop.f32.mrf.mxu0
        %v1305 = vadd.f32 0.0, %v1304
        %v1306 = vpop.f32.mrf.mxu0
        %1307 = vdwg.mxu0
        %1308 = vrot.lane.b32.xlu0 %v398, 120
        %v1309 = vpop.permute.xlu0 %1308
        %1310 = vrot.lane.b32.xlu0 %v491, 120
        %v1311 = vpop.permute.xlu0 %1310
        %v1312 = vsel %vm499, %v1309, 0
        %v1314 = vsel %vm499, %v1311, 0
        %1316 = vmatprep.subr.mxu0 0.0
        %1317 = vmatpush1.xpose.msra.mxu0 0.0
        %1318 = vmatprep.subr.mxu0 0.0
        %1319 = vmatpush1.xpose.msra.mxu0 0.0
        %1320 = vmatprep.subr.mxu0 0.0
        %1321 = vmatpush1.xpose.msra.mxu0 0.0
        %1322 = vmatprep.subr.mxu0 0.0
        %1323 = vmatpush1.xpose.msra.mxu0 0.0
        %1324 = vmatprep.subr.mxu0 0.0
        %1325 = vmatpush1.xpose.msra.mxu0 0.0
        %1326 = vmatprep.subr.mxu0 0.0
        %1327 = vmatpush1.xpose.msra.mxu0 0.0
        %1328 = vmatprep.subr.mxu0 0.0
        %1329 = vmatpush1.xpose.msra.mxu0 0.0
        %1330 = vmatprep.subr.mxu0 0.0
        %1331 = vmatpush1.xpose.msra.mxu0 0.0
        %1332 = vmatprep.subr.mxu0 0.0
        %1333 = vmatpush1.xpose.msra.mxu0 0.0
        %1334 = vmatprep.subr.mxu0 0.0
        %1335 = vmatpush1.xpose.msra.mxu0 0.0
        %1336 = vmatprep.subr.mxu0 0.0
        %1337 = vmatpush1.xpose.msra.mxu0 0.0
        %1338 = vmatprep.subr.mxu0 0.0
        %1339 = vmatpush1.xpose.msra.mxu0 0.0
        %1340 = vmatprep.subr.mxu0 0.0
        %1341 = vmatpush1.xpose.msra.mxu0 0.0
        %1342 = vmatprep.subr.mxu0 0.0
        %1343 = vmatpush1.xpose.msra.mxu0 0.0
        %1344 = vmatprep.subr.mxu0 0.0
        %1345 = vmatpush1.xpose.msra.mxu0 0.0
        %1346 = vmatprep.subr.mxu0 0.0
        %1347 = vmatpush1.xpose.msra.mxu0 %v1314
        %1348 = vmatprep.subr.mxu0 0.0
        %1349 = vmatpush2.xpose.msra.mxu0 0.0
        %1350 = vmatprep.subr.mxu0 0.0
        %1351 = vmatpush2.xpose.msra.mxu0 0.0
        %1352 = vmatprep.subr.mxu0 0.0
        %1353 = vmatpush2.xpose.msra.mxu0 0.0
        %1354 = vmatprep.subr.mxu0 0.0
        %1355 = vmatpush2.xpose.msra.mxu0 0.0
        %1356 = vmatprep.subr.mxu0 0.0
        %1357 = vmatpush2.xpose.msra.mxu0 0.0
        %1358 = vmatprep.subr.mxu0 0.0
        %1359 = vmatpush2.xpose.msra.mxu0 0.0
        %1360 = vmatprep.subr.mxu0 0.0
        %1361 = vmatpush2.xpose.msra.mxu0 0.0
        %1362 = vmatprep.subr.mxu0 0.0
        %1363 = vmatpush2.xpose.msra.mxu0 0.0
        %1364 = vmatprep.subr.mxu0 0.0
        %1365 = vmatpush2.xpose.msra.mxu0 0.0
        %1366 = vmatprep.subr.mxu0 0.0
        %1367 = vmatpush2.xpose.msra.mxu0 0.0
        %1368 = vmatprep.subr.mxu0 0.0
        %1369 = vmatpush2.xpose.msra.mxu0 0.0
        %1370 = vmatprep.subr.mxu0 0.0
        %1371 = vmatpush2.xpose.msra.mxu0 0.0
        %1372 = vmatprep.subr.mxu0 0.0
        %1373 = vmatpush2.xpose.msra.mxu0 0.0
        %1374 = vmatprep.subr.mxu0 0.0
        %1375 = vmatpush2.xpose.msra.mxu0 0.0
        %1376 = vmatprep.subr.mxu0 0.0
        %1377 = vmatpush2.xpose.msra.mxu0 0.0
        %1378 = vmatprep.subr.mxu0 0.0
        %1379 = vmatpush2.xpose.msra.mxu0 0.0
        %1380 = vmatprep.mubr.f32.mxu0 0.0
        %1381 = vmatmul.mubr.f32.gmra.mxu0 %v1312
        %v1382 = vpop.f32.mrf.mxu0
        %v1383 = vadd.f32 0.0, %v1382
        %v1384 = vpop.f32.mrf.mxu0
        %1385 = vdwg.mxu0
        %1386 = vrot.lane.b32.xlu0 %v399, 120
        %v1387 = vpop.permute.xlu0 %1386
        %1388 = vrot.lane.b32.xlu0 %v496, 120
        %v1389 = vpop.permute.xlu0 %1388
        %v1390 = vsel %vm499, %v1387, 0
        %v1392 = vsel %vm499, %v1389, 0
        %1394 = vmatprep.subr.mxu0 0.0
        %1395 = vmatpush1.xpose.msra.mxu0 0.0
        %1396 = vmatprep.subr.mxu0 0.0
        %1397 = vmatpush1.xpose.msra.mxu0 0.0
        %1398 = vmatprep.subr.mxu0 0.0
        %1399 = vmatpush1.xpose.msra.mxu0 0.0
        %1400 = vmatprep.subr.mxu0 0.0
        %1401 = vmatpush1.xpose.msra.mxu0 0.0
        %1402 = vmatprep.subr.mxu0 0.0
        %1403 = vmatpush1.xpose.msra.mxu0 0.0
        %1404 = vmatprep.subr.mxu0 0.0
        %1405 = vmatpush1.xpose.msra.mxu0 0.0
        %1406 = vmatprep.subr.mxu0 0.0
        %1407 = vmatpush1.xpose.msra.mxu0 0.0
        %1408 = vmatprep.subr.mxu0 0.0
        %1409 = vmatpush1.xpose.msra.mxu0 0.0
        %1410 = vmatprep.subr.mxu0 0.0
        %1411 = vmatpush1.xpose.msra.mxu0 0.0
        %1412 = vmatprep.subr.mxu0 0.0
        %1413 = vmatpush1.xpose.msra.mxu0 0.0
        %1414 = vmatprep.subr.mxu0 0.0
        %1415 = vmatpush1.xpose.msra.mxu0 0.0
        %1416 = vmatprep.subr.mxu0 0.0
        %1417 = vmatpush1.xpose.msra.mxu0 0.0
        %1418 = vmatprep.subr.mxu0 0.0
        %1419 = vmatpush1.xpose.msra.mxu0 0.0
        %1420 = vmatprep.subr.mxu0 0.0
        %1421 = vmatpush1.xpose.msra.mxu0 0.0
        %1422 = vmatprep.subr.mxu0 0.0
        %1423 = vmatpush1.xpose.msra.mxu0 0.0
        %1424 = vmatprep.subr.mxu0 0.0
        %1425 = vmatpush1.xpose.msra.mxu0 %v1392
        %1426 = vmatprep.subr.mxu0 0.0
        %1427 = vmatpush2.xpose.msra.mxu0 0.0
        %1428 = vmatprep.subr.mxu0 0.0
        %1429 = vmatpush2.xpose.msra.mxu0 0.0
        %1430 = vmatprep.subr.mxu0 0.0
        %1431 = vmatpush2.xpose.msra.mxu0 0.0
        %1432 = vmatprep.subr.mxu0 0.0
        %1433 = vmatpush2.xpose.msra.mxu0 0.0
        %1434 = vmatprep.subr.mxu0 0.0
        %1435 = vmatpush2.xpose.msra.mxu0 0.0
        %1436 = vmatprep.subr.mxu0 0.0
        %1437 = vmatpush2.xpose.msra.mxu0 0.0
        %1438 = vmatprep.subr.mxu0 0.0
        %1439 = vmatpush2.xpose.msra.mxu0 0.0
        %1440 = vmatprep.subr.mxu0 0.0
        %1441 = vmatpush2.xpose.msra.mxu0 0.0
        %1442 = vmatprep.subr.mxu0 0.0
        %1443 = vmatpush2.xpose.msra.mxu0 0.0
        %1444 = vmatprep.subr.mxu0 0.0
        %1445 = vmatpush2.xpose.msra.mxu0 0.0
        %1446 = vmatprep.subr.mxu0 0.0
        %1447 = vmatpush2.xpose.msra.mxu0 0.0
        %1448 = vmatprep.subr.mxu0 0.0
        %1449 = vmatpush2.xpose.msra.mxu0 0.0
        %1450 = vmatprep.subr.mxu0 0.0
        %1451 = vmatpush2.xpose.msra.mxu0 0.0
        %1452 = vmatprep.subr.mxu0 0.0
        %1453 = vmatpush2.xpose.msra.mxu0 0.0
        %1454 = vmatprep.subr.mxu0 0.0
        %1455 = vmatpush2.xpose.msra.mxu0 0.0
        %1456 = vmatprep.subr.mxu0 0.0
        %1457 = vmatpush2.xpose.msra.mxu0 0.0
        %1458 = vmatprep.mubr.f32.mxu0 0.0
        %1459 = vmatmul.mubr.f32.gmra.mxu0 %v1390
        %v1460 = vpop.f32.mrf.mxu0
        %v1461 = vadd.f32 0.0, %v1460
        %v1462 = vpop.f32.mrf.mxu0
        %1463 = vdwg.mxu0
        %v1464 = vsel %vm499, %v1227, -inf
        %1465 = vmax.xlane.f32.xlu0 %v1464
        %v1466 = vpop.xlane.xlu0 %1465
        %v1467 = vsel %vm499, %v1305, -inf
        %1468 = vmax.xlane.f32.xlu0 %v1467
        %v1469 = vpop.xlane.xlu0 %1468
        %v1470 = vsel %vm499, %v1383, -inf
        %1471 = vmax.xlane.f32.xlu0 %v1470
        %v1472 = vpop.xlane.xlu0 %1471
        %v1473 = vsel %vm499, %v1461, -inf
        %1474 = vmax.xlane.f32.xlu0 %v1473
        %v1475 = vpop.xlane.xlu0 %1474
        %v1476 = vsub.f32 %v1227, %v1466
        %v1477 = vsub.f32 %v1305, %v1469
        %v1478 = vsub.f32 %v1383, %v1472
        %v1479 = vsub.f32 %v1461, %v1475
        %v1480 = vmul.f32 %v1476, 1.442695
        %v1481 = vpow.pop %v1480
        %v1482 = vmul.f32 %v1477, 1.442695
        %v1483 = vpow.pop %v1482
        %v1484 = vmul.f32 %v1478, 1.442695
        %v1485 = vpow.pop %v1484
        %v1486 = vmul.f32 %v1479, 1.442695
        %v1487 = vpow.pop %v1486
        %v1488 = vsel %vm499, %v1481, 0.0
        %1489 = vadd.xlane.f32.xlu0 %v1488
        %v1490 = vpop.xlane.xlu0 %1489
        %v1491 = vsel %vm499, %v1483, 0.0
        %1492 = vadd.xlane.f32.xlu0 %v1491
        %v1493 = vpop.xlane.xlu0 %1492
        %v1494 = vsel %vm499, %v1485, 0.0
        %1495 = vadd.xlane.f32.xlu0 %v1494
        %v1496 = vpop.xlane.xlu0 %1495
        %v1497 = vsel %vm499, %v1487, 0.0
        %1498 = vadd.xlane.f32.xlu0 %v1497
        %v1499 = vpop.xlane.xlu0 %1498
        %v1500 = vrcp.pop %v1490
        %v1501 = vrcp.pop %v1493
        %v1502 = vrcp.pop %v1496
        %v1503 = vrcp.pop %v1499
        %v1504 = vmul.f32 %v1481, %v1500
        %v1505 = vmul.f32 %v1483, %v1501
        %v1506 = vmul.f32 %v1485, %v1502
        %v1507 = vmul.f32 %v1487, %v1503
        %1508 = vrot.lane.b32.xlu0 %v481, 88
        %v1509 = vpop.permute.xlu0 %1508
        %v1512 = vsel %vm499, %v1504, 0
        %1514 = vmatprep.subr.mxu0 0.0
        %1515 = vmatpush1.msra.mxu0 0.0
        %1516 = vmatprep.subr.mxu0 0.0
        %1517 = vmatpush1.msra.mxu0 0.0
        %1518 = vmatprep.subr.mxu0 0.0
        %1519 = vmatpush1.msra.mxu0 0.0
        %1520 = vmatprep.subr.mxu0 0.0
        %1521 = vmatpush1.msra.mxu0 0.0
        %1522 = vmatprep.subr.mxu0 0.0
        %1523 = vmatpush1.msra.mxu0 0.0
        %1524 = vmatprep.subr.mxu0 0.0
        %1525 = vmatpush1.msra.mxu0 0.0
        %1526 = vmatprep.subr.mxu0 0.0
        %1527 = vmatpush1.msra.mxu0 0.0
        %1528 = vmatprep.subr.mxu0 0.0
        %1529 = vmatpush1.msra.mxu0 0.0
        %1530 = vmatprep.subr.mxu0 0.0
        %1531 = vmatpush1.msra.mxu0 0.0
        %1532 = vmatprep.subr.mxu0 0.0
        %1533 = vmatpush1.msra.mxu0 0.0
        %1534 = vmatprep.subr.mxu0 0.0
        %1535 = vmatpush1.msra.mxu0 0.0
        %1536 = vmatprep.subr.mxu0 0.0
        %1537 = vmatpush1.msra.mxu0 0.0
        %1538 = vmatprep.subr.mxu0 0.0
        %1539 = vmatpush1.msra.mxu0 0.0
        %1540 = vmatprep.subr.mxu0 0.0
        %1541 = vmatpush1.msra.mxu0 0.0
        %1542 = vmatprep.subr.mxu0 0.0
        %1543 = vmatpush1.msra.mxu0 0.0
        %1544 = vmatprep.subr.mxu0 0.0
        %1545 = vmatpush1.msra.mxu0 %v1509
        %1546 = vmatprep.subr.mxu0 0.0
        %1547 = vmatpush2.msra.mxu0 0.0
        %1548 = vmatprep.subr.mxu0 0.0
        %1549 = vmatpush2.msra.mxu0 0.0
        %1550 = vmatprep.subr.mxu0 0.0
        %1551 = vmatpush2.msra.mxu0 0.0
        %1552 = vmatprep.subr.mxu0 0.0
        %1553 = vmatpush2.msra.mxu0 0.0
        %1554 = vmatprep.subr.mxu0 0.0
        %1555 = vmatpush2.msra.mxu0 0.0
        %1556 = vmatprep.subr.mxu0 0.0
        %1557 = vmatpush2.msra.mxu0 0.0
        %1558 = vmatprep.subr.mxu0 0.0
        %1559 = vmatpush2.msra.mxu0 0.0
        %1560 = vmatprep.subr.mxu0 0.0
        %1561 = vmatpush2.msra.mxu0 0.0
        %1562 = vmatprep.subr.mxu0 0.0
        %1563 = vmatpush2.msra.mxu0 0.0
        %1564 = vmatprep.subr.mxu0 0.0
        %1565 = vmatpush2.msra.mxu0 0.0
        %1566 = vmatprep.subr.mxu0 0.0
        %1567 = vmatpush2.msra.mxu0 0.0
        %1568 = vmatprep.subr.mxu0 0.0
        %1569 = vmatpush2.msra.mxu0 0.0
        %1570 = vmatprep.subr.mxu0 0.0
        %1571 = vmatpush2.msra.mxu0 0.0
        %1572 = vmatprep.subr.mxu0 0.0
        %1573 = vmatpush2.msra.mxu0 0.0
        %1574 = vmatprep.subr.mxu0 0.0
        %1575 = vmatpush2.msra.mxu0 0.0
        %1576 = vmatprep.subr.mxu0 0.0
        %1577 = vmatpush2.msra.mxu0 0.0
        %1578 = vmatprep.mubr.f32.mxu0 0.0
        %1579 = vmatmul.mubr.f32.gmra.mxu0 %v1512
        %v1580 = vpop.f32.mrf.mxu0
        %v1581 = vadd.f32 0.0, %v1580
        %v1582 = vpop.f32.mrf.mxu0
        %1583 = vdwg.mxu0
        %1584 = vrot.lane.b32.xlu0 %v486, 88
        %v1585 = vpop.permute.xlu0 %1584
        %v1588 = vsel %vm499, %v1505, 0
        %1590 = vmatprep.subr.mxu0 0.0
        %1591 = vmatpush1.msra.mxu0 0.0
        %1592 = vmatprep.subr.mxu0 0.0
        %1593 = vmatpush1.msra.mxu0 0.0
        %1594 = vmatprep.subr.mxu0 0.0
        %1595 = vmatpush1.msra.mxu0 0.0
        %1596 = vmatprep.subr.mxu0 0.0
        %1597 = vmatpush1.msra.mxu0 0.0
        %1598 = vmatprep.subr.mxu0 0.0
        %1599 = vmatpush1.msra.mxu0 0.0
        %1600 = vmatprep.subr.mxu0 0.0
        %1601 = vmatpush1.msra.mxu0 0.0
        %1602 = vmatprep.subr.mxu0 0.0
        %1603 = vmatpush1.msra.mxu0 0.0
        %1604 = vmatprep.subr.mxu0 0.0
        %1605 = vmatpush1.msra.mxu0 0.0
        %1606 = vmatprep.subr.mxu0 0.0
        %1607 = vmatpush1.msra.mxu0 0.0
        %1608 = vmatprep.subr.mxu0 0.0
        %1609 = vmatpush1.msra.mxu0 0.0
        %1610 = vmatprep.subr.mxu0 0.0
        %1611 = vmatpush1.msra.mxu0 0.0
        %1612 = vmatprep.subr.mxu0 0.0
        %1613 = vmatpush1.msra.mxu0 0.0
        %1614 = vmatprep.subr.mxu0 0.0
        %1615 = vmatpush1.msra.mxu0 0.0
        %1616 = vmatprep.subr.mxu0 0.0
        %1617 = vmatpush1.msra.mxu0 0.0
        %1618 = vmatprep.subr.mxu0 0.0
        %1619 = vmatpush1.msra.mxu0 0.0
        %1620 = vmatprep.subr.mxu0 0.0
        %1621 = vmatpush1.msra.mxu0 %v1585
        %1622 = vmatprep.subr.mxu0 0.0
        %1623 = vmatpush2.msra.mxu0 0.0
        %1624 = vmatprep.subr.mxu0 0.0
        %1625 = vmatpush2.msra.mxu0 0.0
        %1626 = vmatprep.subr.mxu0 0.0
        %1627 = vmatpush2.msra.mxu0 0.0
        %1628 = vmatprep.subr.mxu0 0.0
        %1629 = vmatpush2.msra.mxu0 0.0
        %1630 = vmatprep.subr.mxu0 0.0
        %1631 = vmatpush2.msra.mxu0 0.0
        %1632 = vmatprep.subr.mxu0 0.0
        %1633 = vmatpush2.msra.mxu0 0.0
        %1634 = vmatprep.subr.mxu0 0.0
        %1635 = vmatpush2.msra.mxu0 0.0
        %1636 = vmatprep.subr.mxu0 0.0
        %1637 = vmatpush2.msra.mxu0 0.0
        %1638 = vmatprep.subr.mxu0 0.0
        %1639 = vmatpush2.msra.mxu0 0.0
        %1640 = vmatprep.subr.mxu0 0.0
        %1641 = vmatpush2.msra.mxu0 0.0
        %1642 = vmatprep.subr.mxu0 0.0
        %1643 = vmatpush2.msra.mxu0 0.0
        %1644 = vmatprep.subr.mxu0 0.0
        %1645 = vmatpush2.msra.mxu0 0.0
        %1646 = vmatprep.subr.mxu0 0.0
        %1647 = vmatpush2.msra.mxu0 0.0
        %1648 = vmatprep.subr.mxu0 0.0
        %1649 = vmatpush2.msra.mxu0 0.0
        %1650 = vmatprep.subr.mxu0 0.0
        %1651 = vmatpush2.msra.mxu0 0.0
        %1652 = vmatprep.subr.mxu0 0.0
        %1653 = vmatpush2.msra.mxu0 0.0
        %1654 = vmatprep.mubr.f32.mxu0 0.0
        %1655 = vmatmul.mubr.f32.gmra.mxu0 %v1588
        %v1656 = vpop.f32.mrf.mxu0
        %v1657 = vadd.f32 0.0, %v1656
        %v1658 = vpop.f32.mrf.mxu0
        %1659 = vdwg.mxu0
        %1660 = vrot.lane.b32.xlu0 %v491, 88
        %v1661 = vpop.permute.xlu0 %1660
        %v1664 = vsel %vm499, %v1506, 0
        %1666 = vmatprep.subr.mxu0 0.0
        %1667 = vmatpush1.msra.mxu0 0.0
        %1668 = vmatprep.subr.mxu0 0.0
        %1669 = vmatpush1.msra.mxu0 0.0
        %1670 = vmatprep.subr.mxu0 0.0
        %1671 = vmatpush1.msra.mxu0 0.0
        %1672 = vmatprep.subr.mxu0 0.0
        %1673 = vmatpush1.msra.mxu0 0.0
        %1674 = vmatprep.subr.mxu0 0.0
        %1675 = vmatpush1.msra.mxu0 0.0
        %1676 = vmatprep.subr.mxu0 0.0
        %1677 = vmatpush1.msra.mxu0 0.0
        %1678 = vmatprep.subr.mxu0 0.0
        %1679 = vmatpush1.msra.mxu0 0.0
        %1680 = vmatprep.subr.mxu0 0.0
        %1681 = vmatpush1.msra.mxu0 0.0
        %1682 = vmatprep.subr.mxu0 0.0
        %1683 = vmatpush1.msra.mxu0 0.0
        %1684 = vmatprep.subr.mxu0 0.0
        %1685 = vmatpush1.msra.mxu0 0.0
        %1686 = vmatprep.subr.mxu0 0.0
        %1687 = vmatpush1.msra.mxu0 0.0
        %1688 = vmatprep.subr.mxu0 0.0
        %1689 = vmatpush1.msra.mxu0 0.0
        %1690 = vmatprep.subr.mxu0 0.0
        %1691 = vmatpush1.msra.mxu0 0.0
        %1692 = vmatprep.subr.mxu0 0.0
        %1693 = vmatpush1.msra.mxu0 0.0
        %1694 = vmatprep.subr.mxu0 0.0
        %1695 = vmatpush1.msra.mxu0 0.0
        %1696 = vmatprep.subr.mxu0 0.0
        %1697 = vmatpush1.msra.mxu0 %v1661
        %1698 = vmatprep.subr.mxu0 0.0
        %1699 = vmatpush2.msra.mxu0 0.0
        %1700 = vmatprep.subr.mxu0 0.0
        %1701 = vmatpush2.msra.mxu0 0.0
        %1702 = vmatprep.subr.mxu0 0.0
        %1703 = vmatpush2.msra.mxu0 0.0
        %1704 = vmatprep.subr.mxu0 0.0
        %1705 = vmatpush2.msra.mxu0 0.0
        %1706 = vmatprep.subr.mxu0 0.0
        %1707 = vmatpush2.msra.mxu0 0.0
        %1708 = vmatprep.subr.mxu0 0.0
        %1709 = vmatpush2.msra.mxu0 0.0
        %1710 = vmatprep.subr.mxu0 0.0
        %1711 = vmatpush2.msra.mxu0 0.0
        %1712 = vmatprep.subr.mxu0 0.0
        %1713 = vmatpush2.msra.mxu0 0.0
        %1714 = vmatprep.subr.mxu0 0.0
        %1715 = vmatpush2.msra.mxu0 0.0
        %1716 = vmatprep.subr.mxu0 0.0
        %1717 = vmatpush2.msra.mxu0 0.0
        %1718 = vmatprep.subr.mxu0 0.0
        %1719 = vmatpush2.msra.mxu0 0.0
        %1720 = vmatprep.subr.mxu0 0.0
        %1721 = vmatpush2.msra.mxu0 0.0
        %1722 = vmatprep.subr.mxu0 0.0
        %1723 = vmatpush2.msra.mxu0 0.0
        %1724 = vmatprep.subr.mxu0 0.0
        %1725 = vmatpush2.msra.mxu0 0.0
        %1726 = vmatprep.subr.mxu0 0.0
        %1727 = vmatpush2.msra.mxu0 0.0
        %1728 = vmatprep.subr.mxu0 0.0
        %1729 = vmatpush2.msra.mxu0 0.0
        %1730 = vmatprep.mubr.f32.mxu0 0.0
        %1731 = vmatmul.mubr.f32.gmra.mxu0 %v1664
        %v1732 = vpop.f32.mrf.mxu0
        %v1733 = vadd.f32 0.0, %v1732
        %v1734 = vpop.f32.mrf.mxu0
        %1735 = vdwg.mxu0
        %1736 = vrot.lane.b32.xlu0 %v496, 88
        %v1737 = vpop.permute.xlu0 %1736
        %v1740 = vsel %vm499, %v1507, 0
        %1742 = vmatprep.subr.mxu0 0.0
        %1743 = vmatpush1.msra.mxu0 0.0
        %1744 = vmatprep.subr.mxu0 0.0
        %1745 = vmatpush1.msra.mxu0 0.0
        %1746 = vmatprep.subr.mxu0 0.0
        %1747 = vmatpush1.msra.mxu0 0.0
        %1748 = vmatprep.subr.mxu0 0.0
        %1749 = vmatpush1.msra.mxu0 0.0
        %1750 = vmatprep.subr.mxu0 0.0
        %1751 = vmatpush1.msra.mxu0 0.0
        %1752 = vmatprep.subr.mxu0 0.0
        %1753 = vmatpush1.msra.mxu0 0.0
        %1754 = vmatprep.subr.mxu0 0.0
        %1755 = vmatpush1.msra.mxu0 0.0
        %1756 = vmatprep.subr.mxu0 0.0
        %1757 = vmatpush1.msra.mxu0 0.0
        %1758 = vmatprep.subr.mxu0 0.0
        %1759 = vmatpush1.msra.mxu0 0.0
        %1760 = vmatprep.subr.mxu0 0.0
        %1761 = vmatpush1.msra.mxu0 0.0
        %1762 = vmatprep.subr.mxu0 0.0
        %1763 = vmatpush1.msra.mxu0 0.0
        %1764 = vmatprep.subr.mxu0 0.0
        %1765 = vmatpush1.msra.mxu0 0.0
        %1766 = vmatprep.subr.mxu0 0.0
        %1767 = vmatpush1.msra.mxu0 0.0
        %1768 = vmatprep.subr.mxu0 0.0
        %1769 = vmatpush1.msra.mxu0 0.0
        %1770 = vmatprep.subr.mxu0 0.0
        %1771 = vmatpush1.msra.mxu0 0.0
        %1772 = vmatprep.subr.mxu0 0.0
        %1773 = vmatpush1.msra.mxu0 %v1737
        %1774 = vmatprep.subr.mxu0 0.0
        %1775 = vmatpush2.msra.mxu0 0.0
        %1776 = vmatprep.subr.mxu0 0.0
        %1777 = vmatpush2.msra.mxu0 0.0
        %1778 = vmatprep.subr.mxu0 0.0
        %1779 = vmatpush2.msra.mxu0 0.0
        %1780 = vmatprep.subr.mxu0 0.0
        %1781 = vmatpush2.msra.mxu0 0.0
        %1782 = vmatprep.subr.mxu0 0.0
        %1783 = vmatpush2.msra.mxu0 0.0
        %1784 = vmatprep.subr.mxu0 0.0
        %1785 = vmatpush2.msra.mxu0 0.0
        %1786 = vmatprep.subr.mxu0 0.0
        %1787 = vmatpush2.msra.mxu0 0.0
        %1788 = vmatprep.subr.mxu0 0.0
        %1789 = vmatpush2.msra.mxu0 0.0
        %1790 = vmatprep.subr.mxu0 0.0
        %1791 = vmatpush2.msra.mxu0 0.0
        %1792 = vmatprep.subr.mxu0 0.0
        %1793 = vmatpush2.msra.mxu0 0.0
        %1794 = vmatprep.subr.mxu0 0.0
        %1795 = vmatpush2.msra.mxu0 0.0
        %1796 = vmatprep.subr.mxu0 0.0
        %1797 = vmatpush2.msra.mxu0 0.0
        %1798 = vmatprep.subr.mxu0 0.0
        %1799 = vmatpush2.msra.mxu0 0.0
        %1800 = vmatprep.subr.mxu0 0.0
        %1801 = vmatpush2.msra.mxu0 0.0
        %1802 = vmatprep.subr.mxu0 0.0
        %1803 = vmatpush2.msra.mxu0 0.0
        %1804 = vmatprep.subr.mxu0 0.0
        %1805 = vmatpush2.msra.mxu0 0.0
        %1806 = vmatprep.mubr.f32.mxu0 0.0
        %1807 = vmatmul.mubr.f32.gmra.mxu0 %v1740
        %v1808 = vpop.f32.mrf.mxu0
        %v1809 = vadd.f32 0.0, %v1808
        %v1810 = vpop.f32.mrf.mxu0
        %1811 = vdwg.mxu0
        %1812 = vrot.lane.b32.xlu0 %v396, 112
        %v1813 = vpop.permute.xlu0 %1812
        %1814 = vrot.lane.b32.xlu0 %v481, 112
        %v1815 = vpop.permute.xlu0 %1814
        %v1816 = vsel %vm499, %v1813, 0
        %v1818 = vsel %vm499, %v1815, 0
        %1820 = vmatprep.subr.mxu0 0.0
        %1821 = vmatpush1.xpose.msra.mxu0 0.0
        %1822 = vmatprep.subr.mxu0 0.0
        %1823 = vmatpush1.xpose.msra.mxu0 0.0
        %1824 = vmatprep.subr.mxu0 0.0
        %1825 = vmatpush1.xpose.msra.mxu0 0.0
        %1826 = vmatprep.subr.mxu0 0.0
        %1827 = vmatpush1.xpose.msra.mxu0 0.0
        %1828 = vmatprep.subr.mxu0 0.0
        %1829 = vmatpush1.xpose.msra.mxu0 0.0
        %1830 = vmatprep.subr.mxu0 0.0
        %1831 = vmatpush1.xpose.msra.mxu0 0.0
        %1832 = vmatprep.subr.mxu0 0.0
        %1833 = vmatpush1.xpose.msra.mxu0 0.0
        %1834 = vmatprep.subr.mxu0 0.0
        %1835 = vmatpush1.xpose.msra.mxu0 0.0
        %1836 = vmatprep.subr.mxu0 0.0
        %1837 = vmatpush1.xpose.msra.mxu0 0.0
        %1838 = vmatprep.subr.mxu0 0.0
        %1839 = vmatpush1.xpose.msra.mxu0 0.0
        %1840 = vmatprep.subr.mxu0 0.0
        %1841 = vmatpush1.xpose.msra.mxu0 0.0
        %1842 = vmatprep.subr.mxu0 0.0
        %1843 = vmatpush1.xpose.msra.mxu0 0.0
        %1844 = vmatprep.subr.mxu0 0.0
        %1845 = vmatpush1.xpose.msra.mxu0 0.0
        %1846 = vmatprep.subr.mxu0 0.0
        %1847 = vmatpush1.xpose.msra.mxu0 0.0
        %1848 = vmatprep.subr.mxu0 0.0
        %1849 = vmatpush1.xpose.msra.mxu0 0.0
        %1850 = vmatprep.subr.mxu0 0.0
        %1851 = vmatpush1.xpose.msra.mxu0 %v1818
        %1852 = vmatprep.subr.mxu0 0.0
        %1853 = vmatpush2.xpose.msra.mxu0 0.0
        %1854 = vmatprep.subr.mxu0 0.0
        %1855 = vmatpush2.xpose.msra.mxu0 0.0
        %1856 = vmatprep.subr.mxu0 0.0
        %1857 = vmatpush2.xpose.msra.mxu0 0.0
        %1858 = vmatprep.subr.mxu0 0.0
        %1859 = vmatpush2.xpose.msra.mxu0 0.0
        %1860 = vmatprep.subr.mxu0 0.0
        %1861 = vmatpush2.xpose.msra.mxu0 0.0
        %1862 = vmatprep.subr.mxu0 0.0
        %1863 = vmatpush2.xpose.msra.mxu0 0.0
        %1864 = vmatprep.subr.mxu0 0.0
        %1865 = vmatpush2.xpose.msra.mxu0 0.0
        %1866 = vmatprep.subr.mxu0 0.0
        %1867 = vmatpush2.xpose.msra.mxu0 0.0
        %1868 = vmatprep.subr.mxu0 0.0
        %1869 = vmatpush2.xpose.msra.mxu0 0.0
        %1870 = vmatprep.subr.mxu0 0.0
        %1871 = vmatpush2.xpose.msra.mxu0 0.0
        %1872 = vmatprep.subr.mxu0 0.0
        %1873 = vmatpush2.xpose.msra.mxu0 0.0
        %1874 = vmatprep.subr.mxu0 0.0
        %1875 = vmatpush2.xpose.msra.mxu0 0.0
        %1876 = vmatprep.subr.mxu0 0.0
        %1877 = vmatpush2.xpose.msra.mxu0 0.0
        %1878 = vmatprep.subr.mxu0 0.0
        %1879 = vmatpush2.xpose.msra.mxu0 0.0
        %1880 = vmatprep.subr.mxu0 0.0
        %1881 = vmatpush2.xpose.msra.mxu0 0.0
        %1882 = vmatprep.subr.mxu0 0.0
        %1883 = vmatpush2.xpose.msra.mxu0 0.0
        %1884 = vmatprep.mubr.f32.mxu0 0.0
        %1885 = vmatmul.mubr.f32.gmra.mxu0 %v1816
        %v1886 = vpop.f32.mrf.mxu0
        %v1887 = vadd.f32 0.0, %v1886
        %v1888 = vpop.f32.mrf.mxu0
        %1889 = vdwg.mxu0
        %1890 = vrot.lane.b32.xlu0 %v397, 112
        %v1891 = vpop.permute.xlu0 %1890
        %1892 = vrot.lane.b32.xlu0 %v486, 112
        %v1893 = vpop.permute.xlu0 %1892
        %v1894 = vsel %vm499, %v1891, 0
        %v1896 = vsel %vm499, %v1893, 0
        %1898 = vmatprep.subr.mxu0 0.0
        %1899 = vmatpush1.xpose.msra.mxu0 0.0
        %1900 = vmatprep.subr.mxu0 0.0
        %1901 = vmatpush1.xpose.msra.mxu0 0.0
        %1902 = vmatprep.subr.mxu0 0.0
        %1903 = vmatpush1.xpose.msra.mxu0 0.0
        %1904 = vmatprep.subr.mxu0 0.0
        %1905 = vmatpush1.xpose.msra.mxu0 0.0
        %1906 = vmatprep.subr.mxu0 0.0
        %1907 = vmatpush1.xpose.msra.mxu0 0.0
        %1908 = vmatprep.subr.mxu0 0.0
        %1909 = vmatpush1.xpose.msra.mxu0 0.0
        %1910 = vmatprep.subr.mxu0 0.0
        %1911 = vmatpush1.xpose.msra.mxu0 0.0
        %1912 = vmatprep.subr.mxu0 0.0
        %1913 = vmatpush1.xpose.msra.mxu0 0.0
        %1914 = vmatprep.subr.mxu0 0.0
        %1915 = vmatpush1.xpose.msra.mxu0 0.0
        %1916 = vmatprep.subr.mxu0 0.0
        %1917 = vmatpush1.xpose.msra.mxu0 0.0
        %1918 = vmatprep.subr.mxu0 0.0
        %1919 = vmatpush1.xpose.msra.mxu0 0.0
        %1920 = vmatprep.subr.mxu0 0.0
        %1921 = vmatpush1.xpose.msra.mxu0 0.0
        %1922 = vmatprep.subr.mxu0 0.0
        %1923 = vmatpush1.xpose.msra.mxu0 0.0
        %1924 = vmatprep.subr.mxu0 0.0
        %1925 = vmatpush1.xpose.msra.mxu0 0.0
        %1926 = vmatprep.subr.mxu0 0.0
        %1927 = vmatpush1.xpose.msra.mxu0 0.0
        %1928 = vmatprep.subr.mxu0 0.0
        %1929 = vmatpush1.xpose.msra.mxu0 %v1896
        %1930 = vmatprep.subr.mxu0 0.0
        %1931 = vmatpush2.xpose.msra.mxu0 0.0
        %1932 = vmatprep.subr.mxu0 0.0
        %1933 = vmatpush2.xpose.msra.mxu0 0.0
        %1934 = vmatprep.subr.mxu0 0.0
        %1935 = vmatpush2.xpose.msra.mxu0 0.0
        %1936 = vmatprep.subr.mxu0 0.0
        %1937 = vmatpush2.xpose.msra.mxu0 0.0
        %1938 = vmatprep.subr.mxu0 0.0
        %1939 = vmatpush2.xpose.msra.mxu0 0.0
        %1940 = vmatprep.subr.mxu0 0.0
        %1941 = vmatpush2.xpose.msra.mxu0 0.0
        %1942 = vmatprep.subr.mxu0 0.0
        %1943 = vmatpush2.xpose.msra.mxu0 0.0
        %1944 = vmatprep.subr.mxu0 0.0
        %1945 = vmatpush2.xpose.msra.mxu0 0.0
        %1946 = vmatprep.subr.mxu0 0.0
        %1947 = vmatpush2.xpose.msra.mxu0 0.0
        %1948 = vmatprep.subr.mxu0 0.0
        %1949 = vmatpush2.xpose.msra.mxu0 0.0
        %1950 = vmatprep.subr.mxu0 0.0
        %1951 = vmatpush2.xpose.msra.mxu0 0.0
        %1952 = vmatprep.subr.mxu0 0.0
        %1953 = vmatpush2.xpose.msra.mxu0 0.0
        %1954 = vmatprep.subr.mxu0 0.0
        %1955 = vmatpush2.xpose.msra.mxu0 0.0
        %1956 = vmatprep.subr.mxu0 0.0
        %1957 = vmatpush2.xpose.msra.mxu0 0.0
        %1958 = vmatprep.subr.mxu0 0.0
        %1959 = vmatpush2.xpose.msra.mxu0 0.0
        %1960 = vmatprep.subr.mxu0 0.0
        %1961 = vmatpush2.xpose.msra.mxu0 0.0
        %1962 = vmatprep.mubr.f32.mxu0 0.0
        %1963 = vmatmul.mubr.f32.gmra.mxu0 %v1894
        %v1964 = vpop.f32.mrf.mxu0
        %v1965 = vadd.f32 0.0, %v1964
        %v1966 = vpop.f32.mrf.mxu0
        %1967 = vdwg.mxu0
        %1968 = vrot.lane.b32.xlu0 %v398, 112
        %v1969 = vpop.permute.xlu0 %1968
        %1970 = vrot.lane.b32.xlu0 %v491, 112
        %v1971 = vpop.permute.xlu0 %1970
        %v1972 = vsel %vm499, %v1969, 0
        %v1974 = vsel %vm499, %v1971, 0
        %1976 = vmatprep.subr.mxu0 0.0
        %1977 = vmatpush1.xpose.msra.mxu0 0.0
        %1978 = vmatprep.subr.mxu0 0.0
        %1979 = vmatpush1.xpose.msra.mxu0 0.0
        %1980 = vmatprep.subr.mxu0 0.0
        %1981 = vmatpush1.xpose.msra.mxu0 0.0
        %1982 = vmatprep.subr.mxu0 0.0
        %1983 = vmatpush1.xpose.msra.mxu0 0.0
        %1984 = vmatprep.subr.mxu0 0.0
        %1985 = vmatpush1.xpose.msra.mxu0 0.0
        %1986 = vmatprep.subr.mxu0 0.0
        %1987 = vmatpush1.xpose.msra.mxu0 0.0
        %1988 = vmatprep.subr.mxu0 0.0
        %1989 = vmatpush1.xpose.msra.mxu0 0.0
        %1990 = vmatprep.subr.mxu0 0.0
        %1991 = vmatpush1.xpose.msra.mxu0 0.0
        %1992 = vmatprep.subr.mxu0 0.0
        %1993 = vmatpush1.xpose.msra.mxu0 0.0
        %1994 = vmatprep.subr.mxu0 0.0
        %1995 = vmatpush1.xpose.msra.mxu0 0.0
        %1996 = vmatprep.subr.mxu0 0.0
        %1997 = vmatpush1.xpose.msra.mxu0 0.0
        %1998 = vmatprep.subr.mxu0 0.0
        %1999 = vmatpush1.xpose.msra.mxu0 0.0
        %2000 = vmatprep.subr.mxu0 0.0
        %2001 = vmatpush1.xpose.msra.mxu0 0.0
        %2002 = vmatprep.subr.mxu0 0.0
        %2003 = vmatpush1.xpose.msra.mxu0 0.0
        %2004 = vmatprep.subr.mxu0 0.0
        %2005 = vmatpush1.xpose.msra.mxu0 0.0
        %2006 = vmatprep.subr.mxu0 0.0
        %2007 = vmatpush1.xpose.msra.mxu0 %v1974
        %2008 = vmatprep.subr.mxu0 0.0
        %2009 = vmatpush2.xpose.msra.mxu0 0.0
        %2010 = vmatprep.subr.mxu0 0.0
        %2011 = vmatpush2.xpose.msra.mxu0 0.0
        %2012 = vmatprep.subr.mxu0 0.0
        %2013 = vmatpush2.xpose.msra.mxu0 0.0
        %2014 = vmatprep.subr.mxu0 0.0
        %2015 = vmatpush2.xpose.msra.mxu0 0.0
        %2016 = vmatprep.subr.mxu0 0.0
        %2017 = vmatpush2.xpose.msra.mxu0 0.0
        %2018 = vmatprep.subr.mxu0 0.0
        %2019 = vmatpush2.xpose.msra.mxu0 0.0
        %2020 = vmatprep.subr.mxu0 0.0
        %2021 = vmatpush2.xpose.msra.mxu0 0.0
        %2022 = vmatprep.subr.mxu0 0.0
        %2023 = vmatpush2.xpose.msra.mxu0 0.0
        %2024 = vmatprep.subr.mxu0 0.0
        %2025 = vmatpush2.xpose.msra.mxu0 0.0
        %2026 = vmatprep.subr.mxu0 0.0
        %2027 = vmatpush2.xpose.msra.mxu0 0.0
        %2028 = vmatprep.subr.mxu0 0.0
        %2029 = vmatpush2.xpose.msra.mxu0 0.0
        %2030 = vmatprep.subr.mxu0 0.0
        %2031 = vmatpush2.xpose.msra.mxu0 0.0
        %2032 = vmatprep.subr.mxu0 0.0
        %2033 = vmatpush2.xpose.msra.mxu0 0.0
        %2034 = vmatprep.subr.mxu0 0.0
        %2035 = vmatpush2.xpose.msra.mxu0 0.0
        %2036 = vmatprep.subr.mxu0 0.0
        %2037 = vmatpush2.xpose.msra.mxu0 0.0
        %2038 = vmatprep.subr.mxu0 0.0
        %2039 = vmatpush2.xpose.msra.mxu0 0.0
        %2040 = vmatprep.mubr.f32.mxu0 0.0
        %2041 = vmatmul.mubr.f32.gmra.mxu0 %v1972
        %v2042 = vpop.f32.mrf.mxu0
        %v2043 = vadd.f32 0.0, %v2042
        %v2044 = vpop.f32.mrf.mxu0
        %2045 = vdwg.mxu0
        %2046 = vrot.lane.b32.xlu0 %v399, 112
        %v2047 = vpop.permute.xlu0 %2046
        %2048 = vrot.lane.b32.xlu0 %v496, 112
        %v2049 = vpop.permute.xlu0 %2048
        %v2050 = vsel %vm499, %v2047, 0
        %v2052 = vsel %vm499, %v2049, 0
        %2054 = vmatprep.subr.mxu0 0.0
        %2055 = vmatpush1.xpose.msra.mxu0 0.0
        %2056 = vmatprep.subr.mxu0 0.0
        %2057 = vmatpush1.xpose.msra.mxu0 0.0
        %2058 = vmatprep.subr.mxu0 0.0
        %2059 = vmatpush1.xpose.msra.mxu0 0.0
        %2060 = vmatprep.subr.mxu0 0.0
        %2061 = vmatpush1.xpose.msra.mxu0 0.0
        %2062 = vmatprep.subr.mxu0 0.0
        %2063 = vmatpush1.xpose.msra.mxu0 0.0
        %2064 = vmatprep.subr.mxu0 0.0
        %2065 = vmatpush1.xpose.msra.mxu0 0.0
        %2066 = vmatprep.subr.mxu0 0.0
        %2067 = vmatpush1.xpose.msra.mxu0 0.0
        %2068 = vmatprep.subr.mxu0 0.0
        %2069 = vmatpush1.xpose.msra.mxu0 0.0
        %2070 = vmatprep.subr.mxu0 0.0
        %2071 = vmatpush1.xpose.msra.mxu0 0.0
        %2072 = vmatprep.subr.mxu0 0.0
        %2073 = vmatpush1.xpose.msra.mxu0 0.0
        %2074 = vmatprep.subr.mxu0 0.0
        %2075 = vmatpush1.xpose.msra.mxu0 0.0
        %2076 = vmatprep.subr.mxu0 0.0
        %2077 = vmatpush1.xpose.msra.mxu0 0.0
        %2078 = vmatprep.subr.mxu0 0.0
        %2079 = vmatpush1.xpose.msra.mxu0 0.0
        %2080 = vmatprep.subr.mxu0 0.0
        %2081 = vmatpush1.xpose.msra.mxu0 0.0
        %2082 = vmatprep.subr.mxu0 0.0
        %2083 = vmatpush1.xpose.msra.mxu0 0.0
        %2084 = vmatprep.subr.mxu0 0.0
        %2085 = vmatpush1.xpose.msra.mxu0 %v2052
        %2086 = vmatprep.subr.mxu0 0.0
        %2087 = vmatpush2.xpose.msra.mxu0 0.0
        %2088 = vmatprep.subr.mxu0 0.0
        %2089 = vmatpush2.xpose.msra.mxu0 0.0
        %2090 = vmatprep.subr.mxu0 0.0
        %2091 = vmatpush2.xpose.msra.mxu0 0.0
        %2092 = vmatprep.subr.mxu0 0.0
        %2093 = vmatpush2.xpose.msra.mxu0 0.0
        %2094 = vmatprep.subr.mxu0 0.0
        %2095 = vmatpush2.xpose.msra.mxu0 0.0
        %2096 = vmatprep.subr.mxu0 0.0
        %2097 = vmatpush2.xpose.msra.mxu0 0.0
        %2098 = vmatprep.subr.mxu0 0.0
        %2099 = vmatpush2.xpose.msra.mxu0 0.0
        %2100 = vmatprep.subr.mxu0 0.0
        %2101 = vmatpush2.xpose.msra.mxu0 0.0
        %2102 = vmatprep.subr.mxu0 0.0
        %2103 = vmatpush2.xpose.msra.mxu0 0.0
        %2104 = vmatprep.subr.mxu0 0.0
        %2105 = vmatpush2.xpose.msra.mxu0 0.0
        %2106 = vmatprep.subr.mxu0 0.0
        %2107 = vmatpush2.xpose.msra.mxu0 0.0
        %2108 = vmatprep.subr.mxu0 0.0
        %2109 = vmatpush2.xpose.msra.mxu0 0.0
        %2110 = vmatprep.subr.mxu0 0.0
        %2111 = vmatpush2.xpose.msra.mxu0 0.0
        %2112 = vmatprep.subr.mxu0 0.0
        %2113 = vmatpush2.xpose.msra.mxu0 0.0
        %2114 = vmatprep.subr.mxu0 0.0
        %2115 = vmatpush2.xpose.msra.mxu0 0.0
        %2116 = vmatprep.subr.mxu0 0.0
        %2117 = vmatpush2.xpose.msra.mxu0 0.0
        %2118 = vmatprep.mubr.f32.mxu0 0.0
        %2119 = vmatmul.mubr.f32.gmra.mxu0 %v2050
        %v2120 = vpop.f32.mrf.mxu0
        %v2121 = vadd.f32 0.0, %v2120
        %v2122 = vpop.f32.mrf.mxu0
        %2123 = vdwg.mxu0
        %v2124 = vsel %vm499, %v1887, -inf
        %2125 = vmax.xlane.f32.xlu0 %v2124
        %v2126 = vpop.xlane.xlu0 %2125
        %v2127 = vsel %vm499, %v1965, -inf
        %2128 = vmax.xlane.f32.xlu0 %v2127
        %v2129 = vpop.xlane.xlu0 %2128
        %v2130 = vsel %vm499, %v2043, -inf
        %2131 = vmax.xlane.f32.xlu0 %v2130
        %v2132 = vpop.xlane.xlu0 %2131
        %v2133 = vsel %vm499, %v2121, -inf
        %2134 = vmax.xlane.f32.xlu0 %v2133
        %v2135 = vpop.xlane.xlu0 %2134
        %v2136 = vsub.f32 %v1887, %v2126
        %v2137 = vsub.f32 %v1965, %v2129
        %v2138 = vsub.f32 %v2043, %v2132
        %v2139 = vsub.f32 %v2121, %v2135
        %v2140 = vmul.f32 %v2136, 1.442695
        %v2141 = vpow.pop %v2140
        %v2142 = vmul.f32 %v2137, 1.442695
        %v2143 = vpow.pop %v2142
        %v2144 = vmul.f32 %v2138, 1.442695
        %v2145 = vpow.pop %v2144
        %v2146 = vmul.f32 %v2139, 1.442695
        %v2147 = vpow.pop %v2146
        %v2148 = vsel %vm499, %v2141, 0.0
        %2149 = vadd.xlane.f32.xlu0 %v2148
        %v2150 = vpop.xlane.xlu0 %2149
        %v2151 = vsel %vm499, %v2143, 0.0
        %2152 = vadd.xlane.f32.xlu0 %v2151
        %v2153 = vpop.xlane.xlu0 %2152
        %v2154 = vsel %vm499, %v2145, 0.0
        %2155 = vadd.xlane.f32.xlu0 %v2154
        %v2156 = vpop.xlane.xlu0 %2155
        %v2157 = vsel %vm499, %v2147, 0.0
        %2158 = vadd.xlane.f32.xlu0 %v2157
        %v2159 = vpop.xlane.xlu0 %2158
        %v2160 = vrcp.pop %v2150
        %v2161 = vrcp.pop %v2153
        %v2162 = vrcp.pop %v2156
        %v2163 = vrcp.pop %v2159
        %v2164 = vmul.f32 %v2141, %v2160
        %v2165 = vmul.f32 %v2143, %v2161
        %v2166 = vmul.f32 %v2145, %v2162
        %v2167 = vmul.f32 %v2147, %v2163
        %2168 = vrot.lane.b32.xlu0 %v481, 80
        %v2169 = vpop.permute.xlu0 %2168
        %v2172 = vsel %vm499, %v2164, 0
        %2174 = vmatprep.subr.mxu0 0.0
        %2175 = vmatpush1.msra.mxu0 0.0
        %2176 = vmatprep.subr.mxu0 0.0
        %2177 = vmatpush1.msra.mxu0 0.0
        %2178 = vmatprep.subr.mxu0 0.0
        %2179 = vmatpush1.msra.mxu0 0.0
        %2180 = vmatprep.subr.mxu0 0.0
        %2181 = vmatpush1.msra.mxu0 0.0
        %2182 = vmatprep.subr.mxu0 0.0
        %2183 = vmatpush1.msra.mxu0 0.0
        %2184 = vmatprep.subr.mxu0 0.0
        %2185 = vmatpush1.msra.mxu0 0.0
        %2186 = vmatprep.subr.mxu0 0.0
        %2187 = vmatpush1.msra.mxu0 0.0
        %2188 = vmatprep.subr.mxu0 0.0
        %2189 = vmatpush1.msra.mxu0 0.0
        %2190 = vmatprep.subr.mxu0 0.0
        %2191 = vmatpush1.msra.mxu0 0.0
        %2192 = vmatprep.subr.mxu0 0.0
        %2193 = vmatpush1.msra.mxu0 0.0
        %2194 = vmatprep.subr.mxu0 0.0
        %2195 = vmatpush1.msra.mxu0 0.0
        %2196 = vmatprep.subr.mxu0 0.0
        %2197 = vmatpush1.msra.mxu0 0.0
        %2198 = vmatprep.subr.mxu0 0.0
        %2199 = vmatpush1.msra.mxu0 0.0
        %2200 = vmatprep.subr.mxu0 0.0
        %2201 = vmatpush1.msra.mxu0 0.0
        %2202 = vmatprep.subr.mxu0 0.0
        %2203 = vmatpush1.msra.mxu0 0.0
        %2204 = vmatprep.subr.mxu0 0.0
        %2205 = vmatpush1.msra.mxu0 %v2169
        %2206 = vmatprep.subr.mxu0 0.0
        %2207 = vmatpush2.msra.mxu0 0.0
        %2208 = vmatprep.subr.mxu0 0.0
        %2209 = vmatpush2.msra.mxu0 0.0
        %2210 = vmatprep.subr.mxu0 0.0
        %2211 = vmatpush2.msra.mxu0 0.0
        %2212 = vmatprep.subr.mxu0 0.0
        %2213 = vmatpush2.msra.mxu0 0.0
        %2214 = vmatprep.subr.mxu0 0.0
        %2215 = vmatpush2.msra.mxu0 0.0
        %2216 = vmatprep.subr.mxu0 0.0
        %2217 = vmatpush2.msra.mxu0 0.0
        %2218 = vmatprep.subr.mxu0 0.0
        %2219 = vmatpush2.msra.mxu0 0.0
        %2220 = vmatprep.subr.mxu0 0.0
        %2221 = vmatpush2.msra.mxu0 0.0
        %2222 = vmatprep.subr.mxu0 0.0
        %2223 = vmatpush2.msra.mxu0 0.0
        %2224 = vmatprep.subr.mxu0 0.0
        %2225 = vmatpush2.msra.mxu0 0.0
        %2226 = vmatprep.subr.mxu0 0.0
        %2227 = vmatpush2.msra.mxu0 0.0
        %2228 = vmatprep.subr.mxu0 0.0
        %2229 = vmatpush2.msra.mxu0 0.0
        %2230 = vmatprep.subr.mxu0 0.0
        %2231 = vmatpush2.msra.mxu0 0.0
        %2232 = vmatprep.subr.mxu0 0.0
        %2233 = vmatpush2.msra.mxu0 0.0
        %2234 = vmatprep.subr.mxu0 0.0
        %2235 = vmatpush2.msra.mxu0 0.0
        %2236 = vmatprep.subr.mxu0 0.0
        %2237 = vmatpush2.msra.mxu0 0.0
        %2238 = vmatprep.mubr.f32.mxu0 0.0
        %2239 = vmatmul.mubr.f32.gmra.mxu0 %v2172
        %v2240 = vpop.f32.mrf.mxu0
        %v2241 = vadd.f32 0.0, %v2240
        %v2242 = vpop.f32.mrf.mxu0
        %2243 = vdwg.mxu0
        %2244 = vrot.lane.b32.xlu0 %v486, 80
        %v2245 = vpop.permute.xlu0 %2244
        %v2248 = vsel %vm499, %v2165, 0
        %2250 = vmatprep.subr.mxu0 0.0
        %2251 = vmatpush1.msra.mxu0 0.0
        %2252 = vmatprep.subr.mxu0 0.0
        %2253 = vmatpush1.msra.mxu0 0.0
        %2254 = vmatprep.subr.mxu0 0.0
        %2255 = vmatpush1.msra.mxu0 0.0
        %2256 = vmatprep.subr.mxu0 0.0
        %2257 = vmatpush1.msra.mxu0 0.0
        %2258 = vmatprep.subr.mxu0 0.0
        %2259 = vmatpush1.msra.mxu0 0.0
        %2260 = vmatprep.subr.mxu0 0.0
        %2261 = vmatpush1.msra.mxu0 0.0
        %2262 = vmatprep.subr.mxu0 0.0
        %2263 = vmatpush1.msra.mxu0 0.0
        %2264 = vmatprep.subr.mxu0 0.0
        %2265 = vmatpush1.msra.mxu0 0.0
        %2266 = vmatprep.subr.mxu0 0.0
        %2267 = vmatpush1.msra.mxu0 0.0
        %2268 = vmatprep.subr.mxu0 0.0
        %2269 = vmatpush1.msra.mxu0 0.0
        %2270 = vmatprep.subr.mxu0 0.0
        %2271 = vmatpush1.msra.mxu0 0.0
        %2272 = vmatprep.subr.mxu0 0.0
        %2273 = vmatpush1.msra.mxu0 0.0
        %2274 = vmatprep.subr.mxu0 0.0
        %2275 = vmatpush1.msra.mxu0 0.0
        %2276 = vmatprep.subr.mxu0 0.0
        %2277 = vmatpush1.msra.mxu0 0.0
        %2278 = vmatprep.subr.mxu0 0.0
        %2279 = vmatpush1.msra.mxu0 0.0
        %2280 = vmatprep.subr.mxu0 0.0
        %2281 = vmatpush1.msra.mxu0 %v2245
        %2282 = vmatprep.subr.mxu0 0.0
        %2283 = vmatpush2.msra.mxu0 0.0
        %2284 = vmatprep.subr.mxu0 0.0
        %2285 = vmatpush2.msra.mxu0 0.0
        %2286 = vmatprep.subr.mxu0 0.0
        %2287 = vmatpush2.msra.mxu0 0.0
        %2288 = vmatprep.subr.mxu0 0.0
        %2289 = vmatpush2.msra.mxu0 0.0
        %2290 = vmatprep.subr.mxu0 0.0
        %2291 = vmatpush2.msra.mxu0 0.0
        %2292 = vmatprep.subr.mxu0 0.0
        %2293 = vmatpush2.msra.mxu0 0.0
        %2294 = vmatprep.subr.mxu0 0.0
        %2295 = vmatpush2.msra.mxu0 0.0
        %2296 = vmatprep.subr.mxu0 0.0
        %2297 = vmatpush2.msra.mxu0 0.0
        %2298 = vmatprep.subr.mxu0 0.0
        %2299 = vmatpush2.msra.mxu0 0.0
        %2300 = vmatprep.subr.mxu0 0.0
        %2301 = vmatpush2.msra.mxu0 0.0
        %2302 = vmatprep.subr.mxu0 0.0
        %2303 = vmatpush2.msra.mxu0 0.0
        %2304 = vmatprep.subr.mxu0 0.0
        %2305 = vmatpush2.msra.mxu0 0.0
        %2306 = vmatprep.subr.mxu0 0.0
        %2307 = vmatpush2.msra.mxu0 0.0
        %2308 = vmatprep.subr.mxu0 0.0
        %2309 = vmatpush2.msra.mxu0 0.0
        %2310 = vmatprep.subr.mxu0 0.0
        %2311 = vmatpush2.msra.mxu0 0.0
        %2312 = vmatprep.subr.mxu0 0.0
        %2313 = vmatpush2.msra.mxu0 0.0
        %2314 = vmatprep.mubr.f32.mxu0 0.0
        %2315 = vmatmul.mubr.f32.gmra.mxu0 %v2248
        %v2316 = vpop.f32.mrf.mxu0
        %v2317 = vadd.f32 0.0, %v2316
        %v2318 = vpop.f32.mrf.mxu0
        %2319 = vdwg.mxu0
        %2320 = vrot.lane.b32.xlu0 %v491, 80
        %v2321 = vpop.permute.xlu0 %2320
        %v2324 = vsel %vm499, %v2166, 0
        %2326 = vmatprep.subr.mxu0 0.0
        %2327 = vmatpush1.msra.mxu0 0.0
        %2328 = vmatprep.subr.mxu0 0.0
        %2329 = vmatpush1.msra.mxu0 0.0
        %2330 = vmatprep.subr.mxu0 0.0
        %2331 = vmatpush1.msra.mxu0 0.0
        %2332 = vmatprep.subr.mxu0 0.0
        %2333 = vmatpush1.msra.mxu0 0.0
        %2334 = vmatprep.subr.mxu0 0.0
        %2335 = vmatpush1.msra.mxu0 0.0
        %2336 = vmatprep.subr.mxu0 0.0
        %2337 = vmatpush1.msra.mxu0 0.0
        %2338 = vmatprep.subr.mxu0 0.0
        %2339 = vmatpush1.msra.mxu0 0.0
        %2340 = vmatprep.subr.mxu0 0.0
        %2341 = vmatpush1.msra.mxu0 0.0
        %2342 = vmatprep.subr.mxu0 0.0
        %2343 = vmatpush1.msra.mxu0 0.0
        %2344 = vmatprep.subr.mxu0 0.0
        %2345 = vmatpush1.msra.mxu0 0.0
        %2346 = vmatprep.subr.mxu0 0.0
        %2347 = vmatpush1.msra.mxu0 0.0
        %2348 = vmatprep.subr.mxu0 0.0
        %2349 = vmatpush1.msra.mxu0 0.0
        %2350 = vmatprep.subr.mxu0 0.0
        %2351 = vmatpush1.msra.mxu0 0.0
        %2352 = vmatprep.subr.mxu0 0.0
        %2353 = vmatpush1.msra.mxu0 0.0
        %2354 = vmatprep.subr.mxu0 0.0
        %2355 = vmatpush1.msra.mxu0 0.0
        %2356 = vmatprep.subr.mxu0 0.0
        %2357 = vmatpush1.msra.mxu0 %v2321
        %2358 = vmatprep.subr.mxu0 0.0
        %2359 = vmatpush2.msra.mxu0 0.0
        %2360 = vmatprep.subr.mxu0 0.0
        %2361 = vmatpush2.msra.mxu0 0.0
        %2362 = vmatprep.subr.mxu0 0.0
        %2363 = vmatpush2.msra.mxu0 0.0
        %2364 = vmatprep.subr.mxu0 0.0
        %2365 = vmatpush2.msra.mxu0 0.0
        %2366 = vmatprep.subr.mxu0 0.0
        %2367 = vmatpush2.msra.mxu0 0.0
        %2368 = vmatprep.subr.mxu0 0.0
        %2369 = vmatpush2.msra.mxu0 0.0
        %2370 = vmatprep.subr.mxu0 0.0
        %2371 = vmatpush2.msra.mxu0 0.0
        %2372 = vmatprep.subr.mxu0 0.0
        %2373 = vmatpush2.msra.mxu0 0.0
        %2374 = vmatprep.subr.mxu0 0.0
        %2375 = vmatpush2.msra.mxu0 0.0
        %2376 = vmatprep.subr.mxu0 0.0
        %2377 = vmatpush2.msra.mxu0 0.0
        %2378 = vmatprep.subr.mxu0 0.0
        %2379 = vmatpush2.msra.mxu0 0.0
        %2380 = vmatprep.subr.mxu0 0.0
        %2381 = vmatpush2.msra.mxu0 0.0
        %2382 = vmatprep.subr.mxu0 0.0
        %2383 = vmatpush2.msra.mxu0 0.0
        %2384 = vmatprep.subr.mxu0 0.0
        %2385 = vmatpush2.msra.mxu0 0.0
        %2386 = vmatprep.subr.mxu0 0.0
        %2387 = vmatpush2.msra.mxu0 0.0
        %2388 = vmatprep.subr.mxu0 0.0
        %2389 = vmatpush2.msra.mxu0 0.0
        %2390 = vmatprep.mubr.f32.mxu0 0.0
        %2391 = vmatmul.mubr.f32.gmra.mxu0 %v2324
        %v2392 = vpop.f32.mrf.mxu0
        %v2393 = vadd.f32 0.0, %v2392
        %v2394 = vpop.f32.mrf.mxu0
        %2395 = vdwg.mxu0
        %2396 = vrot.lane.b32.xlu0 %v496, 80
        %v2397 = vpop.permute.xlu0 %2396
        %v2400 = vsel %vm499, %v2167, 0
        %2402 = vmatprep.subr.mxu0 0.0
        %2403 = vmatpush1.msra.mxu0 0.0
        %2404 = vmatprep.subr.mxu0 0.0
        %2405 = vmatpush1.msra.mxu0 0.0
        %2406 = vmatprep.subr.mxu0 0.0
        %2407 = vmatpush1.msra.mxu0 0.0
        %2408 = vmatprep.subr.mxu0 0.0
        %2409 = vmatpush1.msra.mxu0 0.0
        %2410 = vmatprep.subr.mxu0 0.0
        %2411 = vmatpush1.msra.mxu0 0.0
        %2412 = vmatprep.subr.mxu0 0.0
        %2413 = vmatpush1.msra.mxu0 0.0
        %2414 = vmatprep.subr.mxu0 0.0
        %2415 = vmatpush1.msra.mxu0 0.0
        %2416 = vmatprep.subr.mxu0 0.0
        %2417 = vmatpush1.msra.mxu0 0.0
        %2418 = vmatprep.subr.mxu0 0.0
        %2419 = vmatpush1.msra.mxu0 0.0
        %2420 = vmatprep.subr.mxu0 0.0
        %2421 = vmatpush1.msra.mxu0 0.0
        %2422 = vmatprep.subr.mxu0 0.0
        %2423 = vmatpush1.msra.mxu0 0.0
        %2424 = vmatprep.subr.mxu0 0.0
        %2425 = vmatpush1.msra.mxu0 0.0
        %2426 = vmatprep.subr.mxu0 0.0
        %2427 = vmatpush1.msra.mxu0 0.0
        %2428 = vmatprep.subr.mxu0 0.0
        %2429 = vmatpush1.msra.mxu0 0.0
        %2430 = vmatprep.subr.mxu0 0.0
        %2431 = vmatpush1.msra.mxu0 0.0
        %2432 = vmatprep.subr.mxu0 0.0
        %2433 = vmatpush1.msra.mxu0 %v2397
        %2434 = vmatprep.subr.mxu0 0.0
        %2435 = vmatpush2.msra.mxu0 0.0
        %2436 = vmatprep.subr.mxu0 0.0
        %2437 = vmatpush2.msra.mxu0 0.0
        %2438 = vmatprep.subr.mxu0 0.0
        %2439 = vmatpush2.msra.mxu0 0.0
        %2440 = vmatprep.subr.mxu0 0.0
        %2441 = vmatpush2.msra.mxu0 0.0
        %2442 = vmatprep.subr.mxu0 0.0
        %2443 = vmatpush2.msra.mxu0 0.0
        %2444 = vmatprep.subr.mxu0 0.0
        %2445 = vmatpush2.msra.mxu0 0.0
        %2446 = vmatprep.subr.mxu0 0.0
        %2447 = vmatpush2.msra.mxu0 0.0
        %2448 = vmatprep.subr.mxu0 0.0
        %2449 = vmatpush2.msra.mxu0 0.0
        %2450 = vmatprep.subr.mxu0 0.0
        %2451 = vmatpush2.msra.mxu0 0.0
        %2452 = vmatprep.subr.mxu0 0.0
        %2453 = vmatpush2.msra.mxu0 0.0
        %2454 = vmatprep.subr.mxu0 0.0
        %2455 = vmatpush2.msra.mxu0 0.0
        %2456 = vmatprep.subr.mxu0 0.0
        %2457 = vmatpush2.msra.mxu0 0.0
        %2458 = vmatprep.subr.mxu0 0.0
        %2459 = vmatpush2.msra.mxu0 0.0
        %2460 = vmatprep.subr.mxu0 0.0
        %2461 = vmatpush2.msra.mxu0 0.0
        %2462 = vmatprep.subr.mxu0 0.0
        %2463 = vmatpush2.msra.mxu0 0.0
        %2464 = vmatprep.subr.mxu0 0.0
        %2465 = vmatpush2.msra.mxu0 0.0
        %2466 = vmatprep.mubr.f32.mxu0 0.0
        %2467 = vmatmul.mubr.f32.gmra.mxu0 %v2400
        %v2468 = vpop.f32.mrf.mxu0
        %v2469 = vadd.f32 0.0, %v2468
        %v2470 = vpop.f32.mrf.mxu0
        %2471 = vdwg.mxu0
        %2472 = vrot.lane.b32.xlu0 %v396, 104
        %v2473 = vpop.permute.xlu0 %2472
        %2474 = vrot.lane.b32.xlu0 %v481, 104
        %v2475 = vpop.permute.xlu0 %2474
        %v2476 = vsel %vm499, %v2473, 0
        %v2478 = vsel %vm499, %v2475, 0
        %2480 = vmatprep.subr.mxu0 0.0
        %2481 = vmatpush1.xpose.msra.mxu0 0.0
        %2482 = vmatprep.subr.mxu0 0.0
        %2483 = vmatpush1.xpose.msra.mxu0 0.0
        %2484 = vmatprep.subr.mxu0 0.0
        %2485 = vmatpush1.xpose.msra.mxu0 0.0
        %2486 = vmatprep.subr.mxu0 0.0
        %2487 = vmatpush1.xpose.msra.mxu0 0.0
        %2488 = vmatprep.subr.mxu0 0.0
        %2489 = vmatpush1.xpose.msra.mxu0 0.0
        %2490 = vmatprep.subr.mxu0 0.0
        %2491 = vmatpush1.xpose.msra.mxu0 0.0
        %2492 = vmatprep.subr.mxu0 0.0
        %2493 = vmatpush1.xpose.msra.mxu0 0.0
        %2494 = vmatprep.subr.mxu0 0.0
        %2495 = vmatpush1.xpose.msra.mxu0 0.0
        %2496 = vmatprep.subr.mxu0 0.0
        %2497 = vmatpush1.xpose.msra.mxu0 0.0
        %2498 = vmatprep.subr.mxu0 0.0
        %2499 = vmatpush1.xpose.msra.mxu0 0.0
        %2500 = vmatprep.subr.mxu0 0.0
        %2501 = vmatpush1.xpose.msra.mxu0 0.0
        %2502 = vmatprep.subr.mxu0 0.0
        %2503 = vmatpush1.xpose.msra.mxu0 0.0
        %2504 = vmatprep.subr.mxu0 0.0
        %2505 = vmatpush1.xpose.msra.mxu0 0.0
        %2506 = vmatprep.subr.mxu0 0.0
        %2507 = vmatpush1.xpose.msra.mxu0 0.0
        %2508 = vmatprep.subr.mxu0 0.0
        %2509 = vmatpush1.xpose.msra.mxu0 0.0
        %2510 = vmatprep.subr.mxu0 0.0
        %2511 = vmatpush1.xpose.msra.mxu0 %v2478
        %2512 = vmatprep.subr.mxu0 0.0
        %2513 = vmatpush2.xpose.msra.mxu0 0.0
        %2514 = vmatprep.subr.mxu0 0.0
        %2515 = vmatpush2.xpose.msra.mxu0 0.0
        %2516 = vmatprep.subr.mxu0 0.0
        %2517 = vmatpush2.xpose.msra.mxu0 0.0
        %2518 = vmatprep.subr.mxu0 0.0
        %2519 = vmatpush2.xpose.msra.mxu0 0.0
        %2520 = vmatprep.subr.mxu0 0.0
        %2521 = vmatpush2.xpose.msra.mxu0 0.0
        %2522 = vmatprep.subr.mxu0 0.0
        %2523 = vmatpush2.xpose.msra.mxu0 0.0
        %2524 = vmatprep.subr.mxu0 0.0
        %2525 = vmatpush2.xpose.msra.mxu0 0.0
        %2526 = vmatprep.subr.mxu0 0.0
        %2527 = vmatpush2.xpose.msra.mxu0 0.0
        %2528 = vmatprep.subr.mxu0 0.0
        %2529 = vmatpush2.xpose.msra.mxu0 0.0
        %2530 = vmatprep.subr.mxu0 0.0
        %2531 = vmatpush2.xpose.msra.mxu0 0.0
        %2532 = vmatprep.subr.mxu0 0.0
        %2533 = vmatpush2.xpose.msra.mxu0 0.0
        %2534 = vmatprep.subr.mxu0 0.0
        %2535 = vmatpush2.xpose.msra.mxu0 0.0
        %2536 = vmatprep.subr.mxu0 0.0
        %2537 = vmatpush2.xpose.msra.mxu0 0.0
        %2538 = vmatprep.subr.mxu0 0.0
        %2539 = vmatpush2.xpose.msra.mxu0 0.0
        %2540 = vmatprep.subr.mxu0 0.0
        %2541 = vmatpush2.xpose.msra.mxu0 0.0
        %2542 = vmatprep.subr.mxu0 0.0
        %2543 = vmatpush2.xpose.msra.mxu0 0.0
        %2544 = vmatprep.mubr.f32.mxu0 0.0
        %2545 = vmatmul.mubr.f32.gmra.mxu0 %v2476
        %v2546 = vpop.f32.mrf.mxu0
        %v2547 = vadd.f32 0.0, %v2546
        %v2548 = vpop.f32.mrf.mxu0
        %2549 = vdwg.mxu0
        %2550 = vrot.lane.b32.xlu0 %v397, 104
        %v2551 = vpop.permute.xlu0 %2550
        %2552 = vrot.lane.b32.xlu0 %v486, 104
        %v2553 = vpop.permute.xlu0 %2552
        %v2554 = vsel %vm499, %v2551, 0
        %v2556 = vsel %vm499, %v2553, 0
        %2558 = vmatprep.subr.mxu0 0.0
        %2559 = vmatpush1.xpose.msra.mxu0 0.0
        %2560 = vmatprep.subr.mxu0 0.0
        %2561 = vmatpush1.xpose.msra.mxu0 0.0
        %2562 = vmatprep.subr.mxu0 0.0
        %2563 = vmatpush1.xpose.msra.mxu0 0.0
        %2564 = vmatprep.subr.mxu0 0.0
        %2565 = vmatpush1.xpose.msra.mxu0 0.0
        %2566 = vmatprep.subr.mxu0 0.0
        %2567 = vmatpush1.xpose.msra.mxu0 0.0
        %2568 = vmatprep.subr.mxu0 0.0
        %2569 = vmatpush1.xpose.msra.mxu0 0.0
        %2570 = vmatprep.subr.mxu0 0.0
        %2571 = vmatpush1.xpose.msra.mxu0 0.0
        %2572 = vmatprep.subr.mxu0 0.0
        %2573 = vmatpush1.xpose.msra.mxu0 0.0
        %2574 = vmatprep.subr.mxu0 0.0
        %2575 = vmatpush1.xpose.msra.mxu0 0.0
        %2576 = vmatprep.subr.mxu0 0.0
        %2577 = vmatpush1.xpose.msra.mxu0 0.0
        %2578 = vmatprep.subr.mxu0 0.0
        %2579 = vmatpush1.xpose.msra.mxu0 0.0
        %2580 = vmatprep.subr.mxu0 0.0
        %2581 = vmatpush1.xpose.msra.mxu0 0.0
        %2582 = vmatprep.subr.mxu0 0.0
        %2583 = vmatpush1.xpose.msra.mxu0 0.0
        %2584 = vmatprep.subr.mxu0 0.0
        %2585 = vmatpush1.xpose.msra.mxu0 0.0
        %2586 = vmatprep.subr.mxu0 0.0
        %2587 = vmatpush1.xpose.msra.mxu0 0.0
        %2588 = vmatprep.subr.mxu0 0.0
        %2589 = vmatpush1.xpose.msra.mxu0 %v2556
        %2590 = vmatprep.subr.mxu0 0.0
        %2591 = vmatpush2.xpose.msra.mxu0 0.0
        %2592 = vmatprep.subr.mxu0 0.0
        %2593 = vmatpush2.xpose.msra.mxu0 0.0
        %2594 = vmatprep.subr.mxu0 0.0
        %2595 = vmatpush2.xpose.msra.mxu0 0.0
        %2596 = vmatprep.subr.mxu0 0.0
        %2597 = vmatpush2.xpose.msra.mxu0 0.0
        %2598 = vmatprep.subr.mxu0 0.0
        %2599 = vmatpush2.xpose.msra.mxu0 0.0
        %2600 = vmatprep.subr.mxu0 0.0
        %2601 = vmatpush2.xpose.msra.mxu0 0.0
        %2602 = vmatprep.subr.mxu0 0.0
        %2603 = vmatpush2.xpose.msra.mxu0 0.0
        %2604 = vmatprep.subr.mxu0 0.0
        %2605 = vmatpush2.xpose.msra.mxu0 0.0
        %2606 = vmatprep.subr.mxu0 0.0
        %2607 = vmatpush2.xpose.msra.mxu0 0.0
        %2608 = vmatprep.subr.mxu0 0.0
        %2609 = vmatpush2.xpose.msra.mxu0 0.0
        %2610 = vmatprep.subr.mxu0 0.0
        %2611 = vmatpush2.xpose.msra.mxu0 0.0
        %2612 = vmatprep.subr.mxu0 0.0
        %2613 = vmatpush2.xpose.msra.mxu0 0.0
        %2614 = vmatprep.subr.mxu0 0.0
        %2615 = vmatpush2.xpose.msra.mxu0 0.0
        %2616 = vmatprep.subr.mxu0 0.0
        %2617 = vmatpush2.xpose.msra.mxu0 0.0
        %2618 = vmatprep.subr.mxu0 0.0
        %2619 = vmatpush2.xpose.msra.mxu0 0.0
        %2620 = vmatprep.subr.mxu0 0.0
        %2621 = vmatpush2.xpose.msra.mxu0 0.0
        %2622 = vmatprep.mubr.f32.mxu0 0.0
        %2623 = vmatmul.mubr.f32.gmra.mxu0 %v2554
        %v2624 = vpop.f32.mrf.mxu0
        %v2625 = vadd.f32 0.0, %v2624
        %v2626 = vpop.f32.mrf.mxu0
        %2627 = vdwg.mxu0
        %2628 = vrot.lane.b32.xlu0 %v398, 104
        %v2629 = vpop.permute.xlu0 %2628
        %2630 = vrot.lane.b32.xlu0 %v491, 104
        %v2631 = vpop.permute.xlu0 %2630
        %v2632 = vsel %vm499, %v2629, 0
        %v2634 = vsel %vm499, %v2631, 0
        %2636 = vmatprep.subr.mxu0 0.0
        %2637 = vmatpush1.xpose.msra.mxu0 0.0
        %2638 = vmatprep.subr.mxu0 0.0
        %2639 = vmatpush1.xpose.msra.mxu0 0.0
        %2640 = vmatprep.subr.mxu0 0.0
        %2641 = vmatpush1.xpose.msra.mxu0 0.0
        %2642 = vmatprep.subr.mxu0 0.0
        %2643 = vmatpush1.xpose.msra.mxu0 0.0
        %2644 = vmatprep.subr.mxu0 0.0
        %2645 = vmatpush1.xpose.msra.mxu0 0.0
        %2646 = vmatprep.subr.mxu0 0.0
        %2647 = vmatpush1.xpose.msra.mxu0 0.0
        %2648 = vmatprep.subr.mxu0 0.0
        %2649 = vmatpush1.xpose.msra.mxu0 0.0
        %2650 = vmatprep.subr.mxu0 0.0
        %2651 = vmatpush1.xpose.msra.mxu0 0.0
        %2652 = vmatprep.subr.mxu0 0.0
        %2653 = vmatpush1.xpose.msra.mxu0 0.0
        %2654 = vmatprep.subr.mxu0 0.0
        %2655 = vmatpush1.xpose.msra.mxu0 0.0
        %2656 = vmatprep.subr.mxu0 0.0
        %2657 = vmatpush1.xpose.msra.mxu0 0.0
        %2658 = vmatprep.subr.mxu0 0.0
        %2659 = vmatpush1.xpose.msra.mxu0 0.0
        %2660 = vmatprep.subr.mxu0 0.0
        %2661 = vmatpush1.xpose.msra.mxu0 0.0
        %2662 = vmatprep.subr.mxu0 0.0
        %2663 = vmatpush1.xpose.msra.mxu0 0.0
        %2664 = vmatprep.subr.mxu0 0.0
        %2665 = vmatpush1.xpose.msra.mxu0 0.0
        %2666 = vmatprep.subr.mxu0 0.0
        %2667 = vmatpush1.xpose.msra.mxu0 %v2634
        %2668 = vmatprep.subr.mxu0 0.0
        %2669 = vmatpush2.xpose.msra.mxu0 0.0
        %2670 = vmatprep.subr.mxu0 0.0
        %2671 = vmatpush2.xpose.msra.mxu0 0.0
        %2672 = vmatprep.subr.mxu0 0.0
        %2673 = vmatpush2.xpose.msra.mxu0 0.0
        %2674 = vmatprep.subr.mxu0 0.0
        %2675 = vmatpush2.xpose.msra.mxu0 0.0
        %2676 = vmatprep.subr.mxu0 0.0
        %2677 = vmatpush2.xpose.msra.mxu0 0.0
        %2678 = vmatprep.subr.mxu0 0.0
        %2679 = vmatpush2.xpose.msra.mxu0 0.0
        %2680 = vmatprep.subr.mxu0 0.0
        %2681 = vmatpush2.xpose.msra.mxu0 0.0
        %2682 = vmatprep.subr.mxu0 0.0
        %2683 = vmatpush2.xpose.msra.mxu0 0.0
        %2684 = vmatprep.subr.mxu0 0.0
        %2685 = vmatpush2.xpose.msra.mxu0 0.0
        %2686 = vmatprep.subr.mxu0 0.0
        %2687 = vmatpush2.xpose.msra.mxu0 0.0
        %2688 = vmatprep.subr.mxu0 0.0
        %2689 = vmatpush2.xpose.msra.mxu0 0.0
        %2690 = vmatprep.subr.mxu0 0.0
        %2691 = vmatpush2.xpose.msra.mxu0 0.0
        %2692 = vmatprep.subr.mxu0 0.0
        %2693 = vmatpush2.xpose.msra.mxu0 0.0
        %2694 = vmatprep.subr.mxu0 0.0
        %2695 = vmatpush2.xpose.msra.mxu0 0.0
        %2696 = vmatprep.subr.mxu0 0.0
        %2697 = vmatpush2.xpose.msra.mxu0 0.0
        %2698 = vmatprep.subr.mxu0 0.0
        %2699 = vmatpush2.xpose.msra.mxu0 0.0
        %2700 = vmatprep.mubr.f32.mxu0 0.0
        %2701 = vmatmul.mubr.f32.gmra.mxu0 %v2632
        %v2702 = vpop.f32.mrf.mxu0
        %v2703 = vadd.f32 0.0, %v2702
        %v2704 = vpop.f32.mrf.mxu0
        %2705 = vdwg.mxu0
        %2706 = vrot.lane.b32.xlu0 %v399, 104
        %v2707 = vpop.permute.xlu0 %2706
        %2708 = vrot.lane.b32.xlu0 %v496, 104
        %v2709 = vpop.permute.xlu0 %2708
        %v2710 = vsel %vm499, %v2707, 0
        %v2712 = vsel %vm499, %v2709, 0
        %2714 = vmatprep.subr.mxu0 0.0
        %2715 = vmatpush1.xpose.msra.mxu0 0.0
        %2716 = vmatprep.subr.mxu0 0.0
        %2717 = vmatpush1.xpose.msra.mxu0 0.0
        %2718 = vmatprep.subr.mxu0 0.0
        %2719 = vmatpush1.xpose.msra.mxu0 0.0
        %2720 = vmatprep.subr.mxu0 0.0
        %2721 = vmatpush1.xpose.msra.mxu0 0.0
        %2722 = vmatprep.subr.mxu0 0.0
        %2723 = vmatpush1.xpose.msra.mxu0 0.0
        %2724 = vmatprep.subr.mxu0 0.0
        %2725 = vmatpush1.xpose.msra.mxu0 0.0
        %2726 = vmatprep.subr.mxu0 0.0
        %2727 = vmatpush1.xpose.msra.mxu0 0.0
        %2728 = vmatprep.subr.mxu0 0.0
        %2729 = vmatpush1.xpose.msra.mxu0 0.0
        %2730 = vmatprep.subr.mxu0 0.0
        %2731 = vmatpush1.xpose.msra.mxu0 0.0
        %2732 = vmatprep.subr.mxu0 0.0
        %2733 = vmatpush1.xpose.msra.mxu0 0.0
        %2734 = vmatprep.subr.mxu0 0.0
        %2735 = vmatpush1.xpose.msra.mxu0 0.0
        %2736 = vmatprep.subr.mxu0 0.0
        %2737 = vmatpush1.xpose.msra.mxu0 0.0
        %2738 = vmatprep.subr.mxu0 0.0
        %2739 = vmatpush1.xpose.msra.mxu0 0.0
        %2740 = vmatprep.subr.mxu0 0.0
        %2741 = vmatpush1.xpose.msra.mxu0 0.0
        %2742 = vmatprep.subr.mxu0 0.0
        %2743 = vmatpush1.xpose.msra.mxu0 0.0
        %2744 = vmatprep.subr.mxu0 0.0
        %2745 = vmatpush1.xpose.msra.mxu0 %v2712
        %2746 = vmatprep.subr.mxu0 0.0
        %2747 = vmatpush2.xpose.msra.mxu0 0.0
        %2748 = vmatprep.subr.mxu0 0.0
        %2749 = vmatpush2.xpose.msra.mxu0 0.0
        %2750 = vmatprep.subr.mxu0 0.0
        %2751 = vmatpush2.xpose.msra.mxu0 0.0
        %2752 = vmatprep.subr.mxu0 0.0
        %2753 = vmatpush2.xpose.msra.mxu0 0.0
        %2754 = vmatprep.subr.mxu0 0.0
        %2755 = vmatpush2.xpose.msra.mxu0 0.0
        %2756 = vmatprep.subr.mxu0 0.0
        %2757 = vmatpush2.xpose.msra.mxu0 0.0
        %2758 = vmatprep.subr.mxu0 0.0
        %2759 = vmatpush2.xpose.msra.mxu0 0.0
        %2760 = vmatprep.subr.mxu0 0.0
        %2761 = vmatpush2.xpose.msra.mxu0 0.0
        %2762 = vmatprep.subr.mxu0 0.0
        %2763 = vmatpush2.xpose.msra.mxu0 0.0
        %2764 = vmatprep.subr.mxu0 0.0
        %2765 = vmatpush2.xpose.msra.mxu0 0.0
        %2766 = vmatprep.subr.mxu0 0.0
        %2767 = vmatpush2.xpose.msra.mxu0 0.0
        %2768 = vmatprep.subr.mxu0 0.0
        %2769 = vmatpush2.xpose.msra.mxu0 0.0
        %2770 = vmatprep.subr.mxu0 0.0
        %2771 = vmatpush2.xpose.msra.mxu0 0.0
        %2772 = vmatprep.subr.mxu0 0.0
        %2773 = vmatpush2.xpose.msra.mxu0 0.0
        %2774 = vmatprep.subr.mxu0 0.0
        %2775 = vmatpush2.xpose.msra.mxu0 0.0
        %2776 = vmatprep.subr.mxu0 0.0
        %2777 = vmatpush2.xpose.msra.mxu0 0.0
        %2778 = vmatprep.mubr.f32.mxu0 0.0
        %2779 = vmatmul.mubr.f32.gmra.mxu0 %v2710
        %v2780 = vpop.f32.mrf.mxu0
        %v2781 = vadd.f32 0.0, %v2780
        %v2782 = vpop.f32.mrf.mxu0
        %2783 = vdwg.mxu0
        %v2784 = vsel %vm499, %v2547, -inf
        %2785 = vmax.xlane.f32.xlu0 %v2784
        %v2786 = vpop.xlane.xlu0 %2785
        %v2787 = vsel %vm499, %v2625, -inf
        %2788 = vmax.xlane.f32.xlu0 %v2787
        %v2789 = vpop.xlane.xlu0 %2788
        %v2790 = vsel %vm499, %v2703, -inf
        %2791 = vmax.xlane.f32.xlu0 %v2790
        %v2792 = vpop.xlane.xlu0 %2791
        %v2793 = vsel %vm499, %v2781, -inf
        %2794 = vmax.xlane.f32.xlu0 %v2793
        %v2795 = vpop.xlane.xlu0 %2794
        %v2796 = vsub.f32 %v2547, %v2786
        %v2797 = vsub.f32 %v2625, %v2789
        %v2798 = vsub.f32 %v2703, %v2792
        %v2799 = vsub.f32 %v2781, %v2795
        %v2800 = vmul.f32 %v2796, 1.442695
        %v2801 = vpow.pop %v2800
        %v2802 = vmul.f32 %v2797, 1.442695
        %v2803 = vpow.pop %v2802
        %v2804 = vmul.f32 %v2798, 1.442695
        %v2805 = vpow.pop %v2804
        %v2806 = vmul.f32 %v2799, 1.442695
        %v2807 = vpow.pop %v2806
        %v2808 = vsel %vm499, %v2801, 0.0
        %2809 = vadd.xlane.f32.xlu0 %v2808
        %v2810 = vpop.xlane.xlu0 %2809
        %v2811 = vsel %vm499, %v2803, 0.0
        %2812 = vadd.xlane.f32.xlu0 %v2811
        %v2813 = vpop.xlane.xlu0 %2812
        %v2814 = vsel %vm499, %v2805, 0.0
        %2815 = vadd.xlane.f32.xlu0 %v2814
        %v2816 = vpop.xlane.xlu0 %2815
        %v2817 = vsel %vm499, %v2807, 0.0
        %2818 = vadd.xlane.f32.xlu0 %v2817
        %v2819 = vpop.xlane.xlu0 %2818
        %v2820 = vrcp.pop %v2810
        %v2821 = vrcp.pop %v2813
        %v2822 = vrcp.pop %v2816
        %v2823 = vrcp.pop %v2819
        %v2824 = vmul.f32 %v2801, %v2820
        %v2825 = vmul.f32 %v2803, %v2821
        %v2826 = vmul.f32 %v2805, %v2822
        %v2827 = vmul.f32 %v2807, %v2823
        %2828 = vrot.lane.b32.xlu0 %v481, 72
        %v2829 = vpop.permute.xlu0 %2828
        %v2832 = vsel %vm499, %v2824, 0
        %2834 = vmatprep.subr.mxu0 0.0
        %2835 = vmatpush1.msra.mxu0 0.0
        %2836 = vmatprep.subr.mxu0 0.0
        %2837 = vmatpush1.msra.mxu0 0.0
        %2838 = vmatprep.subr.mxu0 0.0
        %2839 = vmatpush1.msra.mxu0 0.0
        %2840 = vmatprep.subr.mxu0 0.0
        %2841 = vmatpush1.msra.mxu0 0.0
        %2842 = vmatprep.subr.mxu0 0.0
        %2843 = vmatpush1.msra.mxu0 0.0
        %2844 = vmatprep.subr.mxu0 0.0
        %2845 = vmatpush1.msra.mxu0 0.0
        %2846 = vmatprep.subr.mxu0 0.0
        %2847 = vmatpush1.msra.mxu0 0.0
        %2848 = vmatprep.subr.mxu0 0.0
        %2849 = vmatpush1.msra.mxu0 0.0
        %2850 = vmatprep.subr.mxu0 0.0
        %2851 = vmatpush1.msra.mxu0 0.0
        %2852 = vmatprep.subr.mxu0 0.0
        %2853 = vmatpush1.msra.mxu0 0.0
        %2854 = vmatprep.subr.mxu0 0.0
        %2855 = vmatpush1.msra.mxu0 0.0
        %2856 = vmatprep.subr.mxu0 0.0
        %2857 = vmatpush1.msra.mxu0 0.0
        %2858 = vmatprep.subr.mxu0 0.0
        %2859 = vmatpush1.msra.mxu0 0.0
        %2860 = vmatprep.subr.mxu0 0.0
        %2861 = vmatpush1.msra.mxu0 0.0
        %2862 = vmatprep.subr.mxu0 0.0
        %2863 = vmatpush1.msra.mxu0 0.0
        %2864 = vmatprep.subr.mxu0 0.0
        %2865 = vmatpush1.msra.mxu0 %v2829
        %2866 = vmatprep.subr.mxu0 0.0
        %2867 = vmatpush2.msra.mxu0 0.0
        %2868 = vmatprep.subr.mxu0 0.0
        %2869 = vmatpush2.msra.mxu0 0.0
        %2870 = vmatprep.subr.mxu0 0.0
        %2871 = vmatpush2.msra.mxu0 0.0
        %2872 = vmatprep.subr.mxu0 0.0
        %2873 = vmatpush2.msra.mxu0 0.0
        %2874 = vmatprep.subr.mxu0 0.0
        %2875 = vmatpush2.msra.mxu0 0.0
        %2876 = vmatprep.subr.mxu0 0.0
        %2877 = vmatpush2.msra.mxu0 0.0
        %2878 = vmatprep.subr.mxu0 0.0
        %2879 = vmatpush2.msra.mxu0 0.0
        %2880 = vmatprep.subr.mxu0 0.0
        %2881 = vmatpush2.msra.mxu0 0.0
        %2882 = vmatprep.subr.mxu0 0.0
        %2883 = vmatpush2.msra.mxu0 0.0
        %2884 = vmatprep.subr.mxu0 0.0
        %2885 = vmatpush2.msra.mxu0 0.0
        %2886 = vmatprep.subr.mxu0 0.0
        %2887 = vmatpush2.msra.mxu0 0.0
        %2888 = vmatprep.subr.mxu0 0.0
        %2889 = vmatpush2.msra.mxu0 0.0
        %2890 = vmatprep.subr.mxu0 0.0
        %2891 = vmatpush2.msra.mxu0 0.0
        %2892 = vmatprep.subr.mxu0 0.0
        %2893 = vmatpush2.msra.mxu0 0.0
        %2894 = vmatprep.subr.mxu0 0.0
        %2895 = vmatpush2.msra.mxu0 0.0
        %2896 = vmatprep.subr.mxu0 0.0
        %2897 = vmatpush2.msra.mxu0 0.0
        %2898 = vmatprep.mubr.f32.mxu0 0.0
        %2899 = vmatmul.mubr.f32.gmra.mxu0 %v2832
        %v2900 = vpop.f32.mrf.mxu0
        %v2901 = vadd.f32 0.0, %v2900
        %v2902 = vpop.f32.mrf.mxu0
        %2903 = vdwg.mxu0
        %2904 = vrot.lane.b32.xlu0 %v486, 72
        %v2905 = vpop.permute.xlu0 %2904
        %v2908 = vsel %vm499, %v2825, 0
        %2910 = vmatprep.subr.mxu0 0.0
        %2911 = vmatpush1.msra.mxu0 0.0
        %2912 = vmatprep.subr.mxu0 0.0
        %2913 = vmatpush1.msra.mxu0 0.0
        %2914 = vmatprep.subr.mxu0 0.0
        %2915 = vmatpush1.msra.mxu0 0.0
        %2916 = vmatprep.subr.mxu0 0.0
        %2917 = vmatpush1.msra.mxu0 0.0
        %2918 = vmatprep.subr.mxu0 0.0
        %2919 = vmatpush1.msra.mxu0 0.0
        %2920 = vmatprep.subr.mxu0 0.0
        %2921 = vmatpush1.msra.mxu0 0.0
        %2922 = vmatprep.subr.mxu0 0.0
        %2923 = vmatpush1.msra.mxu0 0.0
        %2924 = vmatprep.subr.mxu0 0.0
        %2925 = vmatpush1.msra.mxu0 0.0
        %2926 = vmatprep.subr.mxu0 0.0
        %2927 = vmatpush1.msra.mxu0 0.0
        %2928 = vmatprep.subr.mxu0 0.0
        %2929 = vmatpush1.msra.mxu0 0.0
        %2930 = vmatprep.subr.mxu0 0.0
        %2931 = vmatpush1.msra.mxu0 0.0
        %2932 = vmatprep.subr.mxu0 0.0
        %2933 = vmatpush1.msra.mxu0 0.0
        %2934 = vmatprep.subr.mxu0 0.0
        %2935 = vmatpush1.msra.mxu0 0.0
        %2936 = vmatprep.subr.mxu0 0.0
        %2937 = vmatpush1.msra.mxu0 0.0
        %2938 = vmatprep.subr.mxu0 0.0
        %2939 = vmatpush1.msra.mxu0 0.0
        %2940 = vmatprep.subr.mxu0 0.0
        %2941 = vmatpush1.msra.mxu0 %v2905
        %2942 = vmatprep.subr.mxu0 0.0
        %2943 = vmatpush2.msra.mxu0 0.0
        %2944 = vmatprep.subr.mxu0 0.0
        %2945 = vmatpush2.msra.mxu0 0.0
        %2946 = vmatprep.subr.mxu0 0.0
        %2947 = vmatpush2.msra.mxu0 0.0
        %2948 = vmatprep.subr.mxu0 0.0
        %2949 = vmatpush2.msra.mxu0 0.0
        %2950 = vmatprep.subr.mxu0 0.0
        %2951 = vmatpush2.msra.mxu0 0.0
        %2952 = vmatprep.subr.mxu0 0.0
        %2953 = vmatpush2.msra.mxu0 0.0
        %2954 = vmatprep.subr.mxu0 0.0
        %2955 = vmatpush2.msra.mxu0 0.0
        %2956 = vmatprep.subr.mxu0 0.0
        %2957 = vmatpush2.msra.mxu0 0.0
        %2958 = vmatprep.subr.mxu0 0.0
        %2959 = vmatpush2.msra.mxu0 0.0
        %2960 = vmatprep.subr.mxu0 0.0
        %2961 = vmatpush2.msra.mxu0 0.0
        %2962 = vmatprep.subr.mxu0 0.0
        %2963 = vmatpush2.msra.mxu0 0.0
        %2964 = vmatprep.subr.mxu0 0.0
        %2965 = vmatpush2.msra.mxu0 0.0
        %2966 = vmatprep.subr.mxu0 0.0
        %2967 = vmatpush2.msra.mxu0 0.0
        %2968 = vmatprep.subr.mxu0 0.0
        %2969 = vmatpush2.msra.mxu0 0.0
        %2970 = vmatprep.subr.mxu0 0.0
        %2971 = vmatpush2.msra.mxu0 0.0
        %2972 = vmatprep.subr.mxu0 0.0
        %2973 = vmatpush2.msra.mxu0 0.0
        %2974 = vmatprep.mubr.f32.mxu0 0.0
        %2975 = vmatmul.mubr.f32.gmra.mxu0 %v2908
        %v2976 = vpop.f32.mrf.mxu0
        %v2977 = vadd.f32 0.0, %v2976
        %v2978 = vpop.f32.mrf.mxu0
        %2979 = vdwg.mxu0
        %2980 = vrot.lane.b32.xlu0 %v491, 72
        %v2981 = vpop.permute.xlu0 %2980
        %v2984 = vsel %vm499, %v2826, 0
        %2986 = vmatprep.subr.mxu0 0.0
        %2987 = vmatpush1.msra.mxu0 0.0
        %2988 = vmatprep.subr.mxu0 0.0
        %2989 = vmatpush1.msra.mxu0 0.0
        %2990 = vmatprep.subr.mxu0 0.0
        %2991 = vmatpush1.msra.mxu0 0.0
        %2992 = vmatprep.subr.mxu0 0.0
        %2993 = vmatpush1.msra.mxu0 0.0
        %2994 = vmatprep.subr.mxu0 0.0
        %2995 = vmatpush1.msra.mxu0 0.0
        %2996 = vmatprep.subr.mxu0 0.0
        %2997 = vmatpush1.msra.mxu0 0.0
        %2998 = vmatprep.subr.mxu0 0.0
        %2999 = vmatpush1.msra.mxu0 0.0
        %3000 = vmatprep.subr.mxu0 0.0
        %3001 = vmatpush1.msra.mxu0 0.0
        %3002 = vmatprep.subr.mxu0 0.0
        %3003 = vmatpush1.msra.mxu0 0.0
        %3004 = vmatprep.subr.mxu0 0.0
        %3005 = vmatpush1.msra.mxu0 0.0
        %3006 = vmatprep.subr.mxu0 0.0
        %3007 = vmatpush1.msra.mxu0 0.0
        %3008 = vmatprep.subr.mxu0 0.0
        %3009 = vmatpush1.msra.mxu0 0.0
        %3010 = vmatprep.subr.mxu0 0.0
        %3011 = vmatpush1.msra.mxu0 0.0
        %3012 = vmatprep.subr.mxu0 0.0
        %3013 = vmatpush1.msra.mxu0 0.0
        %3014 = vmatprep.subr.mxu0 0.0
        %3015 = vmatpush1.msra.mxu0 0.0
        %3016 = vmatprep.subr.mxu0 0.0
        %3017 = vmatpush1.msra.mxu0 %v2981
        %3018 = vmatprep.subr.mxu0 0.0
        %3019 = vmatpush2.msra.mxu0 0.0
        %3020 = vmatprep.subr.mxu0 0.0
        %3021 = vmatpush2.msra.mxu0 0.0
        %3022 = vmatprep.subr.mxu0 0.0
        %3023 = vmatpush2.msra.mxu0 0.0
        %3024 = vmatprep.subr.mxu0 0.0
        %3025 = vmatpush2.msra.mxu0 0.0
        %3026 = vmatprep.subr.mxu0 0.0
        %3027 = vmatpush2.msra.mxu0 0.0
        %3028 = vmatprep.subr.mxu0 0.0
        %3029 = vmatpush2.msra.mxu0 0.0
        %3030 = vmatprep.subr.mxu0 0.0
        %3031 = vmatpush2.msra.mxu0 0.0
        %3032 = vmatprep.subr.mxu0 0.0
        %3033 = vmatpush2.msra.mxu0 0.0
        %3034 = vmatprep.subr.mxu0 0.0
        %3035 = vmatpush2.msra.mxu0 0.0
        %3036 = vmatprep.subr.mxu0 0.0
        %3037 = vmatpush2.msra.mxu0 0.0
        %3038 = vmatprep.subr.mxu0 0.0
        %3039 = vmatpush2.msra.mxu0 0.0
        %3040 = vmatprep.subr.mxu0 0.0
        %3041 = vmatpush2.msra.mxu0 0.0
        %3042 = vmatprep.subr.mxu0 0.0
        %3043 = vmatpush2.msra.mxu0 0.0
        %3044 = vmatprep.subr.mxu0 0.0
        %3045 = vmatpush2.msra.mxu0 0.0
        %3046 = vmatprep.subr.mxu0 0.0
        %3047 = vmatpush2.msra.mxu0 0.0
        %3048 = vmatprep.subr.mxu0 0.0
        %3049 = vmatpush2.msra.mxu0 0.0
        %3050 = vmatprep.mubr.f32.mxu0 0.0
        %3051 = vmatmul.mubr.f32.gmra.mxu0 %v2984
        %v3052 = vpop.f32.mrf.mxu0
        %v3053 = vadd.f32 0.0, %v3052
        %v3054 = vpop.f32.mrf.mxu0
        %3055 = vdwg.mxu0
        %3056 = vrot.lane.b32.xlu0 %v496, 72
        %v3057 = vpop.permute.xlu0 %3056
        %v3060 = vsel %vm499, %v2827, 0
        %3062 = vmatprep.subr.mxu0 0.0
        %3063 = vmatpush1.msra.mxu0 0.0
        %3064 = vmatprep.subr.mxu0 0.0
        %3065 = vmatpush1.msra.mxu0 0.0
        %3066 = vmatprep.subr.mxu0 0.0
        %3067 = vmatpush1.msra.mxu0 0.0
        %3068 = vmatprep.subr.mxu0 0.0
        %3069 = vmatpush1.msra.mxu0 0.0
        %3070 = vmatprep.subr.mxu0 0.0
        %3071 = vmatpush1.msra.mxu0 0.0
        %3072 = vmatprep.subr.mxu0 0.0
        %3073 = vmatpush1.msra.mxu0 0.0
        %3074 = vmatprep.subr.mxu0 0.0
        %3075 = vmatpush1.msra.mxu0 0.0
        %3076 = vmatprep.subr.mxu0 0.0
        %3077 = vmatpush1.msra.mxu0 0.0
        %3078 = vmatprep.subr.mxu0 0.0
        %3079 = vmatpush1.msra.mxu0 0.0
        %3080 = vmatprep.subr.mxu0 0.0
        %3081 = vmatpush1.msra.mxu0 0.0
        %3082 = vmatprep.subr.mxu0 0.0
        %3083 = vmatpush1.msra.mxu0 0.0
        %3084 = vmatprep.subr.mxu0 0.0
        %3085 = vmatpush1.msra.mxu0 0.0
        %3086 = vmatprep.subr.mxu0 0.0
        %3087 = vmatpush1.msra.mxu0 0.0
        %3088 = vmatprep.subr.mxu0 0.0
        %3089 = vmatpush1.msra.mxu0 0.0
        %3090 = vmatprep.subr.mxu0 0.0
        %3091 = vmatpush1.msra.mxu0 0.0
        %3092 = vmatprep.subr.mxu0 0.0
        %3093 = vmatpush1.msra.mxu0 %v3057
        %3094 = vmatprep.subr.mxu0 0.0
        %3095 = vmatpush2.msra.mxu0 0.0
        %3096 = vmatprep.subr.mxu0 0.0
        %3097 = vmatpush2.msra.mxu0 0.0
        %3098 = vmatprep.subr.mxu0 0.0
        %3099 = vmatpush2.msra.mxu0 0.0
        %3100 = vmatprep.subr.mxu0 0.0
        %3101 = vmatpush2.msra.mxu0 0.0
        %3102 = vmatprep.subr.mxu0 0.0
        %3103 = vmatpush2.msra.mxu0 0.0
        %3104 = vmatprep.subr.mxu0 0.0
        %3105 = vmatpush2.msra.mxu0 0.0
        %3106 = vmatprep.subr.mxu0 0.0
        %3107 = vmatpush2.msra.mxu0 0.0
        %3108 = vmatprep.subr.mxu0 0.0
        %3109 = vmatpush2.msra.mxu0 0.0
        %3110 = vmatprep.subr.mxu0 0.0
        %3111 = vmatpush2.msra.mxu0 0.0
        %3112 = vmatprep.subr.mxu0 0.0
        %3113 = vmatpush2.msra.mxu0 0.0
        %3114 = vmatprep.subr.mxu0 0.0
        %3115 = vmatpush2.msra.mxu0 0.0
        %3116 = vmatprep.subr.mxu0 0.0
        %3117 = vmatpush2.msra.mxu0 0.0
        %3118 = vmatprep.subr.mxu0 0.0
        %3119 = vmatpush2.msra.mxu0 0.0
        %3120 = vmatprep.subr.mxu0 0.0
        %3121 = vmatpush2.msra.mxu0 0.0
        %3122 = vmatprep.subr.mxu0 0.0
        %3123 = vmatpush2.msra.mxu0 0.0
        %3124 = vmatprep.subr.mxu0 0.0
        %3125 = vmatpush2.msra.mxu0 0.0
        %3126 = vmatprep.mubr.f32.mxu0 0.0
        %3127 = vmatmul.mubr.f32.gmra.mxu0 %v3060
        %v3128 = vpop.f32.mrf.mxu0
        %v3129 = vadd.f32 0.0, %v3128
        %v3130 = vpop.f32.mrf.mxu0
        %3131 = vdwg.mxu0
        %3136 = vrot.lane.b32.xlu0 %v1581, 8
        %v3137 = vpop.permute.xlu0 %3136
        %3138 = vrot.lane.b32.xlu0 %v1657, 8
        %v3139 = vpop.permute.xlu0 %3138
        %3140 = vrot.lane.b32.xlu0 %v1733, 8
        %v3141 = vpop.permute.xlu0 %3140
        %3142 = vrot.lane.b32.xlu0 %v1809, 8
        %v3143 = vpop.permute.xlu0 %3142
        %3152 = vrot.lane.b32.xlu0 %v2241, 16
        %v3153 = vpop.permute.xlu0 %3152
        %3154 = vrot.lane.b32.xlu0 %v2317, 16
        %v3155 = vpop.permute.xlu0 %3154
        %3156 = vrot.lane.b32.xlu0 %v2393, 16
        %v3157 = vpop.permute.xlu0 %3156
        %3158 = vrot.lane.b32.xlu0 %v2469, 16
        %v3159 = vpop.permute.xlu0 %3158
        %3168 = vrot.lane.b32.xlu0 %v2901, 24
        %v3169 = vpop.permute.xlu0 %3168
        %3170 = vrot.lane.b32.xlu0 %v2977, 24
        %v3171 = vpop.permute.xlu0 %3170
        %3172 = vrot.lane.b32.xlu0 %v3053, 24
        %v3173 = vpop.permute.xlu0 %3172
        %3174 = vrot.lane.b32.xlu0 %v3129, 24
        %v3175 = vpop.permute.xlu0 %3174
        %v3180 = vsel %vm499, %v921, %v3137
        %v3181 = vsel %vm499, %v997, %v3139
        %v3182 = vsel %vm499, %v1073, %v3141
        %v3183 = vsel %vm499, %v1149, %v3143
        %v3184 = vsel %vm298, %v3180, %v3153
        %v3185 = vsel %vm298, %v3181, %v3155
        %v3186 = vsel %vm298, %v3182, %v3157
        %v3187 = vsel %vm298, %v3183, %v3159
        %vm3188 = vcmask 195584
        %v3189 = vsel %vm3188, %v3184, %v3169
        %v3190 = vsel %vm3188, %v3185, %v3171
        %v3191 = vsel %vm3188, %v3186, %v3173
        %v3192 = vsel %vm3188, %v3187, %v3175
        %vm3193 = vcmask 261120
        %3194 = vst.msk [vmem:[%s284] sm:$0xff] %vm3193, %v3189
        %3195 = vst.msk [vmem:[%s284 + $0x8] sm:$0xff] %vm3193, %v3190
        %3196 = vst.msk [vmem:[%s284 + $0x10] sm:$0xff] %vm3193, %v3191
        %3197 = vst.msk [vmem:[%s284 + $0x18] sm:$0xff] %vm3193, %v3192
        %s3198 = sand.u32 %s127, 1
        %s3199 = scalar_lea.sflag [#allocation4], %s3198
        %s3200 = sand.u32 %s127, 1
        %s3201 = smul.addr %s3200, 32
        %s3202 = scalar_lea.vmem [#allocation10], %s3201
        // Predicated region
        $region53: #{tpu_custom_call.1} parent=35 // pred_check
          %p3203 = pneg %p137
        $region54: #{tpu_custom_call.1} parent=35 // pred_check_branch
          %3205 = sbr.rel (%p3203) target = $region56
        $region55: #{tpu_custom_call.1} parent=35 // pred_region
          %s3206 = smul.u32 4, %s25
          %s3208 = ssub.s32 512, 512
          %3209 = vsyncadd %s3199, %s3208
          %s3210 = smul.addr %s3206, 128
          %s3211 = scalar_lea.hbm %s4, %s3210
          %s3212 = sshll.u32 %s3202, 4
          %s3213 = int_to_ptr.vmem [resolvable:$true] %s3212
          %3218 = dma.vmem_to_hbm [thread:$0]  %s3213, 512, %s3211, %s3199, 128, 128, 8
        $region56: #{tpu_custom_call.1} parent=35 // pred_fallthru
          _
      $region36: #{tpu_custom_call.1} parent=5 // pred_fallthru
        _
      %p3219 = scmp.le.s32.totalorder 2, %s20
      // Predicated region
      $region57: #{tpu_custom_call.1} parent=5 // pred_check
        %p3220 = pneg %p3219
      $region58: #{tpu_custom_call.1} parent=5 // pred_check_branch
        %3222 = sbr.rel (%p3220) target = $region60
      $region59: #{tpu_custom_call.1} parent=5 // pred_region
        %s3223 = ssub.s32 %s20, 2
        // Predicated region
        $region61: #{tpu_custom_call.1} parent=59 // pred_check
          %p3224 = pneg %p143
        $region62: #{tpu_custom_call.1} parent=59 // pred_check_branch
          %3226 = sbr.rel (%p3224) target = $region64
        $region63: #{tpu_custom_call.1} parent=59 // pred_region
          %s3227 = sand.u32 %s128, 1
          %s3228 = scalar_lea.sflag [#allocation4], %s3227
          %s3229 = sand.u32 %s128, 1
          %s3230 = smul.addr %s3229, 32
          %s3231 = scalar_lea.vmem [#allocation10], %s3230
          %3232 = dma.done %s3228, 512
        $region64: #{tpu_custom_call.1} parent=59 // pred_fallthru
          _
      $region60: #{tpu_custom_call.1} parent=5 // pred_fallthru
        _
    $region6: #{tpu_custom_call.1} parent=1 // loop_footer
      %s24 = sadd.s32 1, %s20
    $region7: #{tpu_custom_call.1} parent=1 // loop_footer_branch
      %19 = sbr.rel target = $region3
    $region8: #{tpu_custom_call.1} parent=1 // loop_exit
      _
    %3233 = vsyncpa [#allocation3], 1
    %s3234 = scalar_lea.sflag [#allocation3], 1
    %3235 = vsyncpa %s3234, 1
    %3236 = vsyncpa [#allocation6], 1
    %s3237 = scalar_lea.sflag [#allocation6], 1
    %3238 = vsyncpa %s3237, 1
    %3239 = vsyncpa [#allocation9], 1
    %3240 = vsyncpa [#allocation4], 1
    %s3241 = scalar_lea.sflag [#allocation4], 1
    %3242 = vsyncpa %s3241, 1

</llo_original>
